<compile_context>
chip_gen: v7x
topology: tpu7x:2x2x1
jax: 0.10.0
libtpu: 0.0.40
codegen_flags: <defaults>
</compile_context>

<pallas_src>
import functools

import jax
import jax.numpy as jnp
from jax.experimental import pallas as pl
from jax.experimental.pallas import tpu as pltpu


def _round_up(x, m):
    return ((x + m - 1) // m) * m


def modified_dnn_kernel(x_ref, win_ref, bin_ref, wh_ref, bh_ref, wl_ref, bl_ref,
                        o_ref, *, num_hidden_layers, hidden_pad):
    # Feature-major layout: features on sublanes, batch on the lane axis.
    x = x_ref[...].astype(jnp.float32)                               # (in_f, tb)

    # Fused input projection: [Wt1^T ; Wt2^T ; W0^T] @ x  (one MXU push).
    proj = jnp.dot(win_ref[...], x,
                   preferred_element_type=jnp.float32) + bin_ref[...]  # (3*hp, tb)
    hp = hidden_pad
    t1 = proj[0 * hp:1 * hp, :]                                      # (hp, tb)
    t2 = proj[1 * hp:2 * hp, :]
    h = jnp.sin(proj[2 * hp:3 * hp, :])                              # layer 0: sine only
    td = t2 - t1                                                     # hoisted gate algebra

    # Gated hidden layers; num_hidden_layers is a static Python int -> unrolled,
    # weights stay resident in VMEM and are sliced statically.
    for l in range(num_hidden_layers):
        o = jnp.sin(jnp.dot(wh_ref[l], h, preferred_element_type=jnp.float32)
                    + bh_ref[l])                                     # (hp, tb)
        h = t1 + o * td                                              # == (1-o)*t1 + o*t2

    # Final layer: Linear(hidden -> out), no activation; lane-dense result.
    y = jnp.dot(wl_ref[...], h, preferred_element_type=jnp.float32) + bl_ref[...]
    o_ref[...] = y.astype(o_ref.dtype)                               # (out_f, tb)


def pack_params(params, hidden_pad):
    """Transpose/fuse/zero-pad the natural-layout params for the kernel."""
    wt1, bt1, wt2, bt2, w0, b0, wh, bh, wl, bl = params
    in_f, hidden = wt1.shape
    nhl = wh.shape[0]
    out_f = wl.shape[1]
    hp = hidden_pad

    def pad_rows(m, rows):
        return jnp.pad(m, ((0, rows - m.shape[0]),) + ((0, 0),) * (m.ndim - 1))

    # Fused input projection weight/bias: rows = [trans_1 | trans_2 | layer0].
    win = jnp.concatenate([pad_rows(wt1.T, hp),
                           pad_rows(wt2.T, hp),
                           pad_rows(w0.T, hp)], axis=0)                 # (3*hp, in_f)
    bin_ = jnp.concatenate([pad_rows(bt1.reshape(hidden, 1), hp),
                            pad_rows(bt2.reshape(hidden, 1), hp),
                            pad_rows(b0.reshape(hidden, 1), hp)], axis=0)  # (3*hp, 1)

    whT = jnp.zeros((nhl, hp, hp), jnp.float32).at[:, :hidden, :hidden].set(
        jnp.transpose(wh, (0, 2, 1)))                                   # (nhl, hp, hp)
    bhT = jnp.zeros((nhl, hp, 1), jnp.float32).at[:, :hidden, 0].set(
        bh.reshape(nhl, hidden))                                        # (nhl, hp, 1)
    wlT = jnp.zeros((out_f, hp), jnp.float32).at[:, :hidden].set(wl.T)  # (out_f, hp)
    blT = bl.reshape(out_f, 1)                                          # (out_f, 1)
    return win, bin_, whT, bhT, wlT, blT


def modified_dnn_forward(coords, params, *, batch_tile=None):
    """coords: (batch, in_features) -> (batch, out_features)."""
    wt1 = params[0]
    in_f, hidden = wt1.shape
    nhl = params[6].shape[0]
    out_f = params[8].shape[1]
    hp = _round_up(hidden, 8)

    batch = coords.shape[0]
    pb128 = _round_up(batch, 128)
    if batch_tile is None:
        # Big tiles to amortize the ~0.35us per-grid-step overhead; keep >= 2
        # grid steps when the batch allows it (v7x has two TensorCores).
        batch_tile = min(8192, pb128)
        if pb128 >= 256 and pb128 // batch_tile < 2:
            batch_tile = _round_up(pl.cdiv(pb128, 2), 128)
    batch_tile = _round_up(batch_tile, 128)          # lane-aligned tiles
    padded_batch = _round_up(batch, batch_tile)      # wrapper pads, no divisibility req.
    grid = (padded_batch // batch_tile,)

    # Feature-major ("batch on lanes") input, zero-padded to a tile multiple.
    x_t = jnp.pad(coords.astype(jnp.float32).T,
                  ((0, 0), (0, padded_batch - batch)))                  # (in_f, PB)

    win, bin_, whT, bhT, wlT, blT = pack_params(params, hp)

    def const_spec(arr):
        nd = arr.ndim
        return pl.BlockSpec(arr.shape, lambda *i, _nd=nd: (0,) * _nd)

    # Advisory cost estimate (scheduling hint only).
    flops = int(2 * padded_batch * (3 * hp * in_f + nhl * hp * hp + hp * out_f)
                + 4 * padded_batch * hp * nhl)
    transcendentals = int(padded_batch * hp * (1 + nhl))
    bytes_accessed = int(4 * (x_t.size + win.size + bin_.size + whT.size
                              + bhT.size + wlT.size + blT.size
                              + padded_batch * out_f))

    kernel = functools.partial(modified_dnn_kernel,
                               num_hidden_layers=nhl, hidden_pad=hp)

    out_t = pl.pallas_call(
        kernel,
        out_shape=jax.ShapeDtypeStruct((out_f, padded_batch), coords.dtype),
        grid_spec=pltpu.PrefetchScalarGridSpec(
            num_scalar_prefetch=0,
            grid=grid,
            in_specs=[
                pl.BlockSpec((in_f, batch_tile), lambda i: (0, i)),  # coords tile
                const_spec(win), const_spec(bin_),     # fused trans_1|trans_2|layer0
                const_spec(whT), const_spec(bhT),      # stacked hidden layers (W^T)
                const_spec(wlT), const_spec(blT),      # final layer (W^T)
            ],
            out_specs=pl.BlockSpec((out_f, batch_tile), lambda i: (0, i)),
        ),
        compiler_params=pltpu.CompilerParams(
            dimension_semantics=("parallel",)),        # batch tiles are independent
        cost_estimate=pl.CostEstimate(flops=flops,
                                      transcendentals=transcendentals,
                                      bytes_accessed=bytes_accessed),
    )(x_t, win, bin_, whT, bhT, wlT, blT)

    return out_t[:, :batch].T                                            # (batch, out_f)


def init_params(key, in_f=3, hidden=20, out_f=1, num_hidden_layers=3):
    """Deterministic params: xavier-normal weights, PyTorch-style uniform biases."""
    keys = jax.random.split(key, 10)

    def xavier(k, fan_in, fan_out, shape):
        std = (2.0 / (fan_in + fan_out)) ** 0.5
        return std * jax.random.normal(k, shape, jnp.float32)

    def bias(k, fan_in, shape):
        lim = 1.0 / (fan_in ** 0.5)
        return jax.random.uniform(k, shape, jnp.float32, -lim, lim)

    wt1 = xavier(keys[0], in_f, hidden, (in_f, hidden))
    bt1 = bias(keys[1], in_f, (1, hidden))
    wt2 = xavier(keys[2], in_f, hidden, (in_f, hidden))
    bt2 = bias(keys[3], in_f, (1, hidden))
    w0 = xavier(keys[4], in_f, hidden, (in_f, hidden))
    b0 = bias(keys[5], in_f, (1, hidden))
    wh = xavier(keys[6], hidden, hidden, (num_hidden_layers, hidden, hidden))
    bh = bias(keys[7], hidden, (num_hidden_layers, 1, hidden))
    wl = xavier(keys[8], hidden, out_f, (hidden, out_f))
    bl = bias(keys[9], hidden, (1, out_f))
    return (wt1, bt1, wt2, bt2, w0, b0, wh, bh, wl, bl)


def reference_forward(coords, params):
    """Pure-JAX reference matching the PyTorch ModifiedFCBlock forward."""
    wt1, bt1, wt2, bt2, w0, b0, wh, bh, wl, bl = params
    x = coords
    t1 = x @ wt1 + bt1
    t2 = x @ wt2 + bt2
    h = jnp.sin(x @ w0 + b0)
    for l in range(wh.shape[0]):
        o = jnp.sin(h @ wh[l] + bh[l])
        h = (1.0 - o) * t1 + o * t2
    return h @ wl + bl


if __name__ == "__main__":
    # module defaults: in_features=3, hidden_features=20, num_hidden_layers=3,
    # out_features=1, nonlinearity='sine'
    batch, in_f, hidden, out_f, n_hidden = 300, 3, 20, 1, 3

    key = jax.random.PRNGKey(0)
    kx, kp = jax.random.split(key)
    coords = jax.random.normal(kx, (batch, in_f), jnp.float32)
    params = init_params(kp, in_f, hidden, out_f, n_hidden)

    # default tile path: exercises batch padding (300 -> 512) and a 2-step grid
    out = modified_dnn_forward(coords, params)
    out = jax.block_until_ready(out)

    ref = reference_forward(coords, params)
    assert out.shape == (batch, out_f)
    assert jnp.allclose(out, ref, atol=1e-4, rtol=1e-4), "mismatch vs reference"

    # explicit small tile path as well
    out2 = jax.block_until_ready(modified_dnn_forward(coords, params, batch_tile=128))
    assert jnp.allclose(out2, ref, atol=1e-4, rtol=1e-4), "mismatch vs reference (tile=128)"

    # mimic ModifiedDNN's dict return at the wrapper level
    result = {"model_in": coords, "model_out": out}
    assert result["model_out"].shape == (batch, out_f)

    print("KERNEL_OK")
</pallas_src>

<mosaic_0001>
module attributes {stable_mosaic.version = 11 : i64} {
  func.func @modified_dnn_kernel(%arg0: i32, %arg1: memref<3x256xf32, #tpu.memory_space<vmem>>, %arg2: memref<72x3xf32, #tpu.memory_space<vmem>>, %arg3: memref<72x1xf32, #tpu.memory_space<vmem>>, %arg4: memref<3x24x24xf32, #tpu.memory_space<vmem>>, %arg5: memref<3x24x1xf32, #tpu.memory_space<vmem>>, %arg6: memref<1x24xf32, #tpu.memory_space<vmem>>, %arg7: memref<1x1xf32, #tpu.memory_space<vmem>>, %arg8: memref<1x256xf32, #tpu.memory_space<vmem>>) attributes {dimension_semantics = [#tpu.dimension_semantics<parallel>], iteration_bounds = array<i64: 2>, scalar_prefetch = 0 : i64, scratch_operands = 0 : i64, tpu.core_type = #tpu.core_type<tc>, window_params = [{transform_indices = @transform_0, window_bounds = array<i64: 3, 256>}, {pipeline_mode = #tpu.pipeline_mode<synchronous>, transform_indices = @transform_1, window_bounds = array<i64: 72, 3>}, {pipeline_mode = #tpu.pipeline_mode<synchronous>, transform_indices = @transform_2, window_bounds = array<i64: 72, 1>}, {pipeline_mode = #tpu.pipeline_mode<synchronous>, transform_indices = @transform_3, window_bounds = array<i64: 3, 24, 24>}, {pipeline_mode = #tpu.pipeline_mode<synchronous>, transform_indices = @transform_4, window_bounds = array<i64: 3, 24, 1>}, {pipeline_mode = #tpu.pipeline_mode<synchronous>, transform_indices = @transform_5, window_bounds = array<i64: 1, 24>}, {pipeline_mode = #tpu.pipeline_mode<synchronous>, transform_indices = @transform_6, window_bounds = array<i64: 1, 1>}, {transform_indices = @transform_7, window_bounds = array<i64: 1, 256>}]} {
    %c0 = arith.constant 0 : index
    %c0_0 = arith.constant 0 : index
    %0 = vector.load %arg1[%c0, %c0_0] : memref<3x256xf32, #tpu.memory_space<vmem>>, vector<3x256xf32>
    %c0_1 = arith.constant 0 : index
    %c0_2 = arith.constant 0 : index
    %1 = vector.load %arg2[%c0_1, %c0_2] : memref<72x3xf32, #tpu.memory_space<vmem>>, vector<72x3xf32>
    %cst = arith.constant dense<0.000000e+00> : vector<72x256xf32>
    %2 = tpu.matmul %1, %0, %cst {dimension_numbers = #tpu.dot_dimension_numbers<[1], [0], [0], [1], [0, 0, 1, 1], [], []>} : vector<72x3xf32>, vector<3x256xf32>, vector<72x256xf32> -> vector<72x256xf32>
    %c0_3 = arith.constant 0 : index
    %c0_4 = arith.constant 0 : index
    %3 = vector.load %arg3[%c0_3, %c0_4] : memref<72x1xf32, #tpu.memory_space<vmem>>, vector<72x1xf32>
    %4 = vector.broadcast %3 : vector<72x1xf32> to vector<72x256xf32>
    %5 = arith.addf %2, %4 : vector<72x256xf32>
    %6 = vector.extract_strided_slice %5 {offsets = [0, 0], sizes = [24, 256], strides = [1, 1]} : vector<72x256xf32> to vector<24x256xf32>
    %7 = vector.extract_strided_slice %5 {offsets = [24, 0], sizes = [24, 256], strides = [1, 1]} : vector<72x256xf32> to vector<24x256xf32>
    %8 = vector.extract_strided_slice %5 {offsets = [48, 0], sizes = [24, 256], strides = [1, 1]} : vector<72x256xf32> to vector<24x256xf32>
    %9 = math.sin %8 : vector<24x256xf32>
    %10 = arith.subf %7, %6 : vector<24x256xf32>
    %c0_5 = arith.constant 0 : index
    %c0_6 = arith.constant 0 : index
    %c0_7 = arith.constant 0 : index
    %11 = vector.load %arg4[%c0_5, %c0_6, %c0_7] : memref<3x24x24xf32, #tpu.memory_space<vmem>>, vector<1x24x24xf32>
    %12 = vector.shape_cast %11 : vector<1x24x24xf32> to vector<24x24xf32>
    %cst_8 = arith.constant dense<0.000000e+00> : vector<24x256xf32>
    %13 = tpu.matmul %12, %9, %cst_8 {dimension_numbers = #tpu.dot_dimension_numbers<[1], [0], [0], [1], [0, 0, 1, 1], [], []>} : vector<24x24xf32>, vector<24x256xf32>, vector<24x256xf32> -> vector<24x256xf32>
    %c0_9 = arith.constant 0 : index
    %c0_10 = arith.constant 0 : index
    %c0_11 = arith.constant 0 : index
    %14 = vector.load %arg5[%c0_9, %c0_10, %c0_11] : memref<3x24x1xf32, #tpu.memory_space<vmem>>, vector<1x24x1xf32>
    %15 = vector.shape_cast %14 : vector<1x24x1xf32> to vector<24x1xf32>
    %16 = vector.broadcast %15 : vector<24x1xf32> to vector<24x256xf32>
    %17 = arith.addf %13, %16 : vector<24x256xf32>
    %18 = math.sin %17 : vector<24x256xf32>
    %19 = arith.mulf %18, %10 : vector<24x256xf32>
    %20 = arith.addf %6, %19 : vector<24x256xf32>
    %c1 = arith.constant 1 : index
    %c0_12 = arith.constant 0 : index
    %c0_13 = arith.constant 0 : index
    %21 = vector.load %arg4[%c1, %c0_12, %c0_13] : memref<3x24x24xf32, #tpu.memory_space<vmem>>, vector<1x24x24xf32>
    %22 = vector.shape_cast %21 : vector<1x24x24xf32> to vector<24x24xf32>
    %cst_14 = arith.constant dense<0.000000e+00> : vector<24x256xf32>
    %23 = tpu.matmul %22, %20, %cst_14 {dimension_numbers = #tpu.dot_dimension_numbers<[1], [0], [0], [1], [0, 0, 1, 1], [], []>} : vector<24x24xf32>, vector<24x256xf32>, vector<24x256xf32> -> vector<24x256xf32>
    %c1_15 = arith.constant 1 : index
    %c0_16 = arith.constant 0 : index
    %c0_17 = arith.constant 0 : index
    %24 = vector.load %arg5[%c1_15, %c0_16, %c0_17] : memref<3x24x1xf32, #tpu.memory_space<vmem>>, vector<1x24x1xf32>
    %25 = vector.shape_cast %24 : vector<1x24x1xf32> to vector<24x1xf32>
    %26 = vector.broadcast %25 : vector<24x1xf32> to vector<24x256xf32>
    %27 = arith.addf %23, %26 : vector<24x256xf32>
    %28 = math.sin %27 : vector<24x256xf32>
    %29 = arith.mulf %28, %10 : vector<24x256xf32>
    %30 = arith.addf %6, %29 : vector<24x256xf32>
    %c2 = arith.constant 2 : index
    %c0_18 = arith.constant 0 : index
    %c0_19 = arith.constant 0 : index
    %31 = vector.load %arg4[%c2, %c0_18, %c0_19] : memref<3x24x24xf32, #tpu.memory_space<vmem>>, vector<1x24x24xf32>
    %32 = vector.shape_cast %31 : vector<1x24x24xf32> to vector<24x24xf32>
    %cst_20 = arith.constant dense<0.000000e+00> : vector<24x256xf32>
    %33 = tpu.matmul %32, %30, %cst_20 {dimension_numbers = #tpu.dot_dimension_numbers<[1], [0], [0], [1], [0, 0, 1, 1], [], []>} : vector<24x24xf32>, vector<24x256xf32>, vector<24x256xf32> -> vector<24x256xf32>
    %c2_21 = arith.constant 2 : index
    %c0_22 = arith.constant 0 : index
    %c0_23 = arith.constant 0 : index
    %34 = vector.load %arg5[%c2_21, %c0_22, %c0_23] : memref<3x24x1xf32, #tpu.memory_space<vmem>>, vector<1x24x1xf32>
    %35 = vector.shape_cast %34 : vector<1x24x1xf32> to vector<24x1xf32>
    %36 = vector.broadcast %35 : vector<24x1xf32> to vector<24x256xf32>
    %37 = arith.addf %33, %36 : vector<24x256xf32>
    %38 = math.sin %37 : vector<24x256xf32>
    %39 = arith.mulf %38, %10 : vector<24x256xf32>
    %40 = arith.addf %6, %39 : vector<24x256xf32>
    %c0_24 = arith.constant 0 : index
    %c0_25 = arith.constant 0 : index
    %41 = vector.load %arg6[%c0_24, %c0_25] : memref<1x24xf32, #tpu.memory_space<vmem>>, vector<1x24xf32>
    %cst_26 = arith.constant dense<0.000000e+00> : vector<1x256xf32>
    %42 = tpu.matmul %41, %40, %cst_26 {dimension_numbers = #tpu.dot_dimension_numbers<[1], [0], [0], [1], [0, 0, 1, 1], [], []>} : vector<1x24xf32>, vector<24x256xf32>, vector<1x256xf32> -> vector<1x256xf32>
    %c0_27 = arith.constant 0 : index
    %c0_28 = arith.constant 0 : index
    %43 = vector.load %arg7[%c0_27, %c0_28] : memref<1x1xf32, #tpu.memory_space<vmem>>, vector<1x1xf32>
    %44 = vector.broadcast %43 : vector<1x1xf32> to vector<1x256xf32>
    %45 = arith.addf %42, %44 : vector<1x256xf32>
    %c0_29 = arith.constant 0 : index
    %c0_30 = arith.constant 0 : index
    %46 = vector.load %arg8[%c0_29, %c0_30] : memref<1x256xf32, #tpu.memory_space<vmem>>, vector<1x256xf32>
    tpu.vector_store %arg8[%c0_29, %c0_30], %45 {strides = array<i32>} : memref<1x256xf32, #tpu.memory_space<vmem>>, vector<1x256xf32>,
    return
  }
  func.func @transform_0(%arg0: i32) -> (i32, i32) {
    %c0_i32 = arith.constant 0 : i32
    %c0_i32_0 = arith.constant 0 : i32
    return %c0_i32, %arg0 : i32, i32
  }
  func.func @transform_1(%arg0: i32) -> (i32, i32) {
    %c0_i32 = arith.constant 0 : i32
    %c0_i32_0 = arith.constant 0 : i32
    %c0_i32_1 = arith.constant 0 : i32
    return %c0_i32, %c0_i32_0 : i32, i32
  }
  func.func @transform_2(%arg0: i32) -> (i32, i32) {
    %c0_i32 = arith.constant 0 : i32
    %c0_i32_0 = arith.constant 0 : i32
    %c0_i32_1 = arith.constant 0 : i32
    return %c0_i32, %c0_i32_0 : i32, i32
  }
  func.func @transform_3(%arg0: i32) -> (i32, i32, i32) {
    %c0_i32 = arith.constant 0 : i32
    %c0_i32_0 = arith.constant 0 : i32
    %c0_i32_1 = arith.constant 0 : i32
    %c0_i32_2 = arith.constant 0 : i32
    return %c0_i32, %c0_i32_0, %c0_i32_1 : i32, i32, i32
  }
  func.func @transform_4(%arg0: i32) -> (i32, i32, i32) {
    %c0_i32 = arith.constant 0 : i32
    %c0_i32_0 = arith.constant 0 : i32
    %c0_i32_1 = arith.constant 0 : i32
    %c0_i32_2 = arith.constant 0 : i32
    return %c0_i32, %c0_i32_0, %c0_i32_1 : i32, i32, i32
  }
  func.func @transform_5(%arg0: i32) -> (i32, i32) {
    %c0_i32 = arith.constant 0 : i32
    %c0_i32_0 = arith.constant 0 : i32
    %c0_i32_1 = arith.constant 0 : i32
    return %c0_i32, %c0_i32_0 : i32, i32
  }
  func.func @transform_6(%arg0: i32) -> (i32, i32) {
    %c0_i32 = arith.constant 0 : i32
    %c0_i32_0 = arith.constant 0 : i32
    %c0_i32_1 = arith.constant 0 : i32
    return %c0_i32, %c0_i32_0 : i32, i32
  }
  func.func @transform_7(%arg0: i32) -> (i32, i32) {
    %c0_i32 = arith.constant 0 : i32
    %c0_i32_0 = arith.constant 0 : i32
    return %c0_i32, %arg0 : i32, i32
  }
}

</mosaic_0001>

<llo_original>
// kernel: tpu_custom_call.1
$region0: #{tpu_custom_call.1}
  #allocation0 [shape = 'u32[]', space=smem, size = 0x4, offset = 0x4, fixed_abs, tag = 'smem constant byte address 0x4 - core index']
  #allocation1 [shape = 'u32[144,128]{1,0:T(1,128)}', space=vmem, size = 0x12000, scoped, tag = 'internal scratch']
  #allocation2 [shape = 'f32[1,1]{1,0:T(1,128)S(1)}', space=vmem, size = 0x200, scoped, tag = 'scoped memory for tpu_custom_call.1']
  %s0 = inlined_call_operand.vmem [shape: f32[3,512], index: 0, kind: input, shape index: {}]
  %s1 = inlined_call_operand.vmem [shape: f32[72,3], index: 1, kind: input, shape index: {}]
  %s2 = inlined_call_operand.vmem [shape: f32[72,1], index: 2, kind: input, shape index: {}]
  %s3 = inlined_call_operand.vmem [shape: f32[3,24,24], index: 3, kind: input, shape index: {}]
  %s4 = inlined_call_operand.vmem [shape: f32[3,24,1], index: 4, kind: input, shape index: {}]
  %s5 = inlined_call_operand.vmem [shape: f32[1,24], index: 5, kind: input, shape index: {}]
  %s6 = inlined_call_operand.<no memory space> [shape: f32[1,1], index: 6, kind: input, shape index: {}]
  %s7 = inlined_call_operand.hbm [shape: f32[1,512], index: 7, kind: output, shape index: {}]
  %s8 = sld [smem:[#allocation0]]
  $region61: #{tpu_custom_call.1} parent=0
    _
  %s10 = ssub.s32 1, %s8
  %s11 = scalar_select 0, %s10, %s8
  %v12 = vstv %s6
  %13 = vst [vmem:[#allocation2] sm:$0x1] %v12
  $region1: #{tpu_custom_call.1} parent=0
    #allocation3 [shape = 'u8[2048]{0}', space=vmem, size = 0x800, scoped, tag = 'output window, operand 0']
    #allocation4 [shape = 's32[2]{0}', space=sflag, size = 0x8, scoped, tag = 'scoped memory for tpu_custom_call.1']
    %14 = vsyncpa [#allocation4], 0
    %s15 = scalar_lea.sflag [#allocation4], 1
    %16 = vsyncpa %s15, 0
    loop: start=0, step=1, limit=4
    $region2: #{tpu_custom_call.1} parent=1 // loop_pre_header
      _
    $region3: #{tpu_custom_call.1} parent=1 // loop_header
      %s18 = sphi 0, %s22
      %p19 = scmp.ge.s32.totalorder %s18, 4
      %s28 = sphi 0, %s30
      %s31 = sphi 0, %s28
      %s32 = sphi 0, %s31
      %s48 = sphi 0, %s32
      %s52 = sphi 0, %s52
      %s54 = sphi 0, %s52
      %s55 = sphi 0, %s54
      %s69 = sphi 0, %s55
      %s73 = sphi 0, %s73
      %s75 = sphi 0, %s73
      %s76 = sphi 0, %s75
      %s90 = sphi 0, %s76
      %s94 = sphi 0, %s94
      %s96 = sphi 0, %s94
      %s97 = sphi 0, %s96
      %s111 = sphi 0, %s97
      %s115 = sphi 0, %s115
      %s117 = sphi 0, %s115
      %s118 = sphi 0, %s117
      %s132 = sphi 0, %s118
      %s136 = sphi 0, %s136
      %s138 = sphi 0, %s136
      %s139 = sphi 0, %s138
      %s153 = sphi 0, %s139
      %s157 = sphi 0, %s157
      %s159 = sphi 0, %s157
      %s160 = sphi 0, %s159
      %s174 = sphi 0, %s160
      %s180 = sphi 0, %s182
      %s183 = sphi 0, %s180
      %s184 = sphi 0, %s183
      %s200 = sphi 0, %s184
    $region4: #{tpu_custom_call.1} parent=1 // loop_header_branch
      %21 = sbr.rel (%p19) target = $region8
    $region5: #{tpu_custom_call.1} parent=1 // loop_body
      %s23 = ssub.s32 %s18, 1
      %s24 = ssub.s32 %s18, 2
      %s25 = sadd.s32 %s18, 1
      %s26 = ssub.s32 %s18, %s25
      %p27 = scmp.eq.s32.totalorder %s26, 0
      %s29 = sadd.s32 %s28, 1
      %s30 = scalar_select %p27, %s28, %s29
      %p33 = pneg %p27
      %p34 = scmp.eq.s32.totalorder %s18, 1
      %p35 = por %p33, %p34
      %p36 = scmp.ne.s32.totalorder %s28, %s31
      %p37 = scmp.eq.s32.totalorder %s18, 0
      %p38 = por %p36, %p37
      %p39 = scmp.ne.s32.totalorder %s28, %s31
      %p40 = scmp.eq.s32.totalorder %s23, 1
      %p41 = por %p39, %p40
      %p42 = scmp.ne.s32.totalorder %s31, %s32
      %p43 = scmp.eq.s32.totalorder %s23, 0
      %p44 = por %p42, %p43
      %p45 = scmp.ne.s32.totalorder %s31, %s32
      %p46 = scmp.eq.s32.totalorder %s24, 1
      %p47 = por %p45, %p46
      %p49 = scmp.ne.s32.totalorder %s32, %s48
      %p50 = scmp.eq.s32.totalorder %s24, 0
      %p51 = por %p49, %p50
      %s53 = sadd.s32 %s52, 1
      %p56 = scmp.eq.s32.totalorder %s18, 1
      %p57 = scmp.ne.s32.totalorder %s52, %s54
      %p58 = scmp.eq.s32.totalorder %s18, 0
      %p59 = por %p57, %p58
      %p60 = scmp.ne.s32.totalorder %s52, %s54
      %p61 = scmp.eq.s32.totalorder %s23, 1
      %p62 = por %p60, %p61
      %p63 = scmp.ne.s32.totalorder %s54, %s55
      %p64 = scmp.eq.s32.totalorder %s23, 0
      %p65 = por %p63, %p64
      %p66 = scmp.ne.s32.totalorder %s54, %s55
      %p67 = scmp.eq.s32.totalorder %s24, 1
      %p68 = por %p66, %p67
      %p70 = scmp.ne.s32.totalorder %s55, %s69
      %p71 = scmp.eq.s32.totalorder %s24, 0
      %p72 = por %p70, %p71
      %s74 = sadd.s32 %s73, 1
      %p77 = scmp.eq.s32.totalorder %s18, 1
      %p78 = scmp.ne.s32.totalorder %s73, %s75
      %p79 = scmp.eq.s32.totalorder %s18, 0
      %p80 = por %p78, %p79
      %p81 = scmp.ne.s32.totalorder %s73, %s75
      %p82 = scmp.eq.s32.totalorder %s23, 1
      %p83 = por %p81, %p82
      %p84 = scmp.ne.s32.totalorder %s75, %s76
      %p85 = scmp.eq.s32.totalorder %s23, 0
      %p86 = por %p84, %p85
      %p87 = scmp.ne.s32.totalorder %s75, %s76
      %p88 = scmp.eq.s32.totalorder %s24, 1
      %p89 = por %p87, %p88
      %p91 = scmp.ne.s32.totalorder %s76, %s90
      %p92 = scmp.eq.s32.totalorder %s24, 0
      %p93 = por %p91, %p92
      %s95 = sadd.s32 %s94, 1
      %p98 = scmp.eq.s32.totalorder %s18, 1
      %p99 = scmp.ne.s32.totalorder %s94, %s96
      %p100 = scmp.eq.s32.totalorder %s18, 0
      %p101 = por %p99, %p100
      %p102 = scmp.ne.s32.totalorder %s94, %s96
      %p103 = scmp.eq.s32.totalorder %s23, 1
      %p104 = por %p102, %p103
      %p105 = scmp.ne.s32.totalorder %s96, %s97
      %p106 = scmp.eq.s32.totalorder %s23, 0
      %p107 = por %p105, %p106
      %p108 = scmp.ne.s32.totalorder %s96, %s97
      %p109 = scmp.eq.s32.totalorder %s24, 1
      %p110 = por %p108, %p109
      %p112 = scmp.ne.s32.totalorder %s97, %s111
      %p113 = scmp.eq.s32.totalorder %s24, 0
      %p114 = por %p112, %p113
      %s116 = sadd.s32 %s115, 1
      %p119 = scmp.eq.s32.totalorder %s18, 1
      %p120 = scmp.ne.s32.totalorder %s115, %s117
      %p121 = scmp.eq.s32.totalorder %s18, 0
      %p122 = por %p120, %p121
      %p123 = scmp.ne.s32.totalorder %s115, %s117
      %p124 = scmp.eq.s32.totalorder %s23, 1
      %p125 = por %p123, %p124
      %p126 = scmp.ne.s32.totalorder %s117, %s118
      %p127 = scmp.eq.s32.totalorder %s23, 0
      %p128 = por %p126, %p127
      %p129 = scmp.ne.s32.totalorder %s117, %s118
      %p130 = scmp.eq.s32.totalorder %s24, 1
      %p131 = por %p129, %p130
      %p133 = scmp.ne.s32.totalorder %s118, %s132
      %p134 = scmp.eq.s32.totalorder %s24, 0
      %p135 = por %p133, %p134
      %s137 = sadd.s32 %s136, 1
      %p140 = scmp.eq.s32.totalorder %s18, 1
      %p141 = scmp.ne.s32.totalorder %s136, %s138
      %p142 = scmp.eq.s32.totalorder %s18, 0
      %p143 = por %p141, %p142
      %p144 = scmp.ne.s32.totalorder %s136, %s138
      %p145 = scmp.eq.s32.totalorder %s23, 1
      %p146 = por %p144, %p145
      %p147 = scmp.ne.s32.totalorder %s138, %s139
      %p148 = scmp.eq.s32.totalorder %s23, 0
      %p149 = por %p147, %p148
      %p150 = scmp.ne.s32.totalorder %s138, %s139
      %p151 = scmp.eq.s32.totalorder %s24, 1
      %p152 = por %p150, %p151
      %p154 = scmp.ne.s32.totalorder %s139, %s153
      %p155 = scmp.eq.s32.totalorder %s24, 0
      %p156 = por %p154, %p155
      %s158 = sadd.s32 %s157, 1
      %p161 = scmp.eq.s32.totalorder %s18, 1
      %p162 = scmp.ne.s32.totalorder %s157, %s159
      %p163 = scmp.eq.s32.totalorder %s18, 0
      %p164 = por %p162, %p163
      %p165 = scmp.ne.s32.totalorder %s157, %s159
      %p166 = scmp.eq.s32.totalorder %s23, 1
      %p167 = por %p165, %p166
      %p168 = scmp.ne.s32.totalorder %s159, %s160
      %p169 = scmp.eq.s32.totalorder %s23, 0
      %p170 = por %p168, %p169
      %p171 = scmp.ne.s32.totalorder %s159, %s160
      %p172 = scmp.eq.s32.totalorder %s24, 1
      %p173 = por %p171, %p172
      %p175 = scmp.ne.s32.totalorder %s160, %s174
      %p176 = scmp.eq.s32.totalorder %s24, 0
      %p177 = por %p175, %p176
      %s178 = ssub.s32 %s18, %s25
      %p179 = scmp.eq.s32.totalorder %s178, 0
      %s181 = sadd.s32 %s180, 1
      %s182 = scalar_select %p179, %s180, %s181
      %p185 = pneg %p179
      %p186 = scmp.eq.s32.totalorder %s18, 1
      %p187 = por %p185, %p186
      %p188 = scmp.ne.s32.totalorder %s180, %s183
      %p189 = scmp.eq.s32.totalorder %s18, 0
      %p190 = por %p188, %p189
      %p191 = scmp.ne.s32.totalorder %s180, %s183
      %p192 = scmp.eq.s32.totalorder %s23, 1
      %p193 = por %p191, %p192
      %p194 = scmp.ne.s32.totalorder %s183, %s184
      %p195 = scmp.eq.s32.totalorder %s23, 0
      %p196 = por %p194, %p195
      %p197 = scmp.ne.s32.totalorder %s183, %s184
      %p198 = scmp.eq.s32.totalorder %s24, 1
      %p199 = por %p197, %p198
      %p201 = scmp.ne.s32.totalorder %s184, %s200
      %p202 = scmp.eq.s32.totalorder %s24, 0
      %p203 = por %p201, %p202
      %p204 = scmp.le.s32.totalorder 1, %s18
      %p205 = scmp.lt.s32.totalorder %s18, 3
      %p206 = pnand %p204, %p205
      %p207 = pneg %p206
      // Predicated region
      $region9: #{tpu_custom_call.1} parent=5 // pred_check
        _
      $region10: #{tpu_custom_call.1} parent=5 // pred_check_branch
        %209 = sbr.rel (%p206) target = $region12
      $region11: #{tpu_custom_call.1} parent=5 // pred_region
        %s210 = ssub.s32 %s18, 1
        // Predicated region
        $region13: #{tpu_custom_call.1} parent=11 // pred_check
          %p211 = pneg %p65
        $region14: #{tpu_custom_call.1} parent=11 // pred_check_branch
          %213 = sbr.rel (%p211) target = $region16
        $region15: #{tpu_custom_call.1} parent=11 // pred_region
          _
        $region16: #{tpu_custom_call.1} parent=11 // pred_fallthru
          _
        // Predicated region
        $region17: #{tpu_custom_call.1} parent=11 // pred_check
          %p214 = pneg %p86
        $region18: #{tpu_custom_call.1} parent=11 // pred_check_branch
          %216 = sbr.rel (%p214) target = $region20
        $region19: #{tpu_custom_call.1} parent=11 // pred_region
          _
        $region20: #{tpu_custom_call.1} parent=11 // pred_fallthru
          _
        // Predicated region
        $region21: #{tpu_custom_call.1} parent=11 // pred_check
          %p217 = pneg %p107
        $region22: #{tpu_custom_call.1} parent=11 // pred_check_branch
          %219 = sbr.rel (%p217) target = $region24
        $region23: #{tpu_custom_call.1} parent=11 // pred_region
          _
        $region24: #{tpu_custom_call.1} parent=11 // pred_fallthru
          _
        // Predicated region
        $region25: #{tpu_custom_call.1} parent=11 // pred_check
          %p220 = pneg %p128
        $region26: #{tpu_custom_call.1} parent=11 // pred_check_branch
          %222 = sbr.rel (%p220) target = $region28
        $region27: #{tpu_custom_call.1} parent=11 // pred_region
          _
        $region28: #{tpu_custom_call.1} parent=11 // pred_fallthru
          _
        // Predicated region
        $region29: #{tpu_custom_call.1} parent=11 // pred_check
          %p223 = pneg %p149
        $region30: #{tpu_custom_call.1} parent=11 // pred_check_branch
          %225 = sbr.rel (%p223) target = $region32
        $region31: #{tpu_custom_call.1} parent=11 // pred_region
          _
        $region32: #{tpu_custom_call.1} parent=11 // pred_fallthru
          _
        // Predicated region
        $region33: #{tpu_custom_call.1} parent=11 // pred_check
          %p226 = pneg %p170
        $region34: #{tpu_custom_call.1} parent=11 // pred_check_branch
          %228 = sbr.rel (%p226) target = $region36
        $region35: #{tpu_custom_call.1} parent=11 // pred_region
          _
        $region36: #{tpu_custom_call.1} parent=11 // pred_fallthru
          _
      $region12: #{tpu_custom_call.1} parent=5 // pred_fallthru
        _
      %p229 = scmp.lt.s32.totalorder %s18, 2
      // Predicated region
      $region37: #{tpu_custom_call.1} parent=5 // pred_check
        %p230 = pneg %p229
      $region38: #{tpu_custom_call.1} parent=5 // pred_check_branch
        %232 = sbr.rel (%p230) target = $region40
      $region39: #{tpu_custom_call.1} parent=5 // pred_region
        // Predicated region
        $region41: #{tpu_custom_call.1} parent=39 // pred_check
          %p233 = pneg %p38
        $region42: #{tpu_custom_call.1} parent=39 // pred_check_branch
          %235 = sbr.rel (%p233) target = $region44
        $region43: #{tpu_custom_call.1} parent=39 // pred_region
          %s236 = smul.u32 2, %s18
          %p237 = scmp.lt.s32.totalorder %s236, 3
          %s238 = scalar_select %p237, %s236, 3
          %s239 = smul.addr %s238, 4
          %s240 = scalar_lea.vmem %s0, %s239
          %s241 = smul.u32 2, %s18
        $region44: #{tpu_custom_call.1} parent=39 // pred_fallthru
          _
      $region40: #{tpu_custom_call.1} parent=5 // pred_fallthru
        _
      %p242 = scmp.le.s32.totalorder 1, %s18
      %p243 = scmp.lt.s32.totalorder %s18, 3
      %p244 = pnand %p242, %p243
      %p245 = pneg %p244
      // Predicated region
      $region45: #{tpu_custom_call.1} parent=5 // pred_check
        _
      $region46: #{tpu_custom_call.1} parent=5 // pred_check_branch
        %247 = sbr.rel (%p244) target = $region48
      $region47: #{tpu_custom_call.1} parent=5 // pred_region
        %s248 = ssub.s32 %s18, 1
        %s249 = smul.u32 2, %s23
        %p250 = scmp.lt.s32.totalorder %s249, 3
        %s251 = scalar_select %p250, %s249, 3
        %s252 = smul.addr %s251, 4
        %s253 = scalar_lea.vmem %s0, %s252
        %p254 = pneg %p44
        %p255 = pneg %p41
        %p256 = pneg %p65
        %p257 = pneg %p62
        %p258 = pneg %p86
        %p259 = pneg %p83
        %p260 = pneg %p107
        %p261 = pneg %p104
        %p262 = pneg %p128
        %p263 = pneg %p125
        %p264 = pneg %p149
        %p265 = pneg %p146
        %p266 = pneg %p170
        %p267 = pneg %p167
        %p268 = pneg %p196
        %p269 = pneg %p193
        %s270 = sand.u32 %s183, 1
        %s271 = scalar_lea.sflag [#allocation4], %s270
        %s272 = sand.u32 %s183, 1
        %s273 = smul.addr %s272, 2
        %s274 = scalar_lea.vmem [#allocation3], %s273
        %s275 = smul.u32 2, %s23
        %p276 = scmp.lt.s32.totalorder %s275, 3
        %s277 = scalar_select %p276, %s275, 3
        %s278 = smul.addr %s277, 4
        %s279 = scalar_lea.vmem %s0, %s278
        %s280 = smul.u32 2, %s23
        %s281 = smul.u32 2, %s23
        %v282 = vld [vmem:[%s279] sm:$0x77]
        %v283 = vld [vmem:[%s1] sm:$0xff]
        %v284 = vld [vmem:[%s1 + $0x8] sm:$0xff]
        %v285 = vld [vmem:[%s1 + $0x10] sm:$0xff]
        %v286 = vld [vmem:[%s1 + $0x18] sm:$0xff]
        %v287 = vld [vmem:[%s1 + $0x20] sm:$0xff]
        %v288 = vld [vmem:[%s1 + $0x28] sm:$0xff]
        %v289 = vld [vmem:[%s1 + $0x30] sm:$0xff]
        %v290 = vld [vmem:[%s1 + $0x38] sm:$0xff]
        %v291 = vld [vmem:[%s1 + $0x40] sm:$0xff]
        %v292 = vld [vmem:[%s2] sm:$0xff]
        %v293 = vld [vmem:[%s2 + $0x8] sm:$0xff]
        %v294 = vld [vmem:[%s2 + $0x10] sm:$0xff]
        %v295 = vld [vmem:[%s2 + $0x18] sm:$0xff]
        %v296 = vld [vmem:[%s2 + $0x20] sm:$0xff]
        %v297 = vld [vmem:[%s2 + $0x28] sm:$0xff]
        %v298 = vld [vmem:[%s2 + $0x30] sm:$0xff]
        %v299 = vld [vmem:[%s2 + $0x38] sm:$0xff]
        %v300 = vld [vmem:[%s2 + $0x40] sm:$0xff]
        %302 = vset.pattern.permute.xlu0 0
        %303 = vperm.xlu0 %302, %v292
        %v304 = vpop.permute.xlu0 %303
        %307 = vset.pattern.permute.xlu0 0
        %308 = vperm.xlu0 %307, %v293
        %v309 = vpop.permute.xlu0 %308
        %312 = vset.pattern.permute.xlu0 0
        %313 = vperm.xlu0 %312, %v294
        %v314 = vpop.permute.xlu0 %313
        %317 = vset.pattern.permute.xlu0 0
        %318 = vperm.xlu0 %317, %v295
        %v319 = vpop.permute.xlu0 %318
        %322 = vset.pattern.permute.xlu0 0
        %323 = vperm.xlu0 %322, %v296
        %v324 = vpop.permute.xlu0 %323
        %327 = vset.pattern.permute.xlu0 0
        %328 = vperm.xlu0 %327, %v297
        %v329 = vpop.permute.xlu0 %328
        %332 = vset.pattern.permute.xlu0 0
        %333 = vperm.xlu0 %332, %v298
        %v334 = vpop.permute.xlu0 %333
        %337 = vset.pattern.permute.xlu0 0
        %338 = vperm.xlu0 %337, %v299
        %v339 = vpop.permute.xlu0 %338
        %342 = vset.pattern.permute.xlu0 0
        %343 = vperm.xlu0 %342, %v300
        %v344 = vpop.permute.xlu0 %343
        %v347 = vcombine.high %v282, %v282
        %vm348 = vcmask 23552
        %v350 = vsel %vm348, %v283, 0
        %v353 = vsel %vm348, %v284, 0
        %v356 = vsel %vm348, %v285, 0
        %v359 = vsel %vm348, %v286, 0
        %v362 = vsel %vm348, %v287, 0
        %v365 = vsel %vm348, %v288, 0
        %v368 = vsel %vm348, %v289, 0
        %v371 = vsel %vm348, %v290, 0
        %v374 = vsel %vm348, %v291, 0
        %vm376 = vcmask 1042432
        %v377 = vsel %vm376, %v282, 0
        %v379 = vsel %vm376, %v347, 0
        %381 = vmatprep.subr.mxu0 %v379
        %382 = vmatpush1.msra.mxu0 %v377
        %383 = vmatprep.subr.mxu0 0.0
        %384 = vmatpush1.msra.mxu0 0.0
        %385 = vmatprep.subr.mxu0 0.0
        %386 = vmatpush1.msra.mxu0 0.0
        %387 = vmatprep.subr.mxu0 0.0
        %388 = vmatpush1.msra.mxu0 0.0
        %389 = vmatprep.subr.mxu0 0.0
        %390 = vmatpush1.msra.mxu0 0.0
        %391 = vmatprep.subr.mxu0 0.0
        %392 = vmatpush1.msra.mxu0 0.0
        %393 = vmatprep.subr.mxu0 0.0
        %394 = vmatpush1.msra.mxu0 0.0
        %395 = vmatprep.subr.mxu0 0.0
        %396 = vmatpush1.msra.mxu0 0.0
        %397 = vmatprep.subr.mxu0 0.0
        %398 = vmatpush1.msra.mxu0 0.0
        %399 = vmatprep.subr.mxu0 0.0
        %400 = vmatpush1.msra.mxu0 0.0
        %401 = vmatprep.subr.mxu0 0.0
        %402 = vmatpush1.msra.mxu0 0.0
        %403 = vmatprep.subr.mxu0 0.0
        %404 = vmatpush1.msra.mxu0 0.0
        %405 = vmatprep.subr.mxu0 0.0
        %406 = vmatpush1.msra.mxu0 0.0
        %407 = vmatprep.subr.mxu0 0.0
        %408 = vmatpush1.msra.mxu0 0.0
        %409 = vmatprep.subr.mxu0 0.0
        %410 = vmatpush1.msra.mxu0 0.0
        %411 = vmatprep.subr.mxu0 0.0
        %412 = vmatpush1.msra.mxu0 0.0
        %413 = vmatprep.subr.mxu0 0.0
        %414 = vmatpush1.msra.mxu0 0.0
        %415 = vmatprep.subr.mxu0 0.0
        %416 = vmatpush1.msra.mxu0 0.0
        %417 = vmatprep.subr.mxu0 0.0
        %418 = vmatpush1.msra.mxu0 0.0
        %419 = vmatprep.subr.mxu0 0.0
        %420 = vmatpush1.msra.mxu0 0.0
        %421 = vmatprep.subr.mxu0 0.0
        %422 = vmatpush1.msra.mxu0 0.0
        %423 = vmatprep.subr.mxu0 0.0
        %424 = vmatpush1.msra.mxu0 0.0
        %425 = vmatprep.subr.mxu0 0.0
        %426 = vmatpush1.msra.mxu0 0.0
        %427 = vmatprep.subr.mxu0 0.0
        %428 = vmatpush1.msra.mxu0 0.0
        %429 = vmatprep.subr.mxu0 0.0
        %430 = vmatpush1.msra.mxu0 0.0
        %431 = vmatprep.subr.mxu0 0.0
        %432 = vmatpush1.msra.mxu0 0.0
        %433 = vmatprep.subr.mxu0 0.0
        %434 = vmatpush1.msra.mxu0 0.0
        %435 = vmatprep.subr.mxu0 0.0
        %436 = vmatpush1.msra.mxu0 0.0
        %437 = vmatprep.subr.mxu0 0.0
        %438 = vmatpush1.msra.mxu0 0.0
        %439 = vmatprep.subr.mxu0 0.0
        %440 = vmatpush1.msra.mxu0 0.0
        %441 = vmatprep.subr.mxu0 0.0
        %442 = vmatpush1.msra.mxu0 0.0
        %443 = vmatprep.subr.mxu0 0.0
        %444 = vmatpush1.msra.mxu0 0.0
        %445 = vmatprep.mubr.f32.mxu0 0.0
        %446 = vmatmul.mubr.f32.gmra.mrb[0].mxu0 %v350
        %v447 = vpop.f32.mrb[0].mxu0
        %v448 = vadd.f32 %v304, %v447
        %v449 = vpop.f32.mrb[0].mxu0
        %v450 = vadd.f32 %v304, %v449
        %451 = vmatprep.mubr.f32.mxu0 0.0
        %452 = vmatmul.mubr.f32.gmra.mrb[0].mxu0 %v353
        %v453 = vpop.f32.mrb[0].mxu0
        %v454 = vadd.f32 %v309, %v453
        %v455 = vpop.f32.mrb[0].mxu0
        %v456 = vadd.f32 %v309, %v455
        %457 = vmatprep.mubr.f32.mxu0 0.0
        %458 = vmatmul.mubr.f32.gmra.mrb[0].mxu0 %v356
        %v459 = vpop.f32.mrb[0].mxu0
        %v460 = vadd.f32 %v314, %v459
        %v461 = vpop.f32.mrb[0].mxu0
        %v462 = vadd.f32 %v314, %v461
        %463 = vmatprep.mubr.f32.mxu0 0.0
        %464 = vmatmul.mubr.f32.gmra.mrb[0].mxu0 %v359
        %v465 = vpop.f32.mrb[0].mxu0
        %v466 = vadd.f32 %v319, %v465
        %v467 = vpop.f32.mrb[0].mxu0
        %v468 = vadd.f32 %v319, %v467
        %469 = vmatprep.mubr.f32.mxu0 0.0
        %470 = vmatmul.mubr.f32.gmra.mrb[0].mxu0 %v362
        %v471 = vpop.f32.mrb[0].mxu0
        %v472 = vadd.f32 %v324, %v471
        %v473 = vpop.f32.mrb[0].mxu0
        %v474 = vadd.f32 %v324, %v473
        %475 = vmatprep.mubr.f32.mxu0 0.0
        %476 = vmatmul.mubr.f32.gmra.mrb[0].mxu0 %v365
        %v477 = vpop.f32.mrb[0].mxu0
        %v478 = vadd.f32 %v329, %v477
        %v479 = vpop.f32.mrb[0].mxu0
        %v480 = vadd.f32 %v329, %v479
        %481 = vmatprep.mubr.f32.mxu0 0.0
        %482 = vmatmul.mubr.f32.gmra.mrb[0].mxu0 %v368
        %v483 = vpop.f32.mrb[0].mxu0
        %v484 = vadd.f32 %v334, %v483
        %v485 = vpop.f32.mrb[0].mxu0
        %v486 = vadd.f32 %v334, %v485
        %487 = vmatprep.mubr.f32.mxu0 0.0
        %488 = vmatmul.mubr.f32.gmra.mrb[0].mxu0 %v371
        %v489 = vpop.f32.mrb[0].mxu0
        %v490 = vadd.f32 %v339, %v489
        %v491 = vpop.f32.mrb[0].mxu0
        %v492 = vadd.f32 %v339, %v491
        %493 = vmatprep.mubr.f32.mxu0 0.0
        %494 = vmatmul.mubr.f32.gmra.mrb[0].mxu0 %v374
        %v495 = vpop.f32.mrb[0].mxu0
        %v496 = vadd.f32 %v344, %v495
        %v497 = vpop.f32.mrb[0].mxu0
        %v498 = vadd.f32 %v344, %v497
        %499 = vdwg.mxu0
        %v500 = vand.u32 2147483647, %v484
        %vm501 = vcmp.le.f32.partialorder %v500, 0.7853982
        %vm502 = vcmp.lt.s32.totalorder %v484, 0
        %v503 = vand.u32 %v484, 2139095040
        %v504 = vshrl.u32 %v503, 23
        %v505 = vsub.s32 %v504, 127
        %v506 = vand.u32 2147483647, %v484
        %v507 = vand.u32 %v506, 8388607
        %v508 = vor.u32 %v507, 8388608
        %v509 = vsub.s32 0, %v508
        %v510 = vadd.s32 %v505, 1
        %vm511 = vcmp.gt.s32.totalorder %v510, 0
        %v512 = vsel %vm511, %v510, 0
        %v513 = vshrl.u32 %v512, 5
        %v514 = vand.u32 %v512, 31
        %v515 = vsub.s32 32, %v514
        %v516 = vshrl.u32 683565275, %v515
        %v517 = vshll.u32 683565275, %v514
        %v518 = vshrl.u32 2475754826, %v515
        %v519 = vor.u32 %v517, %v518
        %v520 = vshll.u32 2475754826, %v514
        %v521 = vshrl.u32 2131351028, %v515
        %v522 = vor.u32 %v520, %v521
        %v523 = vshll.u32 2131351028, %v514
        %v524 = vshrl.u32 2102212464, %v515
        %v525 = vor.u32 %v523, %v524
        %v526 = vshll.u32 2102212464, %v514
        %v527 = vshrl.u32 920167782, %v515
        %v528 = vor.u32 %v526, %v527
        %v529 = vshll.u32 920167782, %v514
        %v530 = vshrl.u32 1326507024, %v515
        %v531 = vor.u32 %v529, %v530
        %vm532 = vcmp.lt.s32.totalorder %v513, 1
        %vm533 = vcmp.lt.s32.totalorder %v513, 2
        %vm534 = vcmp.lt.s32.totalorder %v513, 3
        %vm535 = vcmp.lt.s32.totalorder %v513, 4
        %v536 = vsel %vm532, %v516, %v519
        %v537 = vsel %vm535, %v525, 2102212464
        %v538 = vsel %vm534, %v522, %v537
        %v539 = vsel %vm533, %v536, %v538
        %v540 = vsel %vm532, %v519, %v522
        %v541 = vsel %vm535, %v528, 920167782
        %v542 = vsel %vm534, %v525, %v541
        %v543 = vsel %vm533, %v540, %v542
        %v544 = vsel %vm532, %v522, %v525
        %v545 = vsel %vm535, %v531, 1326507024
        %v546 = vsel %vm534, %v528, %v545
        %v547 = vsel %vm533, %v544, %v546
        %v548 = vshll.u32 %v508, 8
        %v549 = vmul.u32.u64.compose %v548, %v547
        %v550 = vextract.low.u32 %v549
        %v551 = vextract.high.u32 %v549
        %v552 = vmul.u32.u64.compose %v548, %v543
        %v553 = vextract.low.u32 %v552
        %v554 = vextract.high.u32 %v552
        %v555 = vmul.u32 %v548, %v539
        %v556 = vadd.s32 %v551, %v553
        %vm557 = vc.u32 %v551, %v553
        %v558 = vadd.s32 %v554, 1
        %v559 = vsel %vm557, %v558, %v554
        %v560 = vadd.s32 %v555, %v559
        %v561 = vadd.s32 %v560, 536870912
        %v562 = vshrl.u32 %v561, 30
        %v563 = vshll.u32 %v562, 30
        %v564 = vsub.s32 %v560, %v563
        %vm565 = vcmp.lt.s32.totalorder %v564, 0
        %v566 = vsub.s32 0, %v564
        %v567 = vsel %vm565, %v566, %v564
        %v568 = vclz %v567
        %v569 = vsub.s32 %v568, 2
        %vm570 = vcmp.gt.s32.totalorder 0, %v569
        %v571 = vsel %vm570, 0, %v569
        %v572 = vsub.s32 32, %v571
        %v573 = vshll.u32 %v564, %v571
        %v574 = vshrl.u32 %v556, %v572
        %v575 = vor.u32 %v573, %v574
        %v576 = vsub.s32 4294967266, %v571
        %v577 = vadd.s32 %v576, 127
        %v578 = vshll.u32 %v577, 23
        %v579 = vor.u32 4788187, %v578
        %v580 = vand.u32 2147483647, %v579
        %v582 = vcvt.s32.f32 %v575
        %v583 = vmul.f32 %v582, %v580
        %v584 = vxor.u32 %v583, 2147483648
        %v585 = vsel %vm502, %v584, %v583
        %v586 = vsub.s32 4, %v562
        %v587 = vsel %vm502, %v586, %v562
        %v588 = vsel %vm501, %v484, %v585
        %v589 = vsel %vm501, 0, %v587
        %v590 = vcosq.f32.pop %v588
        %v591 = vsinq.f32.pop %v588
        %vm592 = vweird.f32 %v484
        %v593 = vadd.s32 %v589, 3
        %v594 = vand.u32 %v593, 3
        %vm595 = vcmp.lt.s32.totalorder %v594, 2
        %vm596 = vcmp.eq.s32.totalorder %v594, 0
        %v597 = vxor.u32 %v591, 2147483648
        %v598 = vsel %vm596, %v590, %v597
        %vm599 = vcmp.eq.s32.totalorder %v594, 2
        %v600 = vxor.u32 %v590, 2147483648
        %v601 = vsel %vm599, %v600, %v591
        %v602 = vsel %vm595, %v598, %v601
        %v603 = vsel %vm592, nan, %v602
        %v604 = vand.u32 2147483647, %v486
        %vm605 = vcmp.le.f32.partialorder %v604, 0.7853982
        %vm606 = vcmp.lt.s32.totalorder %v486, 0
        %v607 = vand.u32 %v486, 2139095040
        %v608 = vshrl.u32 %v607, 23
        %v609 = vsub.s32 %v608, 127
        %v610 = vand.u32 2147483647, %v486
        %v611 = vand.u32 %v610, 8388607
        %v612 = vor.u32 %v611, 8388608
        %v613 = vsub.s32 0, %v612
        %v614 = vadd.s32 %v609, 1
        %vm615 = vcmp.gt.s32.totalorder %v614, 0
        %v616 = vsel %vm615, %v614, 0
        %v617 = vshrl.u32 %v616, 5
        %v618 = vand.u32 %v616, 31
        %v619 = vsub.s32 32, %v618
        %v620 = vshrl.u32 683565275, %v619
        %v621 = vshll.u32 683565275, %v618
        %v622 = vshrl.u32 2475754826, %v619
        %v623 = vor.u32 %v621, %v622
        %v624 = vshll.u32 2475754826, %v618
        %v625 = vshrl.u32 2131351028, %v619
        %v626 = vor.u32 %v624, %v625
        %v627 = vshll.u32 2131351028, %v618
        %v628 = vshrl.u32 2102212464, %v619
        %v629 = vor.u32 %v627, %v628
        %v630 = vshll.u32 2102212464, %v618
        %v631 = vshrl.u32 920167782, %v619
        %v632 = vor.u32 %v630, %v631
        %v633 = vshll.u32 920167782, %v618
        %v634 = vshrl.u32 1326507024, %v619
        %v635 = vor.u32 %v633, %v634
        %vm636 = vcmp.lt.s32.totalorder %v617, 1
        %vm637 = vcmp.lt.s32.totalorder %v617, 2
        %vm638 = vcmp.lt.s32.totalorder %v617, 3
        %vm639 = vcmp.lt.s32.totalorder %v617, 4
        %v640 = vsel %vm636, %v620, %v623
        %v641 = vsel %vm639, %v629, 2102212464
        %v642 = vsel %vm638, %v626, %v641
        %v643 = vsel %vm637, %v640, %v642
        %v644 = vsel %vm636, %v623, %v626
        %v645 = vsel %vm639, %v632, 920167782
        %v646 = vsel %vm638, %v629, %v645
        %v647 = vsel %vm637, %v644, %v646
        %v648 = vsel %vm636, %v626, %v629
        %v649 = vsel %vm639, %v635, 1326507024
        %v650 = vsel %vm638, %v632, %v649
        %v651 = vsel %vm637, %v648, %v650
        %v652 = vshll.u32 %v612, 8
        %v653 = vmul.u32.u64.compose %v652, %v651
        %v654 = vextract.low.u32 %v653
        %v655 = vextract.high.u32 %v653
        %v656 = vmul.u32.u64.compose %v652, %v647
        %v657 = vextract.low.u32 %v656
        %v658 = vextract.high.u32 %v656
        %v659 = vmul.u32 %v652, %v643
        %v660 = vadd.s32 %v655, %v657
        %vm661 = vc.u32 %v655, %v657
        %v662 = vadd.s32 %v658, 1
        %v663 = vsel %vm661, %v662, %v658
        %v664 = vadd.s32 %v659, %v663
        %v665 = vadd.s32 %v664, 536870912
        %v666 = vshrl.u32 %v665, 30
        %v667 = vshll.u32 %v666, 30
        %v668 = vsub.s32 %v664, %v667
        %vm669 = vcmp.lt.s32.totalorder %v668, 0
        %v670 = vsub.s32 0, %v668
        %v671 = vsel %vm669, %v670, %v668
        %v672 = vclz %v671
        %v673 = vsub.s32 %v672, 2
        %vm674 = vcmp.gt.s32.totalorder 0, %v673
        %v675 = vsel %vm674, 0, %v673
        %v676 = vsub.s32 32, %v675
        %v677 = vshll.u32 %v668, %v675
        %v678 = vshrl.u32 %v660, %v676
        %v679 = vor.u32 %v677, %v678
        %v680 = vsub.s32 4294967266, %v675
        %v681 = vadd.s32 %v680, 127
        %v682 = vshll.u32 %v681, 23
        %v683 = vor.u32 4788187, %v682
        %v684 = vand.u32 2147483647, %v683
        %v686 = vcvt.s32.f32 %v679
        %v687 = vmul.f32 %v686, %v684
        %v688 = vxor.u32 %v687, 2147483648
        %v689 = vsel %vm606, %v688, %v687
        %v690 = vsub.s32 4, %v666
        %v691 = vsel %vm606, %v690, %v666
        %v692 = vsel %vm605, %v486, %v689
        %v693 = vsel %vm605, 0, %v691
        %v694 = vcosq.f32.pop %v692
        %v695 = vsinq.f32.pop %v692
        %vm696 = vweird.f32 %v486
        %v697 = vadd.s32 %v693, 3
        %v698 = vand.u32 %v697, 3
        %vm699 = vcmp.lt.s32.totalorder %v698, 2
        %vm700 = vcmp.eq.s32.totalorder %v698, 0
        %v701 = vxor.u32 %v695, 2147483648
        %v702 = vsel %vm700, %v694, %v701
        %vm703 = vcmp.eq.s32.totalorder %v698, 2
        %v704 = vxor.u32 %v694, 2147483648
        %v705 = vsel %vm703, %v704, %v695
        %v706 = vsel %vm699, %v702, %v705
        %v707 = vsel %vm696, nan, %v706
        %v708 = vand.u32 2147483647, %v490
        %vm709 = vcmp.le.f32.partialorder %v708, 0.7853982
        %vm710 = vcmp.lt.s32.totalorder %v490, 0
        %v711 = vand.u32 %v490, 2139095040
        %v712 = vshrl.u32 %v711, 23
        %v713 = vsub.s32 %v712, 127
        %v714 = vand.u32 2147483647, %v490
        %v715 = vand.u32 %v714, 8388607
        %v716 = vor.u32 %v715, 8388608
        %v717 = vsub.s32 0, %v716
        %v718 = vadd.s32 %v713, 1
        %vm719 = vcmp.gt.s32.totalorder %v718, 0
        %v720 = vsel %vm719, %v718, 0
        %v721 = vshrl.u32 %v720, 5
        %v722 = vand.u32 %v720, 31
        %v723 = vsub.s32 32, %v722
        %v724 = vshrl.u32 683565275, %v723
        %v725 = vshll.u32 683565275, %v722
        %v726 = vshrl.u32 2475754826, %v723
        %v727 = vor.u32 %v725, %v726
        %v728 = vshll.u32 2475754826, %v722
        %v729 = vshrl.u32 2131351028, %v723
        %v730 = vor.u32 %v728, %v729
        %v731 = vshll.u32 2131351028, %v722
        %v732 = vshrl.u32 2102212464, %v723
        %v733 = vor.u32 %v731, %v732
        %v734 = vshll.u32 2102212464, %v722
        %v735 = vshrl.u32 920167782, %v723
        %v736 = vor.u32 %v734, %v735
        %v737 = vshll.u32 920167782, %v722
        %v738 = vshrl.u32 1326507024, %v723
        %v739 = vor.u32 %v737, %v738
        %vm740 = vcmp.lt.s32.totalorder %v721, 1
        %vm741 = vcmp.lt.s32.totalorder %v721, 2
        %vm742 = vcmp.lt.s32.totalorder %v721, 3
        %vm743 = vcmp.lt.s32.totalorder %v721, 4
        %v744 = vsel %vm740, %v724, %v727
        %v745 = vsel %vm743, %v733, 2102212464
        %v746 = vsel %vm742, %v730, %v745
        %v747 = vsel %vm741, %v744, %v746
        %v748 = vsel %vm740, %v727, %v730
        %v749 = vsel %vm743, %v736, 920167782
        %v750 = vsel %vm742, %v733, %v749
        %v751 = vsel %vm741, %v748, %v750
        %v752 = vsel %vm740, %v730, %v733
        %v753 = vsel %vm743, %v739, 1326507024
        %v754 = vsel %vm742, %v736, %v753
        %v755 = vsel %vm741, %v752, %v754
        %v756 = vshll.u32 %v716, 8
        %v757 = vmul.u32.u64.compose %v756, %v755
        %v758 = vextract.low.u32 %v757
        %v759 = vextract.high.u32 %v757
        %v760 = vmul.u32.u64.compose %v756, %v751
        %v761 = vextract.low.u32 %v760
        %v762 = vextract.high.u32 %v760
        %v763 = vmul.u32 %v756, %v747
        %v764 = vadd.s32 %v759, %v761
        %vm765 = vc.u32 %v759, %v761
        %v766 = vadd.s32 %v762, 1
        %v767 = vsel %vm765, %v766, %v762
        %v768 = vadd.s32 %v763, %v767
        %v769 = vadd.s32 %v768, 536870912
        %v770 = vshrl.u32 %v769, 30
        %v771 = vshll.u32 %v770, 30
        %v772 = vsub.s32 %v768, %v771
        %vm773 = vcmp.lt.s32.totalorder %v772, 0
        %v774 = vsub.s32 0, %v772
        %v775 = vsel %vm773, %v774, %v772
        %v776 = vclz %v775
        %v777 = vsub.s32 %v776, 2
        %vm778 = vcmp.gt.s32.totalorder 0, %v777
        %v779 = vsel %vm778, 0, %v777
        %v780 = vsub.s32 32, %v779
        %v781 = vshll.u32 %v772, %v779
        %v782 = vshrl.u32 %v764, %v780
        %v783 = vor.u32 %v781, %v782
        %v784 = vsub.s32 4294967266, %v779
        %v785 = vadd.s32 %v784, 127
        %v786 = vshll.u32 %v785, 23
        %v787 = vor.u32 4788187, %v786
        %v788 = vand.u32 2147483647, %v787
        %v790 = vcvt.s32.f32 %v783
        %v791 = vmul.f32 %v790, %v788
        %v792 = vxor.u32 %v791, 2147483648
        %v793 = vsel %vm710, %v792, %v791
        %v794 = vsub.s32 4, %v770
        %v795 = vsel %vm710, %v794, %v770
        %v796 = vsel %vm709, %v490, %v793
        %v797 = vsel %vm709, 0, %v795
        %v798 = vcosq.f32.pop %v796
        %v799 = vsinq.f32.pop %v796
        %vm800 = vweird.f32 %v490
        %v801 = vadd.s32 %v797, 3
        %v802 = vand.u32 %v801, 3
        %vm803 = vcmp.lt.s32.totalorder %v802, 2
        %vm804 = vcmp.eq.s32.totalorder %v802, 0
        %v805 = vxor.u32 %v799, 2147483648
        %v806 = vsel %vm804, %v798, %v805
        %vm807 = vcmp.eq.s32.totalorder %v802, 2
        %v808 = vxor.u32 %v798, 2147483648
        %v809 = vsel %vm807, %v808, %v799
        %v810 = vsel %vm803, %v806, %v809
        %v811 = vsel %vm800, nan, %v810
        %v812 = vand.u32 2147483647, %v492
        %vm813 = vcmp.le.f32.partialorder %v812, 0.7853982
        %vm814 = vcmp.lt.s32.totalorder %v492, 0
        %v815 = vand.u32 %v492, 2139095040
        %v816 = vshrl.u32 %v815, 23
        %v817 = vsub.s32 %v816, 127
        %v818 = vand.u32 2147483647, %v492
        %v819 = vand.u32 %v818, 8388607
        %v820 = vor.u32 %v819, 8388608
        %v821 = vsub.s32 0, %v820
        %v822 = vadd.s32 %v817, 1
        %vm823 = vcmp.gt.s32.totalorder %v822, 0
        %v824 = vsel %vm823, %v822, 0
        %v825 = vshrl.u32 %v824, 5
        %v826 = vand.u32 %v824, 31
        %v827 = vsub.s32 32, %v826
        %v828 = vshrl.u32 683565275, %v827
        %v829 = vshll.u32 683565275, %v826
        %v830 = vshrl.u32 2475754826, %v827
        %v831 = vor.u32 %v829, %v830
        %v832 = vshll.u32 2475754826, %v826
        %v833 = vshrl.u32 2131351028, %v827
        %v834 = vor.u32 %v832, %v833
        %v835 = vshll.u32 2131351028, %v826
        %v836 = vshrl.u32 2102212464, %v827
        %v837 = vor.u32 %v835, %v836
        %v838 = vshll.u32 2102212464, %v826
        %v839 = vshrl.u32 920167782, %v827
        %v840 = vor.u32 %v838, %v839
        %v841 = vshll.u32 920167782, %v826
        %v842 = vshrl.u32 1326507024, %v827
        %v843 = vor.u32 %v841, %v842
        %vm844 = vcmp.lt.s32.totalorder %v825, 1
        %vm845 = vcmp.lt.s32.totalorder %v825, 2
        %vm846 = vcmp.lt.s32.totalorder %v825, 3
        %vm847 = vcmp.lt.s32.totalorder %v825, 4
        %v848 = vsel %vm844, %v828, %v831
        %v849 = vsel %vm847, %v837, 2102212464
        %v850 = vsel %vm846, %v834, %v849
        %v851 = vsel %vm845, %v848, %v850
        %v852 = vsel %vm844, %v831, %v834
        %v853 = vsel %vm847, %v840, 920167782
        %v854 = vsel %vm846, %v837, %v853
        %v855 = vsel %vm845, %v852, %v854
        %v856 = vsel %vm844, %v834, %v837
        %v857 = vsel %vm847, %v843, 1326507024
        %v858 = vsel %vm846, %v840, %v857
        %v859 = vsel %vm845, %v856, %v858
        %v860 = vshll.u32 %v820, 8
        %v861 = vmul.u32.u64.compose %v860, %v859
        %v862 = vextract.low.u32 %v861
        %v863 = vextract.high.u32 %v861
        %v864 = vmul.u32.u64.compose %v860, %v855
        %v865 = vextract.low.u32 %v864
        %v866 = vextract.high.u32 %v864
        %v867 = vmul.u32 %v860, %v851
        %v868 = vadd.s32 %v863, %v865
        %vm869 = vc.u32 %v863, %v865
        %v870 = vadd.s32 %v866, 1
        %v871 = vsel %vm869, %v870, %v866
        %v872 = vadd.s32 %v867, %v871
        %v873 = vadd.s32 %v872, 536870912
        %v874 = vshrl.u32 %v873, 30
        %v875 = vshll.u32 %v874, 30
        %v876 = vsub.s32 %v872, %v875
        %vm877 = vcmp.lt.s32.totalorder %v876, 0
        %v878 = vsub.s32 0, %v876
        %v879 = vsel %vm877, %v878, %v876
        %v880 = vclz %v879
        %v881 = vsub.s32 %v880, 2
        %vm882 = vcmp.gt.s32.totalorder 0, %v881
        %v883 = vsel %vm882, 0, %v881
        %v884 = vsub.s32 32, %v883
        %v885 = vshll.u32 %v876, %v883
        %v886 = vshrl.u32 %v868, %v884
        %v887 = vor.u32 %v885, %v886
        %v888 = vsub.s32 4294967266, %v883
        %v889 = vadd.s32 %v888, 127
        %v890 = vshll.u32 %v889, 23
        %v891 = vor.u32 4788187, %v890
        %v892 = vand.u32 2147483647, %v891
        %v894 = vcvt.s32.f32 %v887
        %v895 = vmul.f32 %v894, %v892
        %v896 = vxor.u32 %v895, 2147483648
        %v897 = vsel %vm814, %v896, %v895
        %v898 = vsub.s32 4, %v874
        %v899 = vsel %vm814, %v898, %v874
        %v900 = vsel %vm813, %v492, %v897
        %v901 = vsel %vm813, 0, %v899
        %v902 = vcosq.f32.pop %v900
        %v903 = vsinq.f32.pop %v900
        %vm904 = vweird.f32 %v492
        %v905 = vadd.s32 %v901, 3
        %v906 = vand.u32 %v905, 3
        %vm907 = vcmp.lt.s32.totalorder %v906, 2
        %vm908 = vcmp.eq.s32.totalorder %v906, 0
        %v909 = vxor.u32 %v903, 2147483648
        %v910 = vsel %vm908, %v902, %v909
        %vm911 = vcmp.eq.s32.totalorder %v906, 2
        %v912 = vxor.u32 %v902, 2147483648
        %v913 = vsel %vm911, %v912, %v903
        %v914 = vsel %vm907, %v910, %v913
        %v915 = vsel %vm904, nan, %v914
        %v916 = vand.u32 2147483647, %v496
        %vm917 = vcmp.le.f32.partialorder %v916, 0.7853982
        %vm918 = vcmp.lt.s32.totalorder %v496, 0
        %v919 = vand.u32 %v496, 2139095040
        %v920 = vshrl.u32 %v919, 23
        %v921 = vsub.s32 %v920, 127
        %v922 = vand.u32 2147483647, %v496
        %v923 = vand.u32 %v922, 8388607
        %v924 = vor.u32 %v923, 8388608
        %v925 = vsub.s32 0, %v924
        %v926 = vadd.s32 %v921, 1
        %vm927 = vcmp.gt.s32.totalorder %v926, 0
        %v928 = vsel %vm927, %v926, 0
        %v929 = vshrl.u32 %v928, 5
        %v930 = vand.u32 %v928, 31
        %v931 = vsub.s32 32, %v930
        %v932 = vshrl.u32 683565275, %v931
        %v933 = vshll.u32 683565275, %v930
        %v934 = vshrl.u32 2475754826, %v931
        %v935 = vor.u32 %v933, %v934
        %v936 = vshll.u32 2475754826, %v930
        %v937 = vshrl.u32 2131351028, %v931
        %v938 = vor.u32 %v936, %v937
        %v939 = vshll.u32 2131351028, %v930
        %v940 = vshrl.u32 2102212464, %v931
        %v941 = vor.u32 %v939, %v940
        %v942 = vshll.u32 2102212464, %v930
        %v943 = vshrl.u32 920167782, %v931
        %v944 = vor.u32 %v942, %v943
        %v945 = vshll.u32 920167782, %v930
        %v946 = vshrl.u32 1326507024, %v931
        %v947 = vor.u32 %v945, %v946
        %vm948 = vcmp.lt.s32.totalorder %v929, 1
        %vm949 = vcmp.lt.s32.totalorder %v929, 2
        %vm950 = vcmp.lt.s32.totalorder %v929, 3
        %vm951 = vcmp.lt.s32.totalorder %v929, 4
        %v952 = vsel %vm948, %v932, %v935
        %v953 = vsel %vm951, %v941, 2102212464
        %v954 = vsel %vm950, %v938, %v953
        %v955 = vsel %vm949, %v952, %v954
        %v956 = vsel %vm948, %v935, %v938
        %v957 = vsel %vm951, %v944, 920167782
        %v958 = vsel %vm950, %v941, %v957
        %v959 = vsel %vm949, %v956, %v958
        %v960 = vsel %vm948, %v938, %v941
        %v961 = vsel %vm951, %v947, 1326507024
        %v962 = vsel %vm950, %v944, %v961
        %v963 = vsel %vm949, %v960, %v962
        %v964 = vshll.u32 %v924, 8
        %v965 = vmul.u32.u64.compose %v964, %v963
        %v966 = vextract.low.u32 %v965
        %v967 = vextract.high.u32 %v965
        %v968 = vmul.u32.u64.compose %v964, %v959
        %v969 = vextract.low.u32 %v968
        %v970 = vextract.high.u32 %v968
        %v971 = vmul.u32 %v964, %v955
        %v972 = vadd.s32 %v967, %v969
        %vm973 = vc.u32 %v967, %v969
        %v974 = vadd.s32 %v970, 1
        %v975 = vsel %vm973, %v974, %v970
        %v976 = vadd.s32 %v971, %v975
        %v977 = vadd.s32 %v976, 536870912
        %v978 = vshrl.u32 %v977, 30
        %v979 = vshll.u32 %v978, 30
        %v980 = vsub.s32 %v976, %v979
        %vm981 = vcmp.lt.s32.totalorder %v980, 0
        %v982 = vsub.s32 0, %v980
        %v983 = vsel %vm981, %v982, %v980
        %v984 = vclz %v983
        %v985 = vsub.s32 %v984, 2
        %vm986 = vcmp.gt.s32.totalorder 0, %v985
        %v987 = vsel %vm986, 0, %v985
        %v988 = vsub.s32 32, %v987
        %v989 = vshll.u32 %v980, %v987
        %v990 = vshrl.u32 %v972, %v988
        %v991 = vor.u32 %v989, %v990
        %v992 = vsub.s32 4294967266, %v987
        %v993 = vadd.s32 %v992, 127
        %v994 = vshll.u32 %v993, 23
        %v995 = vor.u32 4788187, %v994
        %v996 = vand.u32 2147483647, %v995
        %v998 = vcvt.s32.f32 %v991
        %v999 = vmul.f32 %v998, %v996
        %v1000 = vxor.u32 %v999, 2147483648
        %v1001 = vsel %vm918, %v1000, %v999
        %v1002 = vsub.s32 4, %v978
        %v1003 = vsel %vm918, %v1002, %v978
        %v1004 = vsel %vm917, %v496, %v1001
        %v1005 = vsel %vm917, 0, %v1003
        %v1006 = vcosq.f32.pop %v1004
        %v1007 = vsinq.f32.pop %v1004
        %vm1008 = vweird.f32 %v496
        %v1009 = vadd.s32 %v1005, 3
        %v1010 = vand.u32 %v1009, 3
        %vm1011 = vcmp.lt.s32.totalorder %v1010, 2
        %vm1012 = vcmp.eq.s32.totalorder %v1010, 0
        %v1013 = vxor.u32 %v1007, 2147483648
        %v1014 = vsel %vm1012, %v1006, %v1013
        %vm1015 = vcmp.eq.s32.totalorder %v1010, 2
        %v1016 = vxor.u32 %v1006, 2147483648
        %v1017 = vsel %vm1015, %v1016, %v1007
        %v1018 = vsel %vm1011, %v1014, %v1017
        %v1019 = vsel %vm1008, nan, %v1018
        %v1020 = vand.u32 2147483647, %v498
        %vm1021 = vcmp.le.f32.partialorder %v1020, 0.7853982
        %vm1022 = vcmp.lt.s32.totalorder %v498, 0
        %v1023 = vand.u32 %v498, 2139095040
        %v1024 = vshrl.u32 %v1023, 23
        %v1025 = vsub.s32 %v1024, 127
        %v1026 = vand.u32 2147483647, %v498
        %v1027 = vand.u32 %v1026, 8388607
        %v1028 = vor.u32 %v1027, 8388608
        %v1029 = vsub.s32 0, %v1028
        %v1030 = vadd.s32 %v1025, 1
        %vm1031 = vcmp.gt.s32.totalorder %v1030, 0
        %v1032 = vsel %vm1031, %v1030, 0
        %v1033 = vshrl.u32 %v1032, 5
        %v1034 = vand.u32 %v1032, 31
        %v1035 = vsub.s32 32, %v1034
        %v1036 = vshrl.u32 683565275, %v1035
        %v1037 = vshll.u32 683565275, %v1034
        %v1038 = vshrl.u32 2475754826, %v1035
        %v1039 = vor.u32 %v1037, %v1038
        %v1040 = vshll.u32 2475754826, %v1034
        %v1041 = vshrl.u32 2131351028, %v1035
        %v1042 = vor.u32 %v1040, %v1041
        %v1043 = vshll.u32 2131351028, %v1034
        %v1044 = vshrl.u32 2102212464, %v1035
        %v1045 = vor.u32 %v1043, %v1044
        %v1046 = vshll.u32 2102212464, %v1034
        %v1047 = vshrl.u32 920167782, %v1035
        %v1048 = vor.u32 %v1046, %v1047
        %v1049 = vshll.u32 920167782, %v1034
        %v1050 = vshrl.u32 1326507024, %v1035
        %v1051 = vor.u32 %v1049, %v1050
        %vm1052 = vcmp.lt.s32.totalorder %v1033, 1
        %vm1053 = vcmp.lt.s32.totalorder %v1033, 2
        %vm1054 = vcmp.lt.s32.totalorder %v1033, 3
        %vm1055 = vcmp.lt.s32.totalorder %v1033, 4
        %v1056 = vsel %vm1052, %v1036, %v1039
        %v1057 = vsel %vm1055, %v1045, 2102212464
        %v1058 = vsel %vm1054, %v1042, %v1057
        %v1059 = vsel %vm1053, %v1056, %v1058
        %v1060 = vsel %vm1052, %v1039, %v1042
        %v1061 = vsel %vm1055, %v1048, 920167782
        %v1062 = vsel %vm1054, %v1045, %v1061
        %v1063 = vsel %vm1053, %v1060, %v1062
        %v1064 = vsel %vm1052, %v1042, %v1045
        %v1065 = vsel %vm1055, %v1051, 1326507024
        %v1066 = vsel %vm1054, %v1048, %v1065
        %v1067 = vsel %vm1053, %v1064, %v1066
        %v1068 = vshll.u32 %v1028, 8
        %v1069 = vmul.u32.u64.compose %v1068, %v1067
        %v1070 = vextract.low.u32 %v1069
        %v1071 = vextract.high.u32 %v1069
        %v1072 = vmul.u32.u64.compose %v1068, %v1063
        %v1073 = vextract.low.u32 %v1072
        %v1074 = vextract.high.u32 %v1072
        %v1075 = vmul.u32 %v1068, %v1059
        %v1076 = vadd.s32 %v1071, %v1073
        %vm1077 = vc.u32 %v1071, %v1073
        %v1078 = vadd.s32 %v1074, 1
        %v1079 = vsel %vm1077, %v1078, %v1074
        %v1080 = vadd.s32 %v1075, %v1079
        %v1081 = vadd.s32 %v1080, 536870912
        %v1082 = vshrl.u32 %v1081, 30
        %v1083 = vshll.u32 %v1082, 30
        %v1084 = vsub.s32 %v1080, %v1083
        %vm1085 = vcmp.lt.s32.totalorder %v1084, 0
        %v1086 = vsub.s32 0, %v1084
        %v1087 = vsel %vm1085, %v1086, %v1084
        %v1088 = vclz %v1087
        %v1089 = vsub.s32 %v1088, 2
        %vm1090 = vcmp.gt.s32.totalorder 0, %v1089
        %v1091 = vsel %vm1090, 0, %v1089
        %v1092 = vsub.s32 32, %v1091
        %v1093 = vshll.u32 %v1084, %v1091
        %v1094 = vshrl.u32 %v1076, %v1092
        %v1095 = vor.u32 %v1093, %v1094
        %v1096 = vsub.s32 4294967266, %v1091
        %v1097 = vadd.s32 %v1096, 127
        %v1098 = vshll.u32 %v1097, 23
        %v1099 = vor.u32 4788187, %v1098
        %v1100 = vand.u32 2147483647, %v1099
        %v1102 = vcvt.s32.f32 %v1095
        %v1103 = vmul.f32 %v1102, %v1100
        %v1104 = vxor.u32 %v1103, 2147483648
        %v1105 = vsel %vm1022, %v1104, %v1103
        %v1106 = vsub.s32 4, %v1082
        %v1107 = vsel %vm1022, %v1106, %v1082
        %v1108 = vsel %vm1021, %v498, %v1105
        %v1109 = vsel %vm1021, 0, %v1107
        %v1110 = vcosq.f32.pop %v1108
        %v1111 = vsinq.f32.pop %v1108
        %vm1112 = vweird.f32 %v498
        %v1113 = vadd.s32 %v1109, 3
        %v1114 = vand.u32 %v1113, 3
        %vm1115 = vcmp.lt.s32.totalorder %v1114, 2
        %vm1116 = vcmp.eq.s32.totalorder %v1114, 0
        %v1117 = vxor.u32 %v1111, 2147483648
        %v1118 = vsel %vm1116, %v1110, %v1117
        %vm1119 = vcmp.eq.s32.totalorder %v1114, 2
        %v1120 = vxor.u32 %v1110, 2147483648
        %v1121 = vsel %vm1119, %v1120, %v1111
        %v1122 = vsel %vm1115, %v1118, %v1121
        %v1123 = vsel %vm1112, nan, %v1122
        %v1124 = vsub.f32 %v466, %v448
        %v1125 = vsub.f32 %v468, %v450
        %v1126 = vsub.f32 %v472, %v454
        %v1127 = vsub.f32 %v474, %v456
        %v1128 = vsub.f32 %v478, %v460
        %v1129 = vsub.f32 %v480, %v462
        %v1130 = vld [vmem:[%s3] sm:$0xff]
        %v1131 = vld [vmem:[%s3 + $0x8] sm:$0xff]
        %v1132 = vld [vmem:[%s3 + $0x10] sm:$0xff]
        %v1133 = vld [vmem:[%s4] sm:$0xff]
        %v1134 = vld [vmem:[%s4 + $0x8] sm:$0xff]
        %v1135 = vld [vmem:[%s4 + $0x10] sm:$0xff]
        %1137 = vset.pattern.permute.xlu0 0
        %1138 = vperm.xlu0 %1137, %v1133
        %v1139 = vpop.permute.xlu0 %1138
        %1142 = vset.pattern.permute.xlu0 0
        %1143 = vperm.xlu0 %1142, %v1134
        %v1144 = vpop.permute.xlu0 %1143
        %1147 = vset.pattern.permute.xlu0 0
        %1148 = vperm.xlu0 %1147, %v1135
        %v1149 = vpop.permute.xlu0 %1148
        %vm1151 = vcmask 195584
        %v1153 = vsel %vm1151, %v1130, 0
        %v1156 = vsel %vm1151, %v1131, 0
        %v1159 = vsel %vm1151, %v1132, 0
        %1161 = vmatprep.subr.mxu0 %v707
        %1162 = vmatpush1.msra.mxu0 %v603
        %1163 = vmatprep.subr.mxu0 %v915
        %1164 = vmatpush1.msra.mxu0 %v811
        %1165 = vmatprep.subr.mxu0 %v1123
        %1166 = vmatpush1.msra.mxu0 %v1019
        %1167 = vmatprep.subr.mxu0 0.0
        %1168 = vmatpush1.msra.mxu0 0.0
        %1169 = vmatprep.subr.mxu0 0.0
        %1170 = vmatpush1.msra.mxu0 0.0
        %1171 = vmatprep.subr.mxu0 0.0
        %1172 = vmatpush1.msra.mxu0 0.0
        %1173 = vmatprep.subr.mxu0 0.0
        %1174 = vmatpush1.msra.mxu0 0.0
        %1175 = vmatprep.subr.mxu0 0.0
        %1176 = vmatpush1.msra.mxu0 0.0
        %1177 = vmatprep.subr.mxu0 0.0
        %1178 = vmatpush1.msra.mxu0 0.0
        %1179 = vmatprep.subr.mxu0 0.0
        %1180 = vmatpush1.msra.mxu0 0.0
        %1181 = vmatprep.subr.mxu0 0.0
        %1182 = vmatpush1.msra.mxu0 0.0
        %1183 = vmatprep.subr.mxu0 0.0
        %1184 = vmatpush1.msra.mxu0 0.0
        %1185 = vmatprep.subr.mxu0 0.0
        %1186 = vmatpush1.msra.mxu0 0.0
        %1187 = vmatprep.subr.mxu0 0.0
        %1188 = vmatpush1.msra.mxu0 0.0
        %1189 = vmatprep.subr.mxu0 0.0
        %1190 = vmatpush1.msra.mxu0 0.0
        %1191 = vmatprep.subr.mxu0 0.0
        %1192 = vmatpush1.msra.mxu0 0.0
        %1193 = vmatprep.subr.mxu0 0.0
        %1194 = vmatpush1.msra.mxu0 0.0
        %1195 = vmatprep.subr.mxu0 0.0
        %1196 = vmatpush1.msra.mxu0 0.0
        %1197 = vmatprep.subr.mxu0 0.0
        %1198 = vmatpush1.msra.mxu0 0.0
        %1199 = vmatprep.subr.mxu0 0.0
        %1200 = vmatpush1.msra.mxu0 0.0
        %1201 = vmatprep.subr.mxu0 0.0
        %1202 = vmatpush1.msra.mxu0 0.0
        %1203 = vmatprep.subr.mxu0 0.0
        %1204 = vmatpush1.msra.mxu0 0.0
        %1205 = vmatprep.subr.mxu0 0.0
        %1206 = vmatpush1.msra.mxu0 0.0
        %1207 = vmatprep.subr.mxu0 0.0
        %1208 = vmatpush1.msra.mxu0 0.0
        %1209 = vmatprep.subr.mxu0 0.0
        %1210 = vmatpush1.msra.mxu0 0.0
        %1211 = vmatprep.subr.mxu0 0.0
        %1212 = vmatpush1.msra.mxu0 0.0
        %1213 = vmatprep.subr.mxu0 0.0
        %1214 = vmatpush1.msra.mxu0 0.0
        %1215 = vmatprep.subr.mxu0 0.0
        %1216 = vmatpush1.msra.mxu0 0.0
        %1217 = vmatprep.subr.mxu0 0.0
        %1218 = vmatpush1.msra.mxu0 0.0
        %1219 = vmatprep.subr.mxu0 0.0
        %1220 = vmatpush1.msra.mxu0 0.0
        %1221 = vmatprep.subr.mxu0 0.0
        %1222 = vmatpush1.msra.mxu0 0.0
        %1223 = vmatprep.subr.mxu0 0.0
        %1224 = vmatpush1.msra.mxu0 0.0
        %1225 = vmatprep.mubr.f32.mxu0 0.0
        %1226 = vmatmul.mubr.f32.gmra.mrb[0].mxu0 %v1153
        %v1227 = vpop.f32.mrb[0].mxu0
        %v1228 = vadd.f32 %v1139, %v1227
        %v1229 = vpop.f32.mrb[0].mxu0
        %v1230 = vadd.f32 %v1139, %v1229
        %1231 = vmatprep.mubr.f32.mxu0 0.0
        %1232 = vmatmul.mubr.f32.gmra.mrb[0].mxu0 %v1156
        %v1233 = vpop.f32.mrb[0].mxu0
        %v1234 = vadd.f32 %v1144, %v1233
        %v1235 = vpop.f32.mrb[0].mxu0
        %v1236 = vadd.f32 %v1144, %v1235
        %1237 = vmatprep.mubr.f32.mxu0 0.0
        %1238 = vmatmul.mubr.f32.gmra.mrb[0].mxu0 %v1159
        %v1239 = vpop.f32.mrb[0].mxu0
        %v1240 = vadd.f32 %v1149, %v1239
        %v1241 = vpop.f32.mrb[0].mxu0
        %v1242 = vadd.f32 %v1149, %v1241
        %1243 = vdwg.mxu0
        %v1244 = vand.u32 2147483647, %v1228
        %vm1245 = vcmp.le.f32.partialorder %v1244, 0.7853982
        %vm1246 = vcmp.lt.s32.totalorder %v1228, 0
        %v1247 = vand.u32 %v1228, 2139095040
        %v1248 = vshrl.u32 %v1247, 23
        %v1249 = vsub.s32 %v1248, 127
        %v1250 = vand.u32 2147483647, %v1228
        %v1251 = vand.u32 %v1250, 8388607
        %v1252 = vor.u32 %v1251, 8388608
        %v1253 = vsub.s32 0, %v1252
        %v1254 = vadd.s32 %v1249, 1
        %vm1255 = vcmp.gt.s32.totalorder %v1254, 0
        %v1256 = vsel %vm1255, %v1254, 0
        %v1257 = vshrl.u32 %v1256, 5
        %v1258 = vand.u32 %v1256, 31
        %v1259 = vsub.s32 32, %v1258
        %v1260 = vshrl.u32 683565275, %v1259
        %v1261 = vshll.u32 683565275, %v1258
        %v1262 = vshrl.u32 2475754826, %v1259
        %v1263 = vor.u32 %v1261, %v1262
        %v1264 = vshll.u32 2475754826, %v1258
        %v1265 = vshrl.u32 2131351028, %v1259
        %v1266 = vor.u32 %v1264, %v1265
        %v1267 = vshll.u32 2131351028, %v1258
        %v1268 = vshrl.u32 2102212464, %v1259
        %v1269 = vor.u32 %v1267, %v1268
        %v1270 = vshll.u32 2102212464, %v1258
        %v1271 = vshrl.u32 920167782, %v1259
        %v1272 = vor.u32 %v1270, %v1271
        %v1273 = vshll.u32 920167782, %v1258
        %v1274 = vshrl.u32 1326507024, %v1259
        %v1275 = vor.u32 %v1273, %v1274
        %vm1276 = vcmp.lt.s32.totalorder %v1257, 1
        %vm1277 = vcmp.lt.s32.totalorder %v1257, 2
        %vm1278 = vcmp.lt.s32.totalorder %v1257, 3
        %vm1279 = vcmp.lt.s32.totalorder %v1257, 4
        %v1280 = vsel %vm1276, %v1260, %v1263
        %v1281 = vsel %vm1279, %v1269, 2102212464
        %v1282 = vsel %vm1278, %v1266, %v1281
        %v1283 = vsel %vm1277, %v1280, %v1282
        %v1284 = vsel %vm1276, %v1263, %v1266
        %v1285 = vsel %vm1279, %v1272, 920167782
        %v1286 = vsel %vm1278, %v1269, %v1285
        %v1287 = vsel %vm1277, %v1284, %v1286
        %v1288 = vsel %vm1276, %v1266, %v1269
        %v1289 = vsel %vm1279, %v1275, 1326507024
        %v1290 = vsel %vm1278, %v1272, %v1289
        %v1291 = vsel %vm1277, %v1288, %v1290
        %v1292 = vshll.u32 %v1252, 8
        %v1293 = vmul.u32.u64.compose %v1292, %v1291
        %v1294 = vextract.low.u32 %v1293
        %v1295 = vextract.high.u32 %v1293
        %v1296 = vmul.u32.u64.compose %v1292, %v1287
        %v1297 = vextract.low.u32 %v1296
        %v1298 = vextract.high.u32 %v1296
        %v1299 = vmul.u32 %v1292, %v1283
        %v1300 = vadd.s32 %v1295, %v1297
        %vm1301 = vc.u32 %v1295, %v1297
        %v1302 = vadd.s32 %v1298, 1
        %v1303 = vsel %vm1301, %v1302, %v1298
        %v1304 = vadd.s32 %v1299, %v1303
        %v1305 = vadd.s32 %v1304, 536870912
        %v1306 = vshrl.u32 %v1305, 30
        %v1307 = vshll.u32 %v1306, 30
        %v1308 = vsub.s32 %v1304, %v1307
        %vm1309 = vcmp.lt.s32.totalorder %v1308, 0
        %v1310 = vsub.s32 0, %v1308
        %v1311 = vsel %vm1309, %v1310, %v1308
        %v1312 = vclz %v1311
        %v1313 = vsub.s32 %v1312, 2
        %vm1314 = vcmp.gt.s32.totalorder 0, %v1313
        %v1315 = vsel %vm1314, 0, %v1313
        %v1316 = vsub.s32 32, %v1315
        %v1317 = vshll.u32 %v1308, %v1315
        %v1318 = vshrl.u32 %v1300, %v1316
        %v1319 = vor.u32 %v1317, %v1318
        %v1320 = vsub.s32 4294967266, %v1315
        %v1321 = vadd.s32 %v1320, 127
        %v1322 = vshll.u32 %v1321, 23
        %v1323 = vor.u32 4788187, %v1322
        %v1324 = vand.u32 2147483647, %v1323
        %v1326 = vcvt.s32.f32 %v1319
        %v1327 = vmul.f32 %v1326, %v1324
        %v1328 = vxor.u32 %v1327, 2147483648
        %v1329 = vsel %vm1246, %v1328, %v1327
        %v1330 = vsub.s32 4, %v1306
        %v1331 = vsel %vm1246, %v1330, %v1306
        %v1332 = vsel %vm1245, %v1228, %v1329
        %v1333 = vsel %vm1245, 0, %v1331
        %v1334 = vcosq.f32.pop %v1332
        %v1335 = vsinq.f32.pop %v1332
        %vm1336 = vweird.f32 %v1228
        %v1337 = vadd.s32 %v1333, 3
        %v1338 = vand.u32 %v1337, 3
        %vm1339 = vcmp.lt.s32.totalorder %v1338, 2
        %vm1340 = vcmp.eq.s32.totalorder %v1338, 0
        %v1341 = vxor.u32 %v1335, 2147483648
        %v1342 = vsel %vm1340, %v1334, %v1341
        %vm1343 = vcmp.eq.s32.totalorder %v1338, 2
        %v1344 = vxor.u32 %v1334, 2147483648
        %v1345 = vsel %vm1343, %v1344, %v1335
        %v1346 = vsel %vm1339, %v1342, %v1345
        %v1347 = vsel %vm1336, nan, %v1346
        %v1348 = vand.u32 2147483647, %v1230
        %vm1349 = vcmp.le.f32.partialorder %v1348, 0.7853982
        %vm1350 = vcmp.lt.s32.totalorder %v1230, 0
        %v1351 = vand.u32 %v1230, 2139095040
        %v1352 = vshrl.u32 %v1351, 23
        %v1353 = vsub.s32 %v1352, 127
        %v1354 = vand.u32 2147483647, %v1230
        %v1355 = vand.u32 %v1354, 8388607
        %v1356 = vor.u32 %v1355, 8388608
        %v1357 = vsub.s32 0, %v1356
        %v1358 = vadd.s32 %v1353, 1
        %vm1359 = vcmp.gt.s32.totalorder %v1358, 0
        %v1360 = vsel %vm1359, %v1358, 0
        %v1361 = vshrl.u32 %v1360, 5
        %v1362 = vand.u32 %v1360, 31
        %v1363 = vsub.s32 32, %v1362
        %v1364 = vshrl.u32 683565275, %v1363
        %v1365 = vshll.u32 683565275, %v1362
        %v1366 = vshrl.u32 2475754826, %v1363
        %v1367 = vor.u32 %v1365, %v1366
        %v1368 = vshll.u32 2475754826, %v1362
        %v1369 = vshrl.u32 2131351028, %v1363
        %v1370 = vor.u32 %v1368, %v1369
        %v1371 = vshll.u32 2131351028, %v1362
        %v1372 = vshrl.u32 2102212464, %v1363
        %v1373 = vor.u32 %v1371, %v1372
        %v1374 = vshll.u32 2102212464, %v1362
        %v1375 = vshrl.u32 920167782, %v1363
        %v1376 = vor.u32 %v1374, %v1375
        %v1377 = vshll.u32 920167782, %v1362
        %v1378 = vshrl.u32 1326507024, %v1363
        %v1379 = vor.u32 %v1377, %v1378
        %vm1380 = vcmp.lt.s32.totalorder %v1361, 1
        %vm1381 = vcmp.lt.s32.totalorder %v1361, 2
        %vm1382 = vcmp.lt.s32.totalorder %v1361, 3
        %vm1383 = vcmp.lt.s32.totalorder %v1361, 4
        %v1384 = vsel %vm1380, %v1364, %v1367
        %v1385 = vsel %vm1383, %v1373, 2102212464
        %v1386 = vsel %vm1382, %v1370, %v1385
        %v1387 = vsel %vm1381, %v1384, %v1386
        %v1388 = vsel %vm1380, %v1367, %v1370
        %v1389 = vsel %vm1383, %v1376, 920167782
        %v1390 = vsel %vm1382, %v1373, %v1389
        %v1391 = vsel %vm1381, %v1388, %v1390
        %v1392 = vsel %vm1380, %v1370, %v1373
        %v1393 = vsel %vm1383, %v1379, 1326507024
        %v1394 = vsel %vm1382, %v1376, %v1393
        %v1395 = vsel %vm1381, %v1392, %v1394
        %v1396 = vshll.u32 %v1356, 8
        %v1397 = vmul.u32.u64.compose %v1396, %v1395
        %v1398 = vextract.low.u32 %v1397
        %v1399 = vextract.high.u32 %v1397
        %v1400 = vmul.u32.u64.compose %v1396, %v1391
        %v1401 = vextract.low.u32 %v1400
        %v1402 = vextract.high.u32 %v1400
        %v1403 = vmul.u32 %v1396, %v1387
        %v1404 = vadd.s32 %v1399, %v1401
        %vm1405 = vc.u32 %v1399, %v1401
        %v1406 = vadd.s32 %v1402, 1
        %v1407 = vsel %vm1405, %v1406, %v1402
        %v1408 = vadd.s32 %v1403, %v1407
        %v1409 = vadd.s32 %v1408, 536870912
        %v1410 = vshrl.u32 %v1409, 30
        %v1411 = vshll.u32 %v1410, 30
        %v1412 = vsub.s32 %v1408, %v1411
        %vm1413 = vcmp.lt.s32.totalorder %v1412, 0
        %v1414 = vsub.s32 0, %v1412
        %v1415 = vsel %vm1413, %v1414, %v1412
        %v1416 = vclz %v1415
        %v1417 = vsub.s32 %v1416, 2
        %vm1418 = vcmp.gt.s32.totalorder 0, %v1417
        %v1419 = vsel %vm1418, 0, %v1417
        %v1420 = vsub.s32 32, %v1419
        %v1421 = vshll.u32 %v1412, %v1419
        %v1422 = vshrl.u32 %v1404, %v1420
        %v1423 = vor.u32 %v1421, %v1422
        %v1424 = vsub.s32 4294967266, %v1419
        %v1425 = vadd.s32 %v1424, 127
        %v1426 = vshll.u32 %v1425, 23
        %v1427 = vor.u32 4788187, %v1426
        %v1428 = vand.u32 2147483647, %v1427
        %v1430 = vcvt.s32.f32 %v1423
        %v1431 = vmul.f32 %v1430, %v1428
        %v1432 = vxor.u32 %v1431, 2147483648
        %v1433 = vsel %vm1350, %v1432, %v1431
        %v1434 = vsub.s32 4, %v1410
        %v1435 = vsel %vm1350, %v1434, %v1410
        %v1436 = vsel %vm1349, %v1230, %v1433
        %v1437 = vsel %vm1349, 0, %v1435
        %v1438 = vcosq.f32.pop %v1436
        %v1439 = vsinq.f32.pop %v1436
        %vm1440 = vweird.f32 %v1230
        %v1441 = vadd.s32 %v1437, 3
        %v1442 = vand.u32 %v1441, 3
        %vm1443 = vcmp.lt.s32.totalorder %v1442, 2
        %vm1444 = vcmp.eq.s32.totalorder %v1442, 0
        %v1445 = vxor.u32 %v1439, 2147483648
        %v1446 = vsel %vm1444, %v1438, %v1445
        %vm1447 = vcmp.eq.s32.totalorder %v1442, 2
        %v1448 = vxor.u32 %v1438, 2147483648
        %v1449 = vsel %vm1447, %v1448, %v1439
        %v1450 = vsel %vm1443, %v1446, %v1449
        %v1451 = vsel %vm1440, nan, %v1450
        %v1452 = vand.u32 2147483647, %v1234
        %vm1453 = vcmp.le.f32.partialorder %v1452, 0.7853982
        %vm1454 = vcmp.lt.s32.totalorder %v1234, 0
        %v1455 = vand.u32 %v1234, 2139095040
        %v1456 = vshrl.u32 %v1455, 23
        %v1457 = vsub.s32 %v1456, 127
        %v1458 = vand.u32 2147483647, %v1234
        %v1459 = vand.u32 %v1458, 8388607
        %v1460 = vor.u32 %v1459, 8388608
        %v1461 = vsub.s32 0, %v1460
        %v1462 = vadd.s32 %v1457, 1
        %vm1463 = vcmp.gt.s32.totalorder %v1462, 0
        %v1464 = vsel %vm1463, %v1462, 0
        %v1465 = vshrl.u32 %v1464, 5
        %v1466 = vand.u32 %v1464, 31
        %v1467 = vsub.s32 32, %v1466
        %v1468 = vshrl.u32 683565275, %v1467
        %v1469 = vshll.u32 683565275, %v1466
        %v1470 = vshrl.u32 2475754826, %v1467
        %v1471 = vor.u32 %v1469, %v1470
        %v1472 = vshll.u32 2475754826, %v1466
        %v1473 = vshrl.u32 2131351028, %v1467
        %v1474 = vor.u32 %v1472, %v1473
        %v1475 = vshll.u32 2131351028, %v1466
        %v1476 = vshrl.u32 2102212464, %v1467
        %v1477 = vor.u32 %v1475, %v1476
        %v1478 = vshll.u32 2102212464, %v1466
        %v1479 = vshrl.u32 920167782, %v1467
        %v1480 = vor.u32 %v1478, %v1479
        %v1481 = vshll.u32 920167782, %v1466
        %v1482 = vshrl.u32 1326507024, %v1467
        %v1483 = vor.u32 %v1481, %v1482
        %vm1484 = vcmp.lt.s32.totalorder %v1465, 1
        %vm1485 = vcmp.lt.s32.totalorder %v1465, 2
        %vm1486 = vcmp.lt.s32.totalorder %v1465, 3
        %vm1487 = vcmp.lt.s32.totalorder %v1465, 4
        %v1488 = vsel %vm1484, %v1468, %v1471
        %v1489 = vsel %vm1487, %v1477, 2102212464
        %v1490 = vsel %vm1486, %v1474, %v1489
        %v1491 = vsel %vm1485, %v1488, %v1490
        %v1492 = vsel %vm1484, %v1471, %v1474
        %v1493 = vsel %vm1487, %v1480, 920167782
        %v1494 = vsel %vm1486, %v1477, %v1493
        %v1495 = vsel %vm1485, %v1492, %v1494
        %v1496 = vsel %vm1484, %v1474, %v1477
        %v1497 = vsel %vm1487, %v1483, 1326507024
        %v1498 = vsel %vm1486, %v1480, %v1497
        %v1499 = vsel %vm1485, %v1496, %v1498
        %v1500 = vshll.u32 %v1460, 8
        %v1501 = vmul.u32.u64.compose %v1500, %v1499
        %v1502 = vextract.low.u32 %v1501
        %v1503 = vextract.high.u32 %v1501
        %v1504 = vmul.u32.u64.compose %v1500, %v1495
        %v1505 = vextract.low.u32 %v1504
        %v1506 = vextract.high.u32 %v1504
        %v1507 = vmul.u32 %v1500, %v1491
        %v1508 = vadd.s32 %v1503, %v1505
        %vm1509 = vc.u32 %v1503, %v1505
        %v1510 = vadd.s32 %v1506, 1
        %v1511 = vsel %vm1509, %v1510, %v1506
        %v1512 = vadd.s32 %v1507, %v1511
        %v1513 = vadd.s32 %v1512, 536870912
        %v1514 = vshrl.u32 %v1513, 30
        %v1515 = vshll.u32 %v1514, 30
        %v1516 = vsub.s32 %v1512, %v1515
        %vm1517 = vcmp.lt.s32.totalorder %v1516, 0
        %v1518 = vsub.s32 0, %v1516
        %v1519 = vsel %vm1517, %v1518, %v1516
        %v1520 = vclz %v1519
        %v1521 = vsub.s32 %v1520, 2
        %vm1522 = vcmp.gt.s32.totalorder 0, %v1521
        %v1523 = vsel %vm1522, 0, %v1521
        %v1524 = vsub.s32 32, %v1523
        %v1525 = vshll.u32 %v1516, %v1523
        %v1526 = vshrl.u32 %v1508, %v1524
        %v1527 = vor.u32 %v1525, %v1526
        %v1528 = vsub.s32 4294967266, %v1523
        %v1529 = vadd.s32 %v1528, 127
        %v1530 = vshll.u32 %v1529, 23
        %v1531 = vor.u32 4788187, %v1530
        %v1532 = vand.u32 2147483647, %v1531
        %v1534 = vcvt.s32.f32 %v1527
        %v1535 = vmul.f32 %v1534, %v1532
        %v1536 = vxor.u32 %v1535, 2147483648
        %v1537 = vsel %vm1454, %v1536, %v1535
        %v1538 = vsub.s32 4, %v1514
        %v1539 = vsel %vm1454, %v1538, %v1514
        %v1540 = vsel %vm1453, %v1234, %v1537
        %v1541 = vsel %vm1453, 0, %v1539
        %v1542 = vcosq.f32.pop %v1540
        %v1543 = vsinq.f32.pop %v1540
        %vm1544 = vweird.f32 %v1234
        %v1545 = vadd.s32 %v1541, 3
        %v1546 = vand.u32 %v1545, 3
        %vm1547 = vcmp.lt.s32.totalorder %v1546, 2
        %vm1548 = vcmp.eq.s32.totalorder %v1546, 0
        %v1549 = vxor.u32 %v1543, 2147483648
        %v1550 = vsel %vm1548, %v1542, %v1549
        %vm1551 = vcmp.eq.s32.totalorder %v1546, 2
        %v1552 = vxor.u32 %v1542, 2147483648
        %v1553 = vsel %vm1551, %v1552, %v1543
        %v1554 = vsel %vm1547, %v1550, %v1553
        %v1555 = vsel %vm1544, nan, %v1554
        %v1556 = vand.u32 2147483647, %v1236
        %vm1557 = vcmp.le.f32.partialorder %v1556, 0.7853982
        %vm1558 = vcmp.lt.s32.totalorder %v1236, 0
        %v1559 = vand.u32 %v1236, 2139095040
        %v1560 = vshrl.u32 %v1559, 23
        %v1561 = vsub.s32 %v1560, 127
        %v1562 = vand.u32 2147483647, %v1236
        %v1563 = vand.u32 %v1562, 8388607
        %v1564 = vor.u32 %v1563, 8388608
        %v1565 = vsub.s32 0, %v1564
        %v1566 = vadd.s32 %v1561, 1
        %vm1567 = vcmp.gt.s32.totalorder %v1566, 0
        %v1568 = vsel %vm1567, %v1566, 0
        %v1569 = vshrl.u32 %v1568, 5
        %v1570 = vand.u32 %v1568, 31
        %v1571 = vsub.s32 32, %v1570
        %v1572 = vshrl.u32 683565275, %v1571
        %v1573 = vshll.u32 683565275, %v1570
        %v1574 = vshrl.u32 2475754826, %v1571
        %v1575 = vor.u32 %v1573, %v1574
        %v1576 = vshll.u32 2475754826, %v1570
        %v1577 = vshrl.u32 2131351028, %v1571
        %v1578 = vor.u32 %v1576, %v1577
        %v1579 = vshll.u32 2131351028, %v1570
        %v1580 = vshrl.u32 2102212464, %v1571
        %v1581 = vor.u32 %v1579, %v1580
        %v1582 = vshll.u32 2102212464, %v1570
        %v1583 = vshrl.u32 920167782, %v1571
        %v1584 = vor.u32 %v1582, %v1583
        %v1585 = vshll.u32 920167782, %v1570
        %v1586 = vshrl.u32 1326507024, %v1571
        %v1587 = vor.u32 %v1585, %v1586
        %vm1588 = vcmp.lt.s32.totalorder %v1569, 1
        %vm1589 = vcmp.lt.s32.totalorder %v1569, 2
        %vm1590 = vcmp.lt.s32.totalorder %v1569, 3
        %vm1591 = vcmp.lt.s32.totalorder %v1569, 4
        %v1592 = vsel %vm1588, %v1572, %v1575
        %v1593 = vsel %vm1591, %v1581, 2102212464
        %v1594 = vsel %vm1590, %v1578, %v1593
        %v1595 = vsel %vm1589, %v1592, %v1594
        %v1596 = vsel %vm1588, %v1575, %v1578
        %v1597 = vsel %vm1591, %v1584, 920167782
        %v1598 = vsel %vm1590, %v1581, %v1597
        %v1599 = vsel %vm1589, %v1596, %v1598
        %v1600 = vsel %vm1588, %v1578, %v1581
        %v1601 = vsel %vm1591, %v1587, 1326507024
        %v1602 = vsel %vm1590, %v1584, %v1601
        %v1603 = vsel %vm1589, %v1600, %v1602
        %v1604 = vshll.u32 %v1564, 8
        %v1605 = vmul.u32.u64.compose %v1604, %v1603
        %v1606 = vextract.low.u32 %v1605
        %v1607 = vextract.high.u32 %v1605
        %v1608 = vmul.u32.u64.compose %v1604, %v1599
        %v1609 = vextract.low.u32 %v1608
        %v1610 = vextract.high.u32 %v1608
        %v1611 = vmul.u32 %v1604, %v1595
        %v1612 = vadd.s32 %v1607, %v1609
        %vm1613 = vc.u32 %v1607, %v1609
        %v1614 = vadd.s32 %v1610, 1
        %v1615 = vsel %vm1613, %v1614, %v1610
        %v1616 = vadd.s32 %v1611, %v1615
        %v1617 = vadd.s32 %v1616, 536870912
        %v1618 = vshrl.u32 %v1617, 30
        %v1619 = vshll.u32 %v1618, 30
        %v1620 = vsub.s32 %v1616, %v1619
        %vm1621 = vcmp.lt.s32.totalorder %v1620, 0
        %v1622 = vsub.s32 0, %v1620
        %v1623 = vsel %vm1621, %v1622, %v1620
        %v1624 = vclz %v1623
        %v1625 = vsub.s32 %v1624, 2
        %vm1626 = vcmp.gt.s32.totalorder 0, %v1625
        %v1627 = vsel %vm1626, 0, %v1625
        %v1628 = vsub.s32 32, %v1627
        %v1629 = vshll.u32 %v1620, %v1627
        %v1630 = vshrl.u32 %v1612, %v1628
        %v1631 = vor.u32 %v1629, %v1630
        %v1632 = vsub.s32 4294967266, %v1627
        %v1633 = vadd.s32 %v1632, 127
        %v1634 = vshll.u32 %v1633, 23
        %v1635 = vor.u32 4788187, %v1634
        %v1636 = vand.u32 2147483647, %v1635
        %v1638 = vcvt.s32.f32 %v1631
        %v1639 = vmul.f32 %v1638, %v1636
        %v1640 = vxor.u32 %v1639, 2147483648
        %v1641 = vsel %vm1558, %v1640, %v1639
        %v1642 = vsub.s32 4, %v1618
        %v1643 = vsel %vm1558, %v1642, %v1618
        %v1644 = vsel %vm1557, %v1236, %v1641
        %v1645 = vsel %vm1557, 0, %v1643
        %v1646 = vcosq.f32.pop %v1644
        %v1647 = vsinq.f32.pop %v1644
        %vm1648 = vweird.f32 %v1236
        %v1649 = vadd.s32 %v1645, 3
        %v1650 = vand.u32 %v1649, 3
        %vm1651 = vcmp.lt.s32.totalorder %v1650, 2
        %vm1652 = vcmp.eq.s32.totalorder %v1650, 0
        %v1653 = vxor.u32 %v1647, 2147483648
        %v1654 = vsel %vm1652, %v1646, %v1653
        %vm1655 = vcmp.eq.s32.totalorder %v1650, 2
        %v1656 = vxor.u32 %v1646, 2147483648
        %v1657 = vsel %vm1655, %v1656, %v1647
        %v1658 = vsel %vm1651, %v1654, %v1657
        %v1659 = vsel %vm1648, nan, %v1658
        %v1660 = vand.u32 2147483647, %v1240
        %vm1661 = vcmp.le.f32.partialorder %v1660, 0.7853982
        %vm1662 = vcmp.lt.s32.totalorder %v1240, 0
        %v1663 = vand.u32 %v1240, 2139095040
        %v1664 = vshrl.u32 %v1663, 23
        %v1665 = vsub.s32 %v1664, 127
        %v1666 = vand.u32 2147483647, %v1240
        %v1667 = vand.u32 %v1666, 8388607
        %v1668 = vor.u32 %v1667, 8388608
        %v1669 = vsub.s32 0, %v1668
        %v1670 = vadd.s32 %v1665, 1
        %vm1671 = vcmp.gt.s32.totalorder %v1670, 0
        %v1672 = vsel %vm1671, %v1670, 0
        %v1673 = vshrl.u32 %v1672, 5
        %v1674 = vand.u32 %v1672, 31
        %v1675 = vsub.s32 32, %v1674
        %v1676 = vshrl.u32 683565275, %v1675
        %v1677 = vshll.u32 683565275, %v1674
        %v1678 = vshrl.u32 2475754826, %v1675
        %v1679 = vor.u32 %v1677, %v1678
        %v1680 = vshll.u32 2475754826, %v1674
        %v1681 = vshrl.u32 2131351028, %v1675
        %v1682 = vor.u32 %v1680, %v1681
        %v1683 = vshll.u32 2131351028, %v1674
        %v1684 = vshrl.u32 2102212464, %v1675
        %v1685 = vor.u32 %v1683, %v1684
        %v1686 = vshll.u32 2102212464, %v1674
        %v1687 = vshrl.u32 920167782, %v1675
        %v1688 = vor.u32 %v1686, %v1687
        %v1689 = vshll.u32 920167782, %v1674
        %v1690 = vshrl.u32 1326507024, %v1675
        %v1691 = vor.u32 %v1689, %v1690
        %vm1692 = vcmp.lt.s32.totalorder %v1673, 1
        %vm1693 = vcmp.lt.s32.totalorder %v1673, 2
        %vm1694 = vcmp.lt.s32.totalorder %v1673, 3
        %vm1695 = vcmp.lt.s32.totalorder %v1673, 4
        %v1696 = vsel %vm1692, %v1676, %v1679
        %v1697 = vsel %vm1695, %v1685, 2102212464
        %v1698 = vsel %vm1694, %v1682, %v1697
        %v1699 = vsel %vm1693, %v1696, %v1698
        %v1700 = vsel %vm1692, %v1679, %v1682
        %v1701 = vsel %vm1695, %v1688, 920167782
        %v1702 = vsel %vm1694, %v1685, %v1701
        %v1703 = vsel %vm1693, %v1700, %v1702
        %v1704 = vsel %vm1692, %v1682, %v1685
        %v1705 = vsel %vm1695, %v1691, 1326507024
        %v1706 = vsel %vm1694, %v1688, %v1705
        %v1707 = vsel %vm1693, %v1704, %v1706
        %v1708 = vshll.u32 %v1668, 8
        %v1709 = vmul.u32.u64.compose %v1708, %v1707
        %v1710 = vextract.low.u32 %v1709
        %v1711 = vextract.high.u32 %v1709
        %v1712 = vmul.u32.u64.compose %v1708, %v1703
        %v1713 = vextract.low.u32 %v1712
        %v1714 = vextract.high.u32 %v1712
        %v1715 = vmul.u32 %v1708, %v1699
        %v1716 = vadd.s32 %v1711, %v1713
        %vm1717 = vc.u32 %v1711, %v1713
        %v1718 = vadd.s32 %v1714, 1
        %v1719 = vsel %vm1717, %v1718, %v1714
        %v1720 = vadd.s32 %v1715, %v1719
        %v1721 = vadd.s32 %v1720, 536870912
        %v1722 = vshrl.u32 %v1721, 30
        %v1723 = vshll.u32 %v1722, 30
        %v1724 = vsub.s32 %v1720, %v1723
        %vm1725 = vcmp.lt.s32.totalorder %v1724, 0
        %v1726 = vsub.s32 0, %v1724
        %v1727 = vsel %vm1725, %v1726, %v1724
        %v1728 = vclz %v1727
        %v1729 = vsub.s32 %v1728, 2
        %vm1730 = vcmp.gt.s32.totalorder 0, %v1729
        %v1731 = vsel %vm1730, 0, %v1729
        %v1732 = vsub.s32 32, %v1731
        %v1733 = vshll.u32 %v1724, %v1731
        %v1734 = vshrl.u32 %v1716, %v1732
        %v1735 = vor.u32 %v1733, %v1734
        %v1736 = vsub.s32 4294967266, %v1731
        %v1737 = vadd.s32 %v1736, 127
        %v1738 = vshll.u32 %v1737, 23
        %v1739 = vor.u32 4788187, %v1738
        %v1740 = vand.u32 2147483647, %v1739
        %v1742 = vcvt.s32.f32 %v1735
        %v1743 = vmul.f32 %v1742, %v1740
        %v1744 = vxor.u32 %v1743, 2147483648
        %v1745 = vsel %vm1662, %v1744, %v1743
        %v1746 = vsub.s32 4, %v1722
        %v1747 = vsel %vm1662, %v1746, %v1722
        %v1748 = vsel %vm1661, %v1240, %v1745
        %v1749 = vsel %vm1661, 0, %v1747
        %v1750 = vcosq.f32.pop %v1748
        %v1751 = vsinq.f32.pop %v1748
        %vm1752 = vweird.f32 %v1240
        %v1753 = vadd.s32 %v1749, 3
        %v1754 = vand.u32 %v1753, 3
        %vm1755 = vcmp.lt.s32.totalorder %v1754, 2
        %vm1756 = vcmp.eq.s32.totalorder %v1754, 0
        %v1757 = vxor.u32 %v1751, 2147483648
        %v1758 = vsel %vm1756, %v1750, %v1757
        %vm1759 = vcmp.eq.s32.totalorder %v1754, 2
        %v1760 = vxor.u32 %v1750, 2147483648
        %v1761 = vsel %vm1759, %v1760, %v1751
        %v1762 = vsel %vm1755, %v1758, %v1761
        %v1763 = vsel %vm1752, nan, %v1762
        %v1764 = vand.u32 2147483647, %v1242
        %vm1765 = vcmp.le.f32.partialorder %v1764, 0.7853982
        %vm1766 = vcmp.lt.s32.totalorder %v1242, 0
        %v1767 = vand.u32 %v1242, 2139095040
        %v1768 = vshrl.u32 %v1767, 23
        %v1769 = vsub.s32 %v1768, 127
        %v1770 = vand.u32 2147483647, %v1242
        %v1771 = vand.u32 %v1770, 8388607
        %v1772 = vor.u32 %v1771, 8388608
        %v1773 = vsub.s32 0, %v1772
        %v1774 = vadd.s32 %v1769, 1
        %vm1775 = vcmp.gt.s32.totalorder %v1774, 0
        %v1776 = vsel %vm1775, %v1774, 0
        %v1777 = vshrl.u32 %v1776, 5
        %v1778 = vand.u32 %v1776, 31
        %v1779 = vsub.s32 32, %v1778
        %v1780 = vshrl.u32 683565275, %v1779
        %v1781 = vshll.u32 683565275, %v1778
        %v1782 = vshrl.u32 2475754826, %v1779
        %v1783 = vor.u32 %v1781, %v1782
        %v1784 = vshll.u32 2475754826, %v1778
        %v1785 = vshrl.u32 2131351028, %v1779
        %v1786 = vor.u32 %v1784, %v1785
        %v1787 = vshll.u32 2131351028, %v1778
        %v1788 = vshrl.u32 2102212464, %v1779
        %v1789 = vor.u32 %v1787, %v1788
        %v1790 = vshll.u32 2102212464, %v1778
        %v1791 = vshrl.u32 920167782, %v1779
        %v1792 = vor.u32 %v1790, %v1791
        %v1793 = vshll.u32 920167782, %v1778
        %v1794 = vshrl.u32 1326507024, %v1779
        %v1795 = vor.u32 %v1793, %v1794
        %vm1796 = vcmp.lt.s32.totalorder %v1777, 1
        %vm1797 = vcmp.lt.s32.totalorder %v1777, 2
        %vm1798 = vcmp.lt.s32.totalorder %v1777, 3
        %vm1799 = vcmp.lt.s32.totalorder %v1777, 4
        %v1800 = vsel %vm1796, %v1780, %v1783
        %v1801 = vsel %vm1799, %v1789, 2102212464
        %v1802 = vsel %vm1798, %v1786, %v1801
        %v1803 = vsel %vm1797, %v1800, %v1802
        %v1804 = vsel %vm1796, %v1783, %v1786
        %v1805 = vsel %vm1799, %v1792, 920167782
        %v1806 = vsel %vm1798, %v1789, %v1805
        %v1807 = vsel %vm1797, %v1804, %v1806
        %v1808 = vsel %vm1796, %v1786, %v1789
        %v1809 = vsel %vm1799, %v1795, 1326507024
        %v1810 = vsel %vm1798, %v1792, %v1809
        %v1811 = vsel %vm1797, %v1808, %v1810
        %v1812 = vshll.u32 %v1772, 8
        %v1813 = vmul.u32.u64.compose %v1812, %v1811
        %v1814 = vextract.low.u32 %v1813
        %v1815 = vextract.high.u32 %v1813
        %v1816 = vmul.u32.u64.compose %v1812, %v1807
        %v1817 = vextract.low.u32 %v1816
        %v1818 = vextract.high.u32 %v1816
        %v1819 = vmul.u32 %v1812, %v1803
        %v1820 = vadd.s32 %v1815, %v1817
        %vm1821 = vc.u32 %v1815, %v1817
        %v1822 = vadd.s32 %v1818, 1
        %v1823 = vsel %vm1821, %v1822, %v1818
        %v1824 = vadd.s32 %v1819, %v1823
        %v1825 = vadd.s32 %v1824, 536870912
        %v1826 = vshrl.u32 %v1825, 30
        %v1827 = vshll.u32 %v1826, 30
        %v1828 = vsub.s32 %v1824, %v1827
        %vm1829 = vcmp.lt.s32.totalorder %v1828, 0
        %v1830 = vsub.s32 0, %v1828
        %v1831 = vsel %vm1829, %v1830, %v1828
        %v1832 = vclz %v1831
        %v1833 = vsub.s32 %v1832, 2
        %vm1834 = vcmp.gt.s32.totalorder 0, %v1833
        %v1835 = vsel %vm1834, 0, %v1833
        %v1836 = vsub.s32 32, %v1835
        %v1837 = vshll.u32 %v1828, %v1835
        %v1838 = vshrl.u32 %v1820, %v1836
        %v1839 = vor.u32 %v1837, %v1838
        %v1840 = vsub.s32 4294967266, %v1835
        %v1841 = vadd.s32 %v1840, 127
        %v1842 = vshll.u32 %v1841, 23
        %v1843 = vor.u32 4788187, %v1842
        %v1844 = vand.u32 2147483647, %v1843
        %v1846 = vcvt.s32.f32 %v1839
        %v1847 = vmul.f32 %v1846, %v1844
        %v1848 = vxor.u32 %v1847, 2147483648
        %v1849 = vsel %vm1766, %v1848, %v1847
        %v1850 = vsub.s32 4, %v1826
        %v1851 = vsel %vm1766, %v1850, %v1826
        %v1852 = vsel %vm1765, %v1242, %v1849
        %v1853 = vsel %vm1765, 0, %v1851
        %v1854 = vcosq.f32.pop %v1852
        %v1855 = vsinq.f32.pop %v1852
        %vm1856 = vweird.f32 %v1242
        %v1857 = vadd.s32 %v1853, 3
        %v1858 = vand.u32 %v1857, 3
        %vm1859 = vcmp.lt.s32.totalorder %v1858, 2
        %vm1860 = vcmp.eq.s32.totalorder %v1858, 0
        %v1861 = vxor.u32 %v1855, 2147483648
        %v1862 = vsel %vm1860, %v1854, %v1861
        %vm1863 = vcmp.eq.s32.totalorder %v1858, 2
        %v1864 = vxor.u32 %v1854, 2147483648
        %v1865 = vsel %vm1863, %v1864, %v1855
        %v1866 = vsel %vm1859, %v1862, %v1865
        %v1867 = vsel %vm1856, nan, %v1866
        %v1868 = vmul.f32 %v1347, %v1124
        %v1869 = vmul.f32 %v1451, %v1125
        %v1870 = vmul.f32 %v1555, %v1126
        %v1871 = vmul.f32 %v1659, %v1127
        %v1872 = vmul.f32 %v1763, %v1128
        %v1873 = vmul.f32 %v1867, %v1129
        %v1874 = vadd.f32 %v448, %v1868
        %v1875 = vadd.f32 %v450, %v1869
        %v1876 = vadd.f32 %v454, %v1870
        %v1877 = vadd.f32 %v456, %v1871
        %v1878 = vadd.f32 %v460, %v1872
        %v1879 = vadd.f32 %v462, %v1873
        %s1880 = scalar_lea.vmem %s3, 24
        %v1881 = vld [vmem:[%s1880] sm:$0xff]
        %v1882 = vld [vmem:[%s1880 + $0x8] sm:$0xff]
        %v1883 = vld [vmem:[%s1880 + $0x10] sm:$0xff]
        %s1884 = scalar_lea.vmem %s4, 24
        %v1885 = vld [vmem:[%s1884] sm:$0xff]
        %v1886 = vld [vmem:[%s1884 + $0x8] sm:$0xff]
        %v1887 = vld [vmem:[%s1884 + $0x10] sm:$0xff]
        %1889 = vset.pattern.permute.xlu0 0
        %1890 = vperm.xlu0 %1889, %v1885
        %v1891 = vpop.permute.xlu0 %1890
        %1894 = vset.pattern.permute.xlu0 0
        %1895 = vperm.xlu0 %1894, %v1886
        %v1896 = vpop.permute.xlu0 %1895
        %1899 = vset.pattern.permute.xlu0 0
        %1900 = vperm.xlu0 %1899, %v1887
        %v1901 = vpop.permute.xlu0 %1900
        %v1904 = vsel %vm1151, %v1881, 0
        %v1907 = vsel %vm1151, %v1882, 0
        %v1910 = vsel %vm1151, %v1883, 0
        %1912 = vmatprep.subr.mxu0 %v1875
        %1913 = vmatpush1.msra.mxu0 %v1874
        %1914 = vmatprep.subr.mxu0 %v1877
        %1915 = vmatpush1.msra.mxu0 %v1876
        %1916 = vmatprep.subr.mxu0 %v1879
        %1917 = vmatpush1.msra.mxu0 %v1878
        %1918 = vmatprep.subr.mxu0 0.0
        %1919 = vmatpush1.msra.mxu0 0.0
        %1920 = vmatprep.subr.mxu0 0.0
        %1921 = vmatpush1.msra.mxu0 0.0
        %1922 = vmatprep.subr.mxu0 0.0
        %1923 = vmatpush1.msra.mxu0 0.0
        %1924 = vmatprep.subr.mxu0 0.0
        %1925 = vmatpush1.msra.mxu0 0.0
        %1926 = vmatprep.subr.mxu0 0.0
        %1927 = vmatpush1.msra.mxu0 0.0
        %1928 = vmatprep.subr.mxu0 0.0
        %1929 = vmatpush1.msra.mxu0 0.0
        %1930 = vmatprep.subr.mxu0 0.0
        %1931 = vmatpush1.msra.mxu0 0.0
        %1932 = vmatprep.subr.mxu0 0.0
        %1933 = vmatpush1.msra.mxu0 0.0
        %1934 = vmatprep.subr.mxu0 0.0
        %1935 = vmatpush1.msra.mxu0 0.0
        %1936 = vmatprep.subr.mxu0 0.0
        %1937 = vmatpush1.msra.mxu0 0.0
        %1938 = vmatprep.subr.mxu0 0.0
        %1939 = vmatpush1.msra.mxu0 0.0
        %1940 = vmatprep.subr.mxu0 0.0
        %1941 = vmatpush1.msra.mxu0 0.0
        %1942 = vmatprep.subr.mxu0 0.0
        %1943 = vmatpush1.msra.mxu0 0.0
        %1944 = vmatprep.subr.mxu0 0.0
        %1945 = vmatpush1.msra.mxu0 0.0
        %1946 = vmatprep.subr.mxu0 0.0
        %1947 = vmatpush1.msra.mxu0 0.0
        %1948 = vmatprep.subr.mxu0 0.0
        %1949 = vmatpush1.msra.mxu0 0.0
        %1950 = vmatprep.subr.mxu0 0.0
        %1951 = vmatpush1.msra.mxu0 0.0
        %1952 = vmatprep.subr.mxu0 0.0
        %1953 = vmatpush1.msra.mxu0 0.0
        %1954 = vmatprep.subr.mxu0 0.0
        %1955 = vmatpush1.msra.mxu0 0.0
        %1956 = vmatprep.subr.mxu0 0.0
        %1957 = vmatpush1.msra.mxu0 0.0
        %1958 = vmatprep.subr.mxu0 0.0
        %1959 = vmatpush1.msra.mxu0 0.0
        %1960 = vmatprep.subr.mxu0 0.0
        %1961 = vmatpush1.msra.mxu0 0.0
        %1962 = vmatprep.subr.mxu0 0.0
        %1963 = vmatpush1.msra.mxu0 0.0
        %1964 = vmatprep.subr.mxu0 0.0
        %1965 = vmatpush1.msra.mxu0 0.0
        %1966 = vmatprep.subr.mxu0 0.0
        %1967 = vmatpush1.msra.mxu0 0.0
        %1968 = vmatprep.subr.mxu0 0.0
        %1969 = vmatpush1.msra.mxu0 0.0
        %1970 = vmatprep.subr.mxu0 0.0
        %1971 = vmatpush1.msra.mxu0 0.0
        %1972 = vmatprep.subr.mxu0 0.0
        %1973 = vmatpush1.msra.mxu0 0.0
        %1974 = vmatprep.subr.mxu0 0.0
        %1975 = vmatpush1.msra.mxu0 0.0
        %1976 = vmatprep.mubr.f32.mxu0 0.0
        %1977 = vmatmul.mubr.f32.gmra.mrb[0].mxu0 %v1904
        %v1978 = vpop.f32.mrb[0].mxu0
        %v1979 = vadd.f32 %v1891, %v1978
        %v1980 = vpop.f32.mrb[0].mxu0
        %v1981 = vadd.f32 %v1891, %v1980
        %1982 = vmatprep.mubr.f32.mxu0 0.0
        %1983 = vmatmul.mubr.f32.gmra.mrb[0].mxu0 %v1907
        %v1984 = vpop.f32.mrb[0].mxu0
        %v1985 = vadd.f32 %v1896, %v1984
        %v1986 = vpop.f32.mrb[0].mxu0
        %v1987 = vadd.f32 %v1896, %v1986
        %1988 = vmatprep.mubr.f32.mxu0 0.0
        %1989 = vmatmul.mubr.f32.gmra.mrb[0].mxu0 %v1910
        %v1990 = vpop.f32.mrb[0].mxu0
        %v1991 = vadd.f32 %v1901, %v1990
        %v1992 = vpop.f32.mrb[0].mxu0
        %v1993 = vadd.f32 %v1901, %v1992
        %1994 = vdwg.mxu0
        %v1995 = vand.u32 2147483647, %v1979
        %vm1996 = vcmp.le.f32.partialorder %v1995, 0.7853982
        %vm1997 = vcmp.lt.s32.totalorder %v1979, 0
        %v1998 = vand.u32 %v1979, 2139095040
        %v1999 = vshrl.u32 %v1998, 23
        %v2000 = vsub.s32 %v1999, 127
        %v2001 = vand.u32 2147483647, %v1979
        %v2002 = vand.u32 %v2001, 8388607
        %v2003 = vor.u32 %v2002, 8388608
        %v2004 = vsub.s32 0, %v2003
        %v2005 = vadd.s32 %v2000, 1
        %vm2006 = vcmp.gt.s32.totalorder %v2005, 0
        %v2007 = vsel %vm2006, %v2005, 0
        %v2008 = vshrl.u32 %v2007, 5
        %v2009 = vand.u32 %v2007, 31
        %v2010 = vsub.s32 32, %v2009
        %v2011 = vshrl.u32 683565275, %v2010
        %v2012 = vshll.u32 683565275, %v2009
        %v2013 = vshrl.u32 2475754826, %v2010
        %v2014 = vor.u32 %v2012, %v2013
        %v2015 = vshll.u32 2475754826, %v2009
        %v2016 = vshrl.u32 2131351028, %v2010
        %v2017 = vor.u32 %v2015, %v2016
        %v2018 = vshll.u32 2131351028, %v2009
        %v2019 = vshrl.u32 2102212464, %v2010
        %v2020 = vor.u32 %v2018, %v2019
        %v2021 = vshll.u32 2102212464, %v2009
        %v2022 = vshrl.u32 920167782, %v2010
        %v2023 = vor.u32 %v2021, %v2022
        %v2024 = vshll.u32 920167782, %v2009
        %v2025 = vshrl.u32 1326507024, %v2010
        %v2026 = vor.u32 %v2024, %v2025
        %vm2027 = vcmp.lt.s32.totalorder %v2008, 1
        %vm2028 = vcmp.lt.s32.totalorder %v2008, 2
        %vm2029 = vcmp.lt.s32.totalorder %v2008, 3
        %vm2030 = vcmp.lt.s32.totalorder %v2008, 4
        %v2031 = vsel %vm2027, %v2011, %v2014
        %v2032 = vsel %vm2030, %v2020, 2102212464
        %v2033 = vsel %vm2029, %v2017, %v2032
        %v2034 = vsel %vm2028, %v2031, %v2033
        %v2035 = vsel %vm2027, %v2014, %v2017
        %v2036 = vsel %vm2030, %v2023, 920167782
        %v2037 = vsel %vm2029, %v2020, %v2036
        %v2038 = vsel %vm2028, %v2035, %v2037
        %v2039 = vsel %vm2027, %v2017, %v2020
        %v2040 = vsel %vm2030, %v2026, 1326507024
        %v2041 = vsel %vm2029, %v2023, %v2040
        %v2042 = vsel %vm2028, %v2039, %v2041
        %v2043 = vshll.u32 %v2003, 8
        %v2044 = vmul.u32.u64.compose %v2043, %v2042
        %v2045 = vextract.low.u32 %v2044
        %v2046 = vextract.high.u32 %v2044
        %v2047 = vmul.u32.u64.compose %v2043, %v2038
        %v2048 = vextract.low.u32 %v2047
        %v2049 = vextract.high.u32 %v2047
        %v2050 = vmul.u32 %v2043, %v2034
        %v2051 = vadd.s32 %v2046, %v2048
        %vm2052 = vc.u32 %v2046, %v2048
        %v2053 = vadd.s32 %v2049, 1
        %v2054 = vsel %vm2052, %v2053, %v2049
        %v2055 = vadd.s32 %v2050, %v2054
        %v2056 = vadd.s32 %v2055, 536870912
        %v2057 = vshrl.u32 %v2056, 30
        %v2058 = vshll.u32 %v2057, 30
        %v2059 = vsub.s32 %v2055, %v2058
        %vm2060 = vcmp.lt.s32.totalorder %v2059, 0
        %v2061 = vsub.s32 0, %v2059
        %v2062 = vsel %vm2060, %v2061, %v2059
        %v2063 = vclz %v2062
        %v2064 = vsub.s32 %v2063, 2
        %vm2065 = vcmp.gt.s32.totalorder 0, %v2064
        %v2066 = vsel %vm2065, 0, %v2064
        %v2067 = vsub.s32 32, %v2066
        %v2068 = vshll.u32 %v2059, %v2066
        %v2069 = vshrl.u32 %v2051, %v2067
        %v2070 = vor.u32 %v2068, %v2069
        %v2071 = vsub.s32 4294967266, %v2066
        %v2072 = vadd.s32 %v2071, 127
        %v2073 = vshll.u32 %v2072, 23
        %v2074 = vor.u32 4788187, %v2073
        %v2075 = vand.u32 2147483647, %v2074
        %v2077 = vcvt.s32.f32 %v2070
        %v2078 = vmul.f32 %v2077, %v2075
        %v2079 = vxor.u32 %v2078, 2147483648
        %v2080 = vsel %vm1997, %v2079, %v2078
        %v2081 = vsub.s32 4, %v2057
        %v2082 = vsel %vm1997, %v2081, %v2057
        %v2083 = vsel %vm1996, %v1979, %v2080
        %v2084 = vsel %vm1996, 0, %v2082
        %v2085 = vcosq.f32.pop %v2083
        %v2086 = vsinq.f32.pop %v2083
        %vm2087 = vweird.f32 %v1979
        %v2088 = vadd.s32 %v2084, 3
        %v2089 = vand.u32 %v2088, 3
        %vm2090 = vcmp.lt.s32.totalorder %v2089, 2
        %vm2091 = vcmp.eq.s32.totalorder %v2089, 0
        %v2092 = vxor.u32 %v2086, 2147483648
        %v2093 = vsel %vm2091, %v2085, %v2092
        %vm2094 = vcmp.eq.s32.totalorder %v2089, 2
        %v2095 = vxor.u32 %v2085, 2147483648
        %v2096 = vsel %vm2094, %v2095, %v2086
        %v2097 = vsel %vm2090, %v2093, %v2096
        %v2098 = vsel %vm2087, nan, %v2097
        %v2099 = vand.u32 2147483647, %v1981
        %vm2100 = vcmp.le.f32.partialorder %v2099, 0.7853982
        %vm2101 = vcmp.lt.s32.totalorder %v1981, 0
        %v2102 = vand.u32 %v1981, 2139095040
        %v2103 = vshrl.u32 %v2102, 23
        %v2104 = vsub.s32 %v2103, 127
        %v2105 = vand.u32 2147483647, %v1981
        %v2106 = vand.u32 %v2105, 8388607
        %v2107 = vor.u32 %v2106, 8388608
        %v2108 = vsub.s32 0, %v2107
        %v2109 = vadd.s32 %v2104, 1
        %vm2110 = vcmp.gt.s32.totalorder %v2109, 0
        %v2111 = vsel %vm2110, %v2109, 0
        %v2112 = vshrl.u32 %v2111, 5
        %v2113 = vand.u32 %v2111, 31
        %v2114 = vsub.s32 32, %v2113
        %v2115 = vshrl.u32 683565275, %v2114
        %v2116 = vshll.u32 683565275, %v2113
        %v2117 = vshrl.u32 2475754826, %v2114
        %v2118 = vor.u32 %v2116, %v2117
        %v2119 = vshll.u32 2475754826, %v2113
        %v2120 = vshrl.u32 2131351028, %v2114
        %v2121 = vor.u32 %v2119, %v2120
        %v2122 = vshll.u32 2131351028, %v2113
        %v2123 = vshrl.u32 2102212464, %v2114
        %v2124 = vor.u32 %v2122, %v2123
        %v2125 = vshll.u32 2102212464, %v2113
        %v2126 = vshrl.u32 920167782, %v2114
        %v2127 = vor.u32 %v2125, %v2126
        %v2128 = vshll.u32 920167782, %v2113
        %v2129 = vshrl.u32 1326507024, %v2114
        %v2130 = vor.u32 %v2128, %v2129
        %vm2131 = vcmp.lt.s32.totalorder %v2112, 1
        %vm2132 = vcmp.lt.s32.totalorder %v2112, 2
        %vm2133 = vcmp.lt.s32.totalorder %v2112, 3
        %vm2134 = vcmp.lt.s32.totalorder %v2112, 4
        %v2135 = vsel %vm2131, %v2115, %v2118
        %v2136 = vsel %vm2134, %v2124, 2102212464
        %v2137 = vsel %vm2133, %v2121, %v2136
        %v2138 = vsel %vm2132, %v2135, %v2137
        %v2139 = vsel %vm2131, %v2118, %v2121
        %v2140 = vsel %vm2134, %v2127, 920167782
        %v2141 = vsel %vm2133, %v2124, %v2140
        %v2142 = vsel %vm2132, %v2139, %v2141
        %v2143 = vsel %vm2131, %v2121, %v2124
        %v2144 = vsel %vm2134, %v2130, 1326507024
        %v2145 = vsel %vm2133, %v2127, %v2144
        %v2146 = vsel %vm2132, %v2143, %v2145
        %v2147 = vshll.u32 %v2107, 8
        %v2148 = vmul.u32.u64.compose %v2147, %v2146
        %v2149 = vextract.low.u32 %v2148
        %v2150 = vextract.high.u32 %v2148
        %v2151 = vmul.u32.u64.compose %v2147, %v2142
        %v2152 = vextract.low.u32 %v2151
        %v2153 = vextract.high.u32 %v2151
        %v2154 = vmul.u32 %v2147, %v2138
        %v2155 = vadd.s32 %v2150, %v2152
        %vm2156 = vc.u32 %v2150, %v2152
        %v2157 = vadd.s32 %v2153, 1
        %v2158 = vsel %vm2156, %v2157, %v2153
        %v2159 = vadd.s32 %v2154, %v2158
        %v2160 = vadd.s32 %v2159, 536870912
        %v2161 = vshrl.u32 %v2160, 30
        %v2162 = vshll.u32 %v2161, 30
        %v2163 = vsub.s32 %v2159, %v2162
        %vm2164 = vcmp.lt.s32.totalorder %v2163, 0
        %v2165 = vsub.s32 0, %v2163
        %v2166 = vsel %vm2164, %v2165, %v2163
        %v2167 = vclz %v2166
        %v2168 = vsub.s32 %v2167, 2
        %vm2169 = vcmp.gt.s32.totalorder 0, %v2168
        %v2170 = vsel %vm2169, 0, %v2168
        %v2171 = vsub.s32 32, %v2170
        %v2172 = vshll.u32 %v2163, %v2170
        %v2173 = vshrl.u32 %v2155, %v2171
        %v2174 = vor.u32 %v2172, %v2173
        %v2175 = vsub.s32 4294967266, %v2170
        %v2176 = vadd.s32 %v2175, 127
        %v2177 = vshll.u32 %v2176, 23
        %v2178 = vor.u32 4788187, %v2177
        %v2179 = vand.u32 2147483647, %v2178
        %v2181 = vcvt.s32.f32 %v2174
        %v2182 = vmul.f32 %v2181, %v2179
        %v2183 = vxor.u32 %v2182, 2147483648
        %v2184 = vsel %vm2101, %v2183, %v2182
        %v2185 = vsub.s32 4, %v2161
        %v2186 = vsel %vm2101, %v2185, %v2161
        %v2187 = vsel %vm2100, %v1981, %v2184
        %v2188 = vsel %vm2100, 0, %v2186
        %v2189 = vcosq.f32.pop %v2187
        %v2190 = vsinq.f32.pop %v2187
        %vm2191 = vweird.f32 %v1981
        %v2192 = vadd.s32 %v2188, 3
        %v2193 = vand.u32 %v2192, 3
        %vm2194 = vcmp.lt.s32.totalorder %v2193, 2
        %vm2195 = vcmp.eq.s32.totalorder %v2193, 0
        %v2196 = vxor.u32 %v2190, 2147483648
        %v2197 = vsel %vm2195, %v2189, %v2196
        %vm2198 = vcmp.eq.s32.totalorder %v2193, 2
        %v2199 = vxor.u32 %v2189, 2147483648
        %v2200 = vsel %vm2198, %v2199, %v2190
        %v2201 = vsel %vm2194, %v2197, %v2200
        %v2202 = vsel %vm2191, nan, %v2201
        %v2203 = vand.u32 2147483647, %v1985
        %vm2204 = vcmp.le.f32.partialorder %v2203, 0.7853982
        %vm2205 = vcmp.lt.s32.totalorder %v1985, 0
        %v2206 = vand.u32 %v1985, 2139095040
        %v2207 = vshrl.u32 %v2206, 23
        %v2208 = vsub.s32 %v2207, 127
        %v2209 = vand.u32 2147483647, %v1985
        %v2210 = vand.u32 %v2209, 8388607
        %v2211 = vor.u32 %v2210, 8388608
        %v2212 = vsub.s32 0, %v2211
        %v2213 = vadd.s32 %v2208, 1
        %vm2214 = vcmp.gt.s32.totalorder %v2213, 0
        %v2215 = vsel %vm2214, %v2213, 0
        %v2216 = vshrl.u32 %v2215, 5
        %v2217 = vand.u32 %v2215, 31
        %v2218 = vsub.s32 32, %v2217
        %v2219 = vshrl.u32 683565275, %v2218
        %v2220 = vshll.u32 683565275, %v2217
        %v2221 = vshrl.u32 2475754826, %v2218
        %v2222 = vor.u32 %v2220, %v2221
        %v2223 = vshll.u32 2475754826, %v2217
        %v2224 = vshrl.u32 2131351028, %v2218
        %v2225 = vor.u32 %v2223, %v2224
        %v2226 = vshll.u32 2131351028, %v2217
        %v2227 = vshrl.u32 2102212464, %v2218
        %v2228 = vor.u32 %v2226, %v2227
        %v2229 = vshll.u32 2102212464, %v2217
        %v2230 = vshrl.u32 920167782, %v2218
        %v2231 = vor.u32 %v2229, %v2230
        %v2232 = vshll.u32 920167782, %v2217
        %v2233 = vshrl.u32 1326507024, %v2218
        %v2234 = vor.u32 %v2232, %v2233
        %vm2235 = vcmp.lt.s32.totalorder %v2216, 1
        %vm2236 = vcmp.lt.s32.totalorder %v2216, 2
        %vm2237 = vcmp.lt.s32.totalorder %v2216, 3
        %vm2238 = vcmp.lt.s32.totalorder %v2216, 4
        %v2239 = vsel %vm2235, %v2219, %v2222
        %v2240 = vsel %vm2238, %v2228, 2102212464
        %v2241 = vsel %vm2237, %v2225, %v2240
        %v2242 = vsel %vm2236, %v2239, %v2241
        %v2243 = vsel %vm2235, %v2222, %v2225
        %v2244 = vsel %vm2238, %v2231, 920167782
        %v2245 = vsel %vm2237, %v2228, %v2244
        %v2246 = vsel %vm2236, %v2243, %v2245
        %v2247 = vsel %vm2235, %v2225, %v2228
        %v2248 = vsel %vm2238, %v2234, 1326507024
        %v2249 = vsel %vm2237, %v2231, %v2248
        %v2250 = vsel %vm2236, %v2247, %v2249
        %v2251 = vshll.u32 %v2211, 8
        %v2252 = vmul.u32.u64.compose %v2251, %v2250
        %v2253 = vextract.low.u32 %v2252
        %v2254 = vextract.high.u32 %v2252
        %v2255 = vmul.u32.u64.compose %v2251, %v2246
        %v2256 = vextract.low.u32 %v2255
        %v2257 = vextract.high.u32 %v2255
        %v2258 = vmul.u32 %v2251, %v2242
        %v2259 = vadd.s32 %v2254, %v2256
        %vm2260 = vc.u32 %v2254, %v2256
        %v2261 = vadd.s32 %v2257, 1
        %v2262 = vsel %vm2260, %v2261, %v2257
        %v2263 = vadd.s32 %v2258, %v2262
        %v2264 = vadd.s32 %v2263, 536870912
        %v2265 = vshrl.u32 %v2264, 30
        %v2266 = vshll.u32 %v2265, 30
        %v2267 = vsub.s32 %v2263, %v2266
        %vm2268 = vcmp.lt.s32.totalorder %v2267, 0
        %v2269 = vsub.s32 0, %v2267
        %v2270 = vsel %vm2268, %v2269, %v2267
        %v2271 = vclz %v2270
        %v2272 = vsub.s32 %v2271, 2
        %vm2273 = vcmp.gt.s32.totalorder 0, %v2272
        %v2274 = vsel %vm2273, 0, %v2272
        %v2275 = vsub.s32 32, %v2274
        %v2276 = vshll.u32 %v2267, %v2274
        %v2277 = vshrl.u32 %v2259, %v2275
        %v2278 = vor.u32 %v2276, %v2277
        %v2279 = vsub.s32 4294967266, %v2274
        %v2280 = vadd.s32 %v2279, 127
        %v2281 = vshll.u32 %v2280, 23
        %v2282 = vor.u32 4788187, %v2281
        %v2283 = vand.u32 2147483647, %v2282
        %v2285 = vcvt.s32.f32 %v2278
        %v2286 = vmul.f32 %v2285, %v2283
        %v2287 = vxor.u32 %v2286, 2147483648
        %v2288 = vsel %vm2205, %v2287, %v2286
        %v2289 = vsub.s32 4, %v2265
        %v2290 = vsel %vm2205, %v2289, %v2265
        %v2291 = vsel %vm2204, %v1985, %v2288
        %v2292 = vsel %vm2204, 0, %v2290
        %v2293 = vcosq.f32.pop %v2291
        %v2294 = vsinq.f32.pop %v2291
        %vm2295 = vweird.f32 %v1985
        %v2296 = vadd.s32 %v2292, 3
        %v2297 = vand.u32 %v2296, 3
        %vm2298 = vcmp.lt.s32.totalorder %v2297, 2
        %vm2299 = vcmp.eq.s32.totalorder %v2297, 0
        %v2300 = vxor.u32 %v2294, 2147483648
        %v2301 = vsel %vm2299, %v2293, %v2300
        %vm2302 = vcmp.eq.s32.totalorder %v2297, 2
        %v2303 = vxor.u32 %v2293, 2147483648
        %v2304 = vsel %vm2302, %v2303, %v2294
        %v2305 = vsel %vm2298, %v2301, %v2304
        %v2306 = vsel %vm2295, nan, %v2305
        %v2307 = vand.u32 2147483647, %v1987
        %vm2308 = vcmp.le.f32.partialorder %v2307, 0.7853982
        %vm2309 = vcmp.lt.s32.totalorder %v1987, 0
        %v2310 = vand.u32 %v1987, 2139095040
        %v2311 = vshrl.u32 %v2310, 23
        %v2312 = vsub.s32 %v2311, 127
        %v2313 = vand.u32 2147483647, %v1987
        %v2314 = vand.u32 %v2313, 8388607
        %v2315 = vor.u32 %v2314, 8388608
        %v2316 = vsub.s32 0, %v2315
        %v2317 = vadd.s32 %v2312, 1
        %vm2318 = vcmp.gt.s32.totalorder %v2317, 0
        %v2319 = vsel %vm2318, %v2317, 0
        %v2320 = vshrl.u32 %v2319, 5
        %v2321 = vand.u32 %v2319, 31
        %v2322 = vsub.s32 32, %v2321
        %v2323 = vshrl.u32 683565275, %v2322
        %v2324 = vshll.u32 683565275, %v2321
        %v2325 = vshrl.u32 2475754826, %v2322
        %v2326 = vor.u32 %v2324, %v2325
        %v2327 = vshll.u32 2475754826, %v2321
        %v2328 = vshrl.u32 2131351028, %v2322
        %v2329 = vor.u32 %v2327, %v2328
        %v2330 = vshll.u32 2131351028, %v2321
        %v2331 = vshrl.u32 2102212464, %v2322
        %v2332 = vor.u32 %v2330, %v2331
        %v2333 = vshll.u32 2102212464, %v2321
        %v2334 = vshrl.u32 920167782, %v2322
        %v2335 = vor.u32 %v2333, %v2334
        %v2336 = vshll.u32 920167782, %v2321
        %v2337 = vshrl.u32 1326507024, %v2322
        %v2338 = vor.u32 %v2336, %v2337
        %vm2339 = vcmp.lt.s32.totalorder %v2320, 1
        %vm2340 = vcmp.lt.s32.totalorder %v2320, 2
        %vm2341 = vcmp.lt.s32.totalorder %v2320, 3
        %vm2342 = vcmp.lt.s32.totalorder %v2320, 4
        %v2343 = vsel %vm2339, %v2323, %v2326
        %v2344 = vsel %vm2342, %v2332, 2102212464
        %v2345 = vsel %vm2341, %v2329, %v2344
        %v2346 = vsel %vm2340, %v2343, %v2345
        %v2347 = vsel %vm2339, %v2326, %v2329
        %v2348 = vsel %vm2342, %v2335, 920167782
        %v2349 = vsel %vm2341, %v2332, %v2348
        %v2350 = vsel %vm2340, %v2347, %v2349
        %v2351 = vsel %vm2339, %v2329, %v2332
        %v2352 = vsel %vm2342, %v2338, 1326507024
        %v2353 = vsel %vm2341, %v2335, %v2352
        %v2354 = vsel %vm2340, %v2351, %v2353
        %v2355 = vshll.u32 %v2315, 8
        %v2356 = vmul.u32.u64.compose %v2355, %v2354
        %v2357 = vextract.low.u32 %v2356
        %v2358 = vextract.high.u32 %v2356
        %v2359 = vmul.u32.u64.compose %v2355, %v2350
        %v2360 = vextract.low.u32 %v2359
        %v2361 = vextract.high.u32 %v2359
        %v2362 = vmul.u32 %v2355, %v2346
        %v2363 = vadd.s32 %v2358, %v2360
        %vm2364 = vc.u32 %v2358, %v2360
        %v2365 = vadd.s32 %v2361, 1
        %v2366 = vsel %vm2364, %v2365, %v2361
        %v2367 = vadd.s32 %v2362, %v2366
        %v2368 = vadd.s32 %v2367, 536870912
        %v2369 = vshrl.u32 %v2368, 30
        %v2370 = vshll.u32 %v2369, 30
        %v2371 = vsub.s32 %v2367, %v2370
        %vm2372 = vcmp.lt.s32.totalorder %v2371, 0
        %v2373 = vsub.s32 0, %v2371
        %v2374 = vsel %vm2372, %v2373, %v2371
        %v2375 = vclz %v2374
        %v2376 = vsub.s32 %v2375, 2
        %vm2377 = vcmp.gt.s32.totalorder 0, %v2376
        %v2378 = vsel %vm2377, 0, %v2376
        %v2379 = vsub.s32 32, %v2378
        %v2380 = vshll.u32 %v2371, %v2378
        %v2381 = vshrl.u32 %v2363, %v2379
        %v2382 = vor.u32 %v2380, %v2381
        %v2383 = vsub.s32 4294967266, %v2378
        %v2384 = vadd.s32 %v2383, 127
        %v2385 = vshll.u32 %v2384, 23
        %v2386 = vor.u32 4788187, %v2385
        %v2387 = vand.u32 2147483647, %v2386
        %v2389 = vcvt.s32.f32 %v2382
        %v2390 = vmul.f32 %v2389, %v2387
        %v2391 = vxor.u32 %v2390, 2147483648
        %v2392 = vsel %vm2309, %v2391, %v2390
        %v2393 = vsub.s32 4, %v2369
        %v2394 = vsel %vm2309, %v2393, %v2369
        %v2395 = vsel %vm2308, %v1987, %v2392
        %v2396 = vsel %vm2308, 0, %v2394
        %v2397 = vcosq.f32.pop %v2395
        %v2398 = vsinq.f32.pop %v2395
        %vm2399 = vweird.f32 %v1987
        %v2400 = vadd.s32 %v2396, 3
        %v2401 = vand.u32 %v2400, 3
        %vm2402 = vcmp.lt.s32.totalorder %v2401, 2
        %vm2403 = vcmp.eq.s32.totalorder %v2401, 0
        %v2404 = vxor.u32 %v2398, 2147483648
        %v2405 = vsel %vm2403, %v2397, %v2404
        %vm2406 = vcmp.eq.s32.totalorder %v2401, 2
        %v2407 = vxor.u32 %v2397, 2147483648
        %v2408 = vsel %vm2406, %v2407, %v2398
        %v2409 = vsel %vm2402, %v2405, %v2408
        %v2410 = vsel %vm2399, nan, %v2409
        %v2411 = vand.u32 2147483647, %v1991
        %vm2412 = vcmp.le.f32.partialorder %v2411, 0.7853982
        %vm2413 = vcmp.lt.s32.totalorder %v1991, 0
        %v2414 = vand.u32 %v1991, 2139095040
        %v2415 = vshrl.u32 %v2414, 23
        %v2416 = vsub.s32 %v2415, 127
        %v2417 = vand.u32 2147483647, %v1991
        %v2418 = vand.u32 %v2417, 8388607
        %v2419 = vor.u32 %v2418, 8388608
        %v2420 = vsub.s32 0, %v2419
        %v2421 = vadd.s32 %v2416, 1
        %vm2422 = vcmp.gt.s32.totalorder %v2421, 0
        %v2423 = vsel %vm2422, %v2421, 0
        %v2424 = vshrl.u32 %v2423, 5
        %v2425 = vand.u32 %v2423, 31
        %v2426 = vsub.s32 32, %v2425
        %v2427 = vshrl.u32 683565275, %v2426
        %v2428 = vshll.u32 683565275, %v2425
        %v2429 = vshrl.u32 2475754826, %v2426
        %v2430 = vor.u32 %v2428, %v2429
        %v2431 = vshll.u32 2475754826, %v2425
        %v2432 = vshrl.u32 2131351028, %v2426
        %v2433 = vor.u32 %v2431, %v2432
        %v2434 = vshll.u32 2131351028, %v2425
        %v2435 = vshrl.u32 2102212464, %v2426
        %v2436 = vor.u32 %v2434, %v2435
        %v2437 = vshll.u32 2102212464, %v2425
        %v2438 = vshrl.u32 920167782, %v2426
        %v2439 = vor.u32 %v2437, %v2438
        %v2440 = vshll.u32 920167782, %v2425
        %v2441 = vshrl.u32 1326507024, %v2426
        %v2442 = vor.u32 %v2440, %v2441
        %vm2443 = vcmp.lt.s32.totalorder %v2424, 1
        %vm2444 = vcmp.lt.s32.totalorder %v2424, 2
        %vm2445 = vcmp.lt.s32.totalorder %v2424, 3
        %vm2446 = vcmp.lt.s32.totalorder %v2424, 4
        %v2447 = vsel %vm2443, %v2427, %v2430
        %v2448 = vsel %vm2446, %v2436, 2102212464
        %v2449 = vsel %vm2445, %v2433, %v2448
        %v2450 = vsel %vm2444, %v2447, %v2449
        %v2451 = vsel %vm2443, %v2430, %v2433
        %v2452 = vsel %vm2446, %v2439, 920167782
        %v2453 = vsel %vm2445, %v2436, %v2452
        %v2454 = vsel %vm2444, %v2451, %v2453
        %v2455 = vsel %vm2443, %v2433, %v2436
        %v2456 = vsel %vm2446, %v2442, 1326507024
        %v2457 = vsel %vm2445, %v2439, %v2456
        %v2458 = vsel %vm2444, %v2455, %v2457
        %v2459 = vshll.u32 %v2419, 8
        %v2460 = vmul.u32.u64.compose %v2459, %v2458
        %v2461 = vextract.low.u32 %v2460
        %v2462 = vextract.high.u32 %v2460
        %v2463 = vmul.u32.u64.compose %v2459, %v2454
        %v2464 = vextract.low.u32 %v2463
        %v2465 = vextract.high.u32 %v2463
        %v2466 = vmul.u32 %v2459, %v2450
        %v2467 = vadd.s32 %v2462, %v2464
        %vm2468 = vc.u32 %v2462, %v2464
        %v2469 = vadd.s32 %v2465, 1
        %v2470 = vsel %vm2468, %v2469, %v2465
        %v2471 = vadd.s32 %v2466, %v2470
        %v2472 = vadd.s32 %v2471, 536870912
        %v2473 = vshrl.u32 %v2472, 30
        %v2474 = vshll.u32 %v2473, 30
        %v2475 = vsub.s32 %v2471, %v2474
        %vm2476 = vcmp.lt.s32.totalorder %v2475, 0
        %v2477 = vsub.s32 0, %v2475
        %v2478 = vsel %vm2476, %v2477, %v2475
        %v2479 = vclz %v2478
        %v2480 = vsub.s32 %v2479, 2
        %vm2481 = vcmp.gt.s32.totalorder 0, %v2480
        %v2482 = vsel %vm2481, 0, %v2480
        %v2483 = vsub.s32 32, %v2482
        %v2484 = vshll.u32 %v2475, %v2482
        %v2485 = vshrl.u32 %v2467, %v2483
        %v2486 = vor.u32 %v2484, %v2485
        %v2487 = vsub.s32 4294967266, %v2482
        %v2488 = vadd.s32 %v2487, 127
        %v2489 = vshll.u32 %v2488, 23
        %v2490 = vor.u32 4788187, %v2489
        %v2491 = vand.u32 2147483647, %v2490
        %v2493 = vcvt.s32.f32 %v2486
        %v2494 = vmul.f32 %v2493, %v2491
        %v2495 = vxor.u32 %v2494, 2147483648
        %v2496 = vsel %vm2413, %v2495, %v2494
        %v2497 = vsub.s32 4, %v2473
        %v2498 = vsel %vm2413, %v2497, %v2473
        %v2499 = vsel %vm2412, %v1991, %v2496
        %v2500 = vsel %vm2412, 0, %v2498
        %v2501 = vcosq.f32.pop %v2499
        %v2502 = vsinq.f32.pop %v2499
        %vm2503 = vweird.f32 %v1991
        %v2504 = vadd.s32 %v2500, 3
        %v2505 = vand.u32 %v2504, 3
        %vm2506 = vcmp.lt.s32.totalorder %v2505, 2
        %vm2507 = vcmp.eq.s32.totalorder %v2505, 0
        %v2508 = vxor.u32 %v2502, 2147483648
        %v2509 = vsel %vm2507, %v2501, %v2508
        %vm2510 = vcmp.eq.s32.totalorder %v2505, 2
        %v2511 = vxor.u32 %v2501, 2147483648
        %v2512 = vsel %vm2510, %v2511, %v2502
        %v2513 = vsel %vm2506, %v2509, %v2512
        %v2514 = vsel %vm2503, nan, %v2513
        %v2515 = vand.u32 2147483647, %v1993
        %vm2516 = vcmp.le.f32.partialorder %v2515, 0.7853982
        %vm2517 = vcmp.lt.s32.totalorder %v1993, 0
        %v2518 = vand.u32 %v1993, 2139095040
        %v2519 = vshrl.u32 %v2518, 23
        %v2520 = vsub.s32 %v2519, 127
        %v2521 = vand.u32 2147483647, %v1993
        %v2522 = vand.u32 %v2521, 8388607
        %v2523 = vor.u32 %v2522, 8388608
        %v2524 = vsub.s32 0, %v2523
        %v2525 = vadd.s32 %v2520, 1
        %vm2526 = vcmp.gt.s32.totalorder %v2525, 0
        %v2527 = vsel %vm2526, %v2525, 0
        %v2528 = vshrl.u32 %v2527, 5
        %v2529 = vand.u32 %v2527, 31
        %v2530 = vsub.s32 32, %v2529
        %v2531 = vshrl.u32 683565275, %v2530
        %v2532 = vshll.u32 683565275, %v2529
        %v2533 = vshrl.u32 2475754826, %v2530
        %v2534 = vor.u32 %v2532, %v2533
        %v2535 = vshll.u32 2475754826, %v2529
        %v2536 = vshrl.u32 2131351028, %v2530
        %v2537 = vor.u32 %v2535, %v2536
        %v2538 = vshll.u32 2131351028, %v2529
        %v2539 = vshrl.u32 2102212464, %v2530
        %v2540 = vor.u32 %v2538, %v2539
        %v2541 = vshll.u32 2102212464, %v2529
        %v2542 = vshrl.u32 920167782, %v2530
        %v2543 = vor.u32 %v2541, %v2542
        %v2544 = vshll.u32 920167782, %v2529
        %v2545 = vshrl.u32 1326507024, %v2530
        %v2546 = vor.u32 %v2544, %v2545
        %vm2547 = vcmp.lt.s32.totalorder %v2528, 1
        %vm2548 = vcmp.lt.s32.totalorder %v2528, 2
        %vm2549 = vcmp.lt.s32.totalorder %v2528, 3
        %vm2550 = vcmp.lt.s32.totalorder %v2528, 4
        %v2551 = vsel %vm2547, %v2531, %v2534
        %v2552 = vsel %vm2550, %v2540, 2102212464
        %v2553 = vsel %vm2549, %v2537, %v2552
        %v2554 = vsel %vm2548, %v2551, %v2553
        %v2555 = vsel %vm2547, %v2534, %v2537
        %v2556 = vsel %vm2550, %v2543, 920167782
        %v2557 = vsel %vm2549, %v2540, %v2556
        %v2558 = vsel %vm2548, %v2555, %v2557
        %v2559 = vsel %vm2547, %v2537, %v2540
        %v2560 = vsel %vm2550, %v2546, 1326507024
        %v2561 = vsel %vm2549, %v2543, %v2560
        %v2562 = vsel %vm2548, %v2559, %v2561
        %v2563 = vshll.u32 %v2523, 8
        %v2564 = vmul.u32.u64.compose %v2563, %v2562
        %v2565 = vextract.low.u32 %v2564
        %v2566 = vextract.high.u32 %v2564
        %v2567 = vmul.u32.u64.compose %v2563, %v2558
        %v2568 = vextract.low.u32 %v2567
        %v2569 = vextract.high.u32 %v2567
        %v2570 = vmul.u32 %v2563, %v2554
        %v2571 = vadd.s32 %v2566, %v2568
        %vm2572 = vc.u32 %v2566, %v2568
        %v2573 = vadd.s32 %v2569, 1
        %v2574 = vsel %vm2572, %v2573, %v2569
        %v2575 = vadd.s32 %v2570, %v2574
        %v2576 = vadd.s32 %v2575, 536870912
        %v2577 = vshrl.u32 %v2576, 30
        %v2578 = vshll.u32 %v2577, 30
        %v2579 = vsub.s32 %v2575, %v2578
        %vm2580 = vcmp.lt.s32.totalorder %v2579, 0
        %v2581 = vsub.s32 0, %v2579
        %v2582 = vsel %vm2580, %v2581, %v2579
        %v2583 = vclz %v2582
        %v2584 = vsub.s32 %v2583, 2
        %vm2585 = vcmp.gt.s32.totalorder 0, %v2584
        %v2586 = vsel %vm2585, 0, %v2584
        %v2587 = vsub.s32 32, %v2586
        %v2588 = vshll.u32 %v2579, %v2586
        %v2589 = vshrl.u32 %v2571, %v2587
        %v2590 = vor.u32 %v2588, %v2589
        %v2591 = vsub.s32 4294967266, %v2586
        %v2592 = vadd.s32 %v2591, 127
        %v2593 = vshll.u32 %v2592, 23
        %v2594 = vor.u32 4788187, %v2593
        %v2595 = vand.u32 2147483647, %v2594
        %v2597 = vcvt.s32.f32 %v2590
        %v2598 = vmul.f32 %v2597, %v2595
        %v2599 = vxor.u32 %v2598, 2147483648
        %v2600 = vsel %vm2517, %v2599, %v2598
        %v2601 = vsub.s32 4, %v2577
        %v2602 = vsel %vm2517, %v2601, %v2577
        %v2603 = vsel %vm2516, %v1993, %v2600
        %v2604 = vsel %vm2516, 0, %v2602
        %v2605 = vcosq.f32.pop %v2603
        %v2606 = vsinq.f32.pop %v2603
        %vm2607 = vweird.f32 %v1993
        %v2608 = vadd.s32 %v2604, 3
        %v2609 = vand.u32 %v2608, 3
        %vm2610 = vcmp.lt.s32.totalorder %v2609, 2
        %vm2611 = vcmp.eq.s32.totalorder %v2609, 0
        %v2612 = vxor.u32 %v2606, 2147483648
        %v2613 = vsel %vm2611, %v2605, %v2612
        %vm2614 = vcmp.eq.s32.totalorder %v2609, 2
        %v2615 = vxor.u32 %v2605, 2147483648
        %v2616 = vsel %vm2614, %v2615, %v2606
        %v2617 = vsel %vm2610, %v2613, %v2616
        %v2618 = vsel %vm2607, nan, %v2617
        %v2619 = vmul.f32 %v2098, %v1124
        %v2620 = vmul.f32 %v2202, %v1125
        %v2621 = vmul.f32 %v2306, %v1126
        %v2622 = vmul.f32 %v2410, %v1127
        %v2623 = vmul.f32 %v2514, %v1128
        %v2624 = vmul.f32 %v2618, %v1129
        %v2625 = vadd.f32 %v448, %v2619
        %v2626 = vadd.f32 %v450, %v2620
        %v2627 = vadd.f32 %v454, %v2621
        %v2628 = vadd.f32 %v456, %v2622
        %v2629 = vadd.f32 %v460, %v2623
        %v2630 = vadd.f32 %v462, %v2624
        %s2631 = scalar_lea.vmem %s3, 48
        %v2632 = vld [vmem:[%s2631] sm:$0xff]
        %v2633 = vld [vmem:[%s2631 + $0x8] sm:$0xff]
        %v2634 = vld [vmem:[%s2631 + $0x10] sm:$0xff]
        %s2635 = scalar_lea.vmem %s4, 48
        %v2636 = vld [vmem:[%s2635] sm:$0xff]
        %v2637 = vld [vmem:[%s2635 + $0x8] sm:$0xff]
        %v2638 = vld [vmem:[%s2635 + $0x10] sm:$0xff]
        %2640 = vset.pattern.permute.xlu0 0
        %2641 = vperm.xlu0 %2640, %v2636
        %v2642 = vpop.permute.xlu0 %2641
        %2645 = vset.pattern.permute.xlu0 0
        %2646 = vperm.xlu0 %2645, %v2637
        %v2647 = vpop.permute.xlu0 %2646
        %2650 = vset.pattern.permute.xlu0 0
        %2651 = vperm.xlu0 %2650, %v2638
        %v2652 = vpop.permute.xlu0 %2651
        %v2655 = vsel %vm1151, %v2632, 0
        %v2658 = vsel %vm1151, %v2633, 0
        %v2661 = vsel %vm1151, %v2634, 0
        %2663 = vmatprep.subr.mxu0 %v2626
        %2664 = vmatpush1.msra.mxu0 %v2625
        %2665 = vmatprep.subr.mxu0 %v2628
        %2666 = vmatpush1.msra.mxu0 %v2627
        %2667 = vmatprep.subr.mxu0 %v2630
        %2668 = vmatpush1.msra.mxu0 %v2629
        %2669 = vmatprep.subr.mxu0 0.0
        %2670 = vmatpush1.msra.mxu0 0.0
        %2671 = vmatprep.subr.mxu0 0.0
        %2672 = vmatpush1.msra.mxu0 0.0
        %2673 = vmatprep.subr.mxu0 0.0
        %2674 = vmatpush1.msra.mxu0 0.0
        %2675 = vmatprep.subr.mxu0 0.0
        %2676 = vmatpush1.msra.mxu0 0.0
        %2677 = vmatprep.subr.mxu0 0.0
        %2678 = vmatpush1.msra.mxu0 0.0
        %2679 = vmatprep.subr.mxu0 0.0
        %2680 = vmatpush1.msra.mxu0 0.0
        %2681 = vmatprep.subr.mxu0 0.0
        %2682 = vmatpush1.msra.mxu0 0.0
        %2683 = vmatprep.subr.mxu0 0.0
        %2684 = vmatpush1.msra.mxu0 0.0
        %2685 = vmatprep.subr.mxu0 0.0
        %2686 = vmatpush1.msra.mxu0 0.0
        %2687 = vmatprep.subr.mxu0 0.0
        %2688 = vmatpush1.msra.mxu0 0.0
        %2689 = vmatprep.subr.mxu0 0.0
        %2690 = vmatpush1.msra.mxu0 0.0
        %2691 = vmatprep.subr.mxu0 0.0
        %2692 = vmatpush1.msra.mxu0 0.0
        %2693 = vmatprep.subr.mxu0 0.0
        %2694 = vmatpush1.msra.mxu0 0.0
        %2695 = vmatprep.subr.mxu0 0.0
        %2696 = vmatpush1.msra.mxu0 0.0
        %2697 = vmatprep.subr.mxu0 0.0
        %2698 = vmatpush1.msra.mxu0 0.0
        %2699 = vmatprep.subr.mxu0 0.0
        %2700 = vmatpush1.msra.mxu0 0.0
        %2701 = vmatprep.subr.mxu0 0.0
        %2702 = vmatpush1.msra.mxu0 0.0
        %2703 = vmatprep.subr.mxu0 0.0
        %2704 = vmatpush1.msra.mxu0 0.0
        %2705 = vmatprep.subr.mxu0 0.0
        %2706 = vmatpush1.msra.mxu0 0.0
        %2707 = vmatprep.subr.mxu0 0.0
        %2708 = vmatpush1.msra.mxu0 0.0
        %2709 = vmatprep.subr.mxu0 0.0
        %2710 = vmatpush1.msra.mxu0 0.0
        %2711 = vmatprep.subr.mxu0 0.0
        %2712 = vmatpush1.msra.mxu0 0.0
        %2713 = vmatprep.subr.mxu0 0.0
        %2714 = vmatpush1.msra.mxu0 0.0
        %2715 = vmatprep.subr.mxu0 0.0
        %2716 = vmatpush1.msra.mxu0 0.0
        %2717 = vmatprep.subr.mxu0 0.0
        %2718 = vmatpush1.msra.mxu0 0.0
        %2719 = vmatprep.subr.mxu0 0.0
        %2720 = vmatpush1.msra.mxu0 0.0
        %2721 = vmatprep.subr.mxu0 0.0
        %2722 = vmatpush1.msra.mxu0 0.0
        %2723 = vmatprep.subr.mxu0 0.0
        %2724 = vmatpush1.msra.mxu0 0.0
        %2725 = vmatprep.subr.mxu0 0.0
        %2726 = vmatpush1.msra.mxu0 0.0
        %2727 = vmatprep.mubr.f32.mxu0 0.0
        %2728 = vmatmul.mubr.f32.gmra.mrb[0].mxu0 %v2655
        %v2729 = vpop.f32.mrb[0].mxu0
        %v2730 = vadd.f32 %v2642, %v2729
        %v2731 = vpop.f32.mrb[0].mxu0
        %v2732 = vadd.f32 %v2642, %v2731
        %2733 = vmatprep.mubr.f32.mxu0 0.0
        %2734 = vmatmul.mubr.f32.gmra.mrb[0].mxu0 %v2658
        %v2735 = vpop.f32.mrb[0].mxu0
        %v2736 = vadd.f32 %v2647, %v2735
        %v2737 = vpop.f32.mrb[0].mxu0
        %v2738 = vadd.f32 %v2647, %v2737
        %2739 = vmatprep.mubr.f32.mxu0 0.0
        %2740 = vmatmul.mubr.f32.gmra.mrb[0].mxu0 %v2661
        %v2741 = vpop.f32.mrb[0].mxu0
        %v2742 = vadd.f32 %v2652, %v2741
        %v2743 = vpop.f32.mrb[0].mxu0
        %v2744 = vadd.f32 %v2652, %v2743
        %2745 = vdwg.mxu0
        %v2746 = vand.u32 2147483647, %v2730
        %vm2747 = vcmp.le.f32.partialorder %v2746, 0.7853982
        %vm2748 = vcmp.lt.s32.totalorder %v2730, 0
        %v2749 = vand.u32 %v2730, 2139095040
        %v2750 = vshrl.u32 %v2749, 23
        %v2751 = vsub.s32 %v2750, 127
        %v2752 = vand.u32 2147483647, %v2730
        %v2753 = vand.u32 %v2752, 8388607
        %v2754 = vor.u32 %v2753, 8388608
        %v2755 = vsub.s32 0, %v2754
        %v2756 = vadd.s32 %v2751, 1
        %vm2757 = vcmp.gt.s32.totalorder %v2756, 0
        %v2758 = vsel %vm2757, %v2756, 0
        %v2759 = vshrl.u32 %v2758, 5
        %v2760 = vand.u32 %v2758, 31
        %v2761 = vsub.s32 32, %v2760
        %v2762 = vshrl.u32 683565275, %v2761
        %v2763 = vshll.u32 683565275, %v2760
        %v2764 = vshrl.u32 2475754826, %v2761
        %v2765 = vor.u32 %v2763, %v2764
        %v2766 = vshll.u32 2475754826, %v2760
        %v2767 = vshrl.u32 2131351028, %v2761
        %v2768 = vor.u32 %v2766, %v2767
        %v2769 = vshll.u32 2131351028, %v2760
        %v2770 = vshrl.u32 2102212464, %v2761
        %v2771 = vor.u32 %v2769, %v2770
        %v2772 = vshll.u32 2102212464, %v2760
        %v2773 = vshrl.u32 920167782, %v2761
        %v2774 = vor.u32 %v2772, %v2773
        %v2775 = vshll.u32 920167782, %v2760
        %v2776 = vshrl.u32 1326507024, %v2761
        %v2777 = vor.u32 %v2775, %v2776
        %vm2778 = vcmp.lt.s32.totalorder %v2759, 1
        %vm2779 = vcmp.lt.s32.totalorder %v2759, 2
        %vm2780 = vcmp.lt.s32.totalorder %v2759, 3
        %vm2781 = vcmp.lt.s32.totalorder %v2759, 4
        %v2782 = vsel %vm2778, %v2762, %v2765
        %v2783 = vsel %vm2781, %v2771, 2102212464
        %v2784 = vsel %vm2780, %v2768, %v2783
        %v2785 = vsel %vm2779, %v2782, %v2784
        %v2786 = vsel %vm2778, %v2765, %v2768
        %v2787 = vsel %vm2781, %v2774, 920167782
        %v2788 = vsel %vm2780, %v2771, %v2787
        %v2789 = vsel %vm2779, %v2786, %v2788
        %v2790 = vsel %vm2778, %v2768, %v2771
        %v2791 = vsel %vm2781, %v2777, 1326507024
        %v2792 = vsel %vm2780, %v2774, %v2791
        %v2793 = vsel %vm2779, %v2790, %v2792
        %v2794 = vshll.u32 %v2754, 8
        %v2795 = vmul.u32.u64.compose %v2794, %v2793
        %v2796 = vextract.low.u32 %v2795
        %v2797 = vextract.high.u32 %v2795
        %v2798 = vmul.u32.u64.compose %v2794, %v2789
        %v2799 = vextract.low.u32 %v2798
        %v2800 = vextract.high.u32 %v2798
        %v2801 = vmul.u32 %v2794, %v2785
        %v2802 = vadd.s32 %v2797, %v2799
        %vm2803 = vc.u32 %v2797, %v2799
        %v2804 = vadd.s32 %v2800, 1
        %v2805 = vsel %vm2803, %v2804, %v2800
        %v2806 = vadd.s32 %v2801, %v2805
        %v2807 = vadd.s32 %v2806, 536870912
        %v2808 = vshrl.u32 %v2807, 30
        %v2809 = vshll.u32 %v2808, 30
        %v2810 = vsub.s32 %v2806, %v2809
        %vm2811 = vcmp.lt.s32.totalorder %v2810, 0
        %v2812 = vsub.s32 0, %v2810
        %v2813 = vsel %vm2811, %v2812, %v2810
        %v2814 = vclz %v2813
        %v2815 = vsub.s32 %v2814, 2
        %vm2816 = vcmp.gt.s32.totalorder 0, %v2815
        %v2817 = vsel %vm2816, 0, %v2815
        %v2818 = vsub.s32 32, %v2817
        %v2819 = vshll.u32 %v2810, %v2817
        %v2820 = vshrl.u32 %v2802, %v2818
        %v2821 = vor.u32 %v2819, %v2820
        %v2822 = vsub.s32 4294967266, %v2817
        %v2823 = vadd.s32 %v2822, 127
        %v2824 = vshll.u32 %v2823, 23
        %v2825 = vor.u32 4788187, %v2824
        %v2826 = vand.u32 2147483647, %v2825
        %v2828 = vcvt.s32.f32 %v2821
        %v2829 = vmul.f32 %v2828, %v2826
        %v2830 = vxor.u32 %v2829, 2147483648
        %v2831 = vsel %vm2748, %v2830, %v2829
        %v2832 = vsub.s32 4, %v2808
        %v2833 = vsel %vm2748, %v2832, %v2808
        %v2834 = vsel %vm2747, %v2730, %v2831
        %v2835 = vsel %vm2747, 0, %v2833
        %v2836 = vcosq.f32.pop %v2834
        %v2837 = vsinq.f32.pop %v2834
        %vm2838 = vweird.f32 %v2730
        %v2839 = vadd.s32 %v2835, 3
        %v2840 = vand.u32 %v2839, 3
        %vm2841 = vcmp.lt.s32.totalorder %v2840, 2
        %vm2842 = vcmp.eq.s32.totalorder %v2840, 0
        %v2843 = vxor.u32 %v2837, 2147483648
        %v2844 = vsel %vm2842, %v2836, %v2843
        %vm2845 = vcmp.eq.s32.totalorder %v2840, 2
        %v2846 = vxor.u32 %v2836, 2147483648
        %v2847 = vsel %vm2845, %v2846, %v2837
        %v2848 = vsel %vm2841, %v2844, %v2847
        %v2849 = vsel %vm2838, nan, %v2848
        %v2850 = vand.u32 2147483647, %v2732
        %vm2851 = vcmp.le.f32.partialorder %v2850, 0.7853982
        %vm2852 = vcmp.lt.s32.totalorder %v2732, 0
        %v2853 = vand.u32 %v2732, 2139095040
        %v2854 = vshrl.u32 %v2853, 23
        %v2855 = vsub.s32 %v2854, 127
        %v2856 = vand.u32 2147483647, %v2732
        %v2857 = vand.u32 %v2856, 8388607
        %v2858 = vor.u32 %v2857, 8388608
        %v2859 = vsub.s32 0, %v2858
        %v2860 = vadd.s32 %v2855, 1
        %vm2861 = vcmp.gt.s32.totalorder %v2860, 0
        %v2862 = vsel %vm2861, %v2860, 0
        %v2863 = vshrl.u32 %v2862, 5
        %v2864 = vand.u32 %v2862, 31
        %v2865 = vsub.s32 32, %v2864
        %v2866 = vshrl.u32 683565275, %v2865
        %v2867 = vshll.u32 683565275, %v2864
        %v2868 = vshrl.u32 2475754826, %v2865
        %v2869 = vor.u32 %v2867, %v2868
        %v2870 = vshll.u32 2475754826, %v2864
        %v2871 = vshrl.u32 2131351028, %v2865
        %v2872 = vor.u32 %v2870, %v2871
        %v2873 = vshll.u32 2131351028, %v2864
        %v2874 = vshrl.u32 2102212464, %v2865
        %v2875 = vor.u32 %v2873, %v2874
        %v2876 = vshll.u32 2102212464, %v2864
        %v2877 = vshrl.u32 920167782, %v2865
        %v2878 = vor.u32 %v2876, %v2877
        %v2879 = vshll.u32 920167782, %v2864
        %v2880 = vshrl.u32 1326507024, %v2865
        %v2881 = vor.u32 %v2879, %v2880
        %vm2882 = vcmp.lt.s32.totalorder %v2863, 1
        %vm2883 = vcmp.lt.s32.totalorder %v2863, 2
        %vm2884 = vcmp.lt.s32.totalorder %v2863, 3
        %vm2885 = vcmp.lt.s32.totalorder %v2863, 4
        %v2886 = vsel %vm2882, %v2866, %v2869
        %v2887 = vsel %vm2885, %v2875, 2102212464
        %v2888 = vsel %vm2884, %v2872, %v2887
        %v2889 = vsel %vm2883, %v2886, %v2888
        %v2890 = vsel %vm2882, %v2869, %v2872
        %v2891 = vsel %vm2885, %v2878, 920167782
        %v2892 = vsel %vm2884, %v2875, %v2891
        %v2893 = vsel %vm2883, %v2890, %v2892
        %v2894 = vsel %vm2882, %v2872, %v2875
        %v2895 = vsel %vm2885, %v2881, 1326507024
        %v2896 = vsel %vm2884, %v2878, %v2895
        %v2897 = vsel %vm2883, %v2894, %v2896
        %v2898 = vshll.u32 %v2858, 8
        %v2899 = vmul.u32.u64.compose %v2898, %v2897
        %v2900 = vextract.low.u32 %v2899
        %v2901 = vextract.high.u32 %v2899
        %v2902 = vmul.u32.u64.compose %v2898, %v2893
        %v2903 = vextract.low.u32 %v2902
        %v2904 = vextract.high.u32 %v2902
        %v2905 = vmul.u32 %v2898, %v2889
        %v2906 = vadd.s32 %v2901, %v2903
        %vm2907 = vc.u32 %v2901, %v2903
        %v2908 = vadd.s32 %v2904, 1
        %v2909 = vsel %vm2907, %v2908, %v2904
        %v2910 = vadd.s32 %v2905, %v2909
        %v2911 = vadd.s32 %v2910, 536870912
        %v2912 = vshrl.u32 %v2911, 30
        %v2913 = vshll.u32 %v2912, 30
        %v2914 = vsub.s32 %v2910, %v2913
        %vm2915 = vcmp.lt.s32.totalorder %v2914, 0
        %v2916 = vsub.s32 0, %v2914
        %v2917 = vsel %vm2915, %v2916, %v2914
        %v2918 = vclz %v2917
        %v2919 = vsub.s32 %v2918, 2
        %vm2920 = vcmp.gt.s32.totalorder 0, %v2919
        %v2921 = vsel %vm2920, 0, %v2919
        %v2922 = vsub.s32 32, %v2921
        %v2923 = vshll.u32 %v2914, %v2921
        %v2924 = vshrl.u32 %v2906, %v2922
        %v2925 = vor.u32 %v2923, %v2924
        %v2926 = vsub.s32 4294967266, %v2921
        %v2927 = vadd.s32 %v2926, 127
        %v2928 = vshll.u32 %v2927, 23
        %v2929 = vor.u32 4788187, %v2928
        %v2930 = vand.u32 2147483647, %v2929
        %v2932 = vcvt.s32.f32 %v2925
        %v2933 = vmul.f32 %v2932, %v2930
        %v2934 = vxor.u32 %v2933, 2147483648
        %v2935 = vsel %vm2852, %v2934, %v2933
        %v2936 = vsub.s32 4, %v2912
        %v2937 = vsel %vm2852, %v2936, %v2912
        %v2938 = vsel %vm2851, %v2732, %v2935
        %v2939 = vsel %vm2851, 0, %v2937
        %v2940 = vcosq.f32.pop %v2938
        %v2941 = vsinq.f32.pop %v2938
        %vm2942 = vweird.f32 %v2732
        %v2943 = vadd.s32 %v2939, 3
        %v2944 = vand.u32 %v2943, 3
        %vm2945 = vcmp.lt.s32.totalorder %v2944, 2
        %vm2946 = vcmp.eq.s32.totalorder %v2944, 0
        %v2947 = vxor.u32 %v2941, 2147483648
        %v2948 = vsel %vm2946, %v2940, %v2947
        %vm2949 = vcmp.eq.s32.totalorder %v2944, 2
        %v2950 = vxor.u32 %v2940, 2147483648
        %v2951 = vsel %vm2949, %v2950, %v2941
        %v2952 = vsel %vm2945, %v2948, %v2951
        %v2953 = vsel %vm2942, nan, %v2952
        %v2954 = vand.u32 2147483647, %v2736
        %vm2955 = vcmp.le.f32.partialorder %v2954, 0.7853982
        %vm2956 = vcmp.lt.s32.totalorder %v2736, 0
        %v2957 = vand.u32 %v2736, 2139095040
        %v2958 = vshrl.u32 %v2957, 23
        %v2959 = vsub.s32 %v2958, 127
        %v2960 = vand.u32 2147483647, %v2736
        %v2961 = vand.u32 %v2960, 8388607
        %v2962 = vor.u32 %v2961, 8388608
        %v2963 = vsub.s32 0, %v2962
        %v2964 = vadd.s32 %v2959, 1
        %vm2965 = vcmp.gt.s32.totalorder %v2964, 0
        %v2966 = vsel %vm2965, %v2964, 0
        %v2967 = vshrl.u32 %v2966, 5
        %v2968 = vand.u32 %v2966, 31
        %v2969 = vsub.s32 32, %v2968
        %v2970 = vshrl.u32 683565275, %v2969
        %v2971 = vshll.u32 683565275, %v2968
        %v2972 = vshrl.u32 2475754826, %v2969
        %v2973 = vor.u32 %v2971, %v2972
        %v2974 = vshll.u32 2475754826, %v2968
        %v2975 = vshrl.u32 2131351028, %v2969
        %v2976 = vor.u32 %v2974, %v2975
        %v2977 = vshll.u32 2131351028, %v2968
        %v2978 = vshrl.u32 2102212464, %v2969
        %v2979 = vor.u32 %v2977, %v2978
        %v2980 = vshll.u32 2102212464, %v2968
        %v2981 = vshrl.u32 920167782, %v2969
        %v2982 = vor.u32 %v2980, %v2981
        %v2983 = vshll.u32 920167782, %v2968
        %v2984 = vshrl.u32 1326507024, %v2969
        %v2985 = vor.u32 %v2983, %v2984
        %vm2986 = vcmp.lt.s32.totalorder %v2967, 1
        %vm2987 = vcmp.lt.s32.totalorder %v2967, 2
        %vm2988 = vcmp.lt.s32.totalorder %v2967, 3
        %vm2989 = vcmp.lt.s32.totalorder %v2967, 4
        %v2990 = vsel %vm2986, %v2970, %v2973
        %v2991 = vsel %vm2989, %v2979, 2102212464
        %v2992 = vsel %vm2988, %v2976, %v2991
        %v2993 = vsel %vm2987, %v2990, %v2992
        %v2994 = vsel %vm2986, %v2973, %v2976
        %v2995 = vsel %vm2989, %v2982, 920167782
        %v2996 = vsel %vm2988, %v2979, %v2995
        %v2997 = vsel %vm2987, %v2994, %v2996
        %v2998 = vsel %vm2986, %v2976, %v2979
        %v2999 = vsel %vm2989, %v2985, 1326507024
        %v3000 = vsel %vm2988, %v2982, %v2999
        %v3001 = vsel %vm2987, %v2998, %v3000
        %v3002 = vshll.u32 %v2962, 8
        %v3003 = vmul.u32.u64.compose %v3002, %v3001
        %v3004 = vextract.low.u32 %v3003
        %v3005 = vextract.high.u32 %v3003
        %v3006 = vmul.u32.u64.compose %v3002, %v2997
        %v3007 = vextract.low.u32 %v3006
        %v3008 = vextract.high.u32 %v3006
        %v3009 = vmul.u32 %v3002, %v2993
        %v3010 = vadd.s32 %v3005, %v3007
        %vm3011 = vc.u32 %v3005, %v3007
        %v3012 = vadd.s32 %v3008, 1
        %v3013 = vsel %vm3011, %v3012, %v3008
        %v3014 = vadd.s32 %v3009, %v3013
        %v3015 = vadd.s32 %v3014, 536870912
        %v3016 = vshrl.u32 %v3015, 30
        %v3017 = vshll.u32 %v3016, 30
        %v3018 = vsub.s32 %v3014, %v3017
        %vm3019 = vcmp.lt.s32.totalorder %v3018, 0
        %v3020 = vsub.s32 0, %v3018
        %v3021 = vsel %vm3019, %v3020, %v3018
        %v3022 = vclz %v3021
        %v3023 = vsub.s32 %v3022, 2
        %vm3024 = vcmp.gt.s32.totalorder 0, %v3023
        %v3025 = vsel %vm3024, 0, %v3023
        %v3026 = vsub.s32 32, %v3025
        %v3027 = vshll.u32 %v3018, %v3025
        %v3028 = vshrl.u32 %v3010, %v3026
        %v3029 = vor.u32 %v3027, %v3028
        %v3030 = vsub.s32 4294967266, %v3025
        %v3031 = vadd.s32 %v3030, 127
        %v3032 = vshll.u32 %v3031, 23
        %v3033 = vor.u32 4788187, %v3032
        %v3034 = vand.u32 2147483647, %v3033
        %v3036 = vcvt.s32.f32 %v3029
        %v3037 = vmul.f32 %v3036, %v3034
        %v3038 = vxor.u32 %v3037, 2147483648
        %v3039 = vsel %vm2956, %v3038, %v3037
        %v3040 = vsub.s32 4, %v3016
        %v3041 = vsel %vm2956, %v3040, %v3016
        %v3042 = vsel %vm2955, %v2736, %v3039
        %v3043 = vsel %vm2955, 0, %v3041
        %v3044 = vcosq.f32.pop %v3042
        %v3045 = vsinq.f32.pop %v3042
        %vm3046 = vweird.f32 %v2736
        %v3047 = vadd.s32 %v3043, 3
        %v3048 = vand.u32 %v3047, 3
        %vm3049 = vcmp.lt.s32.totalorder %v3048, 2
        %vm3050 = vcmp.eq.s32.totalorder %v3048, 0
        %v3051 = vxor.u32 %v3045, 2147483648
        %v3052 = vsel %vm3050, %v3044, %v3051
        %vm3053 = vcmp.eq.s32.totalorder %v3048, 2
        %v3054 = vxor.u32 %v3044, 2147483648
        %v3055 = vsel %vm3053, %v3054, %v3045
        %v3056 = vsel %vm3049, %v3052, %v3055
        %v3057 = vsel %vm3046, nan, %v3056
        %v3058 = vand.u32 2147483647, %v2738
        %vm3059 = vcmp.le.f32.partialorder %v3058, 0.7853982
        %vm3060 = vcmp.lt.s32.totalorder %v2738, 0
        %v3061 = vand.u32 %v2738, 2139095040
        %v3062 = vshrl.u32 %v3061, 23
        %v3063 = vsub.s32 %v3062, 127
        %v3064 = vand.u32 2147483647, %v2738
        %v3065 = vand.u32 %v3064, 8388607
        %v3066 = vor.u32 %v3065, 8388608
        %v3067 = vsub.s32 0, %v3066
        %v3068 = vadd.s32 %v3063, 1
        %vm3069 = vcmp.gt.s32.totalorder %v3068, 0
        %v3070 = vsel %vm3069, %v3068, 0
        %v3071 = vshrl.u32 %v3070, 5
        %v3072 = vand.u32 %v3070, 31
        %v3073 = vsub.s32 32, %v3072
        %v3074 = vshrl.u32 683565275, %v3073
        %v3075 = vshll.u32 683565275, %v3072
        %v3076 = vshrl.u32 2475754826, %v3073
        %v3077 = vor.u32 %v3075, %v3076
        %v3078 = vshll.u32 2475754826, %v3072
        %v3079 = vshrl.u32 2131351028, %v3073
        %v3080 = vor.u32 %v3078, %v3079
        %v3081 = vshll.u32 2131351028, %v3072
        %v3082 = vshrl.u32 2102212464, %v3073
        %v3083 = vor.u32 %v3081, %v3082
        %v3084 = vshll.u32 2102212464, %v3072
        %v3085 = vshrl.u32 920167782, %v3073
        %v3086 = vor.u32 %v3084, %v3085
        %v3087 = vshll.u32 920167782, %v3072
        %v3088 = vshrl.u32 1326507024, %v3073
        %v3089 = vor.u32 %v3087, %v3088
        %vm3090 = vcmp.lt.s32.totalorder %v3071, 1
        %vm3091 = vcmp.lt.s32.totalorder %v3071, 2
        %vm3092 = vcmp.lt.s32.totalorder %v3071, 3
        %vm3093 = vcmp.lt.s32.totalorder %v3071, 4
        %v3094 = vsel %vm3090, %v3074, %v3077
        %v3095 = vsel %vm3093, %v3083, 2102212464
        %v3096 = vsel %vm3092, %v3080, %v3095
        %v3097 = vsel %vm3091, %v3094, %v3096
        %v3098 = vsel %vm3090, %v3077, %v3080
        %v3099 = vsel %vm3093, %v3086, 920167782
        %v3100 = vsel %vm3092, %v3083, %v3099
        %v3101 = vsel %vm3091, %v3098, %v3100
        %v3102 = vsel %vm3090, %v3080, %v3083
        %v3103 = vsel %vm3093, %v3089, 1326507024
        %v3104 = vsel %vm3092, %v3086, %v3103
        %v3105 = vsel %vm3091, %v3102, %v3104
        %v3106 = vshll.u32 %v3066, 8
        %v3107 = vmul.u32.u64.compose %v3106, %v3105
        %v3108 = vextract.low.u32 %v3107
        %v3109 = vextract.high.u32 %v3107
        %v3110 = vmul.u32.u64.compose %v3106, %v3101
        %v3111 = vextract.low.u32 %v3110
        %v3112 = vextract.high.u32 %v3110
        %v3113 = vmul.u32 %v3106, %v3097
        %v3114 = vadd.s32 %v3109, %v3111
        %vm3115 = vc.u32 %v3109, %v3111
        %v3116 = vadd.s32 %v3112, 1
        %v3117 = vsel %vm3115, %v3116, %v3112
        %v3118 = vadd.s32 %v3113, %v3117
        %v3119 = vadd.s32 %v3118, 536870912
        %v3120 = vshrl.u32 %v3119, 30
        %v3121 = vshll.u32 %v3120, 30
        %v3122 = vsub.s32 %v3118, %v3121
        %vm3123 = vcmp.lt.s32.totalorder %v3122, 0
        %v3124 = vsub.s32 0, %v3122
        %v3125 = vsel %vm3123, %v3124, %v3122
        %v3126 = vclz %v3125
        %v3127 = vsub.s32 %v3126, 2
        %vm3128 = vcmp.gt.s32.totalorder 0, %v3127
        %v3129 = vsel %vm3128, 0, %v3127
        %v3130 = vsub.s32 32, %v3129
        %v3131 = vshll.u32 %v3122, %v3129
        %v3132 = vshrl.u32 %v3114, %v3130
        %v3133 = vor.u32 %v3131, %v3132
        %v3134 = vsub.s32 4294967266, %v3129
        %v3135 = vadd.s32 %v3134, 127
        %v3136 = vshll.u32 %v3135, 23
        %v3137 = vor.u32 4788187, %v3136
        %v3138 = vand.u32 2147483647, %v3137
        %v3140 = vcvt.s32.f32 %v3133
        %v3141 = vmul.f32 %v3140, %v3138
        %v3142 = vxor.u32 %v3141, 2147483648
        %v3143 = vsel %vm3060, %v3142, %v3141
        %v3144 = vsub.s32 4, %v3120
        %v3145 = vsel %vm3060, %v3144, %v3120
        %v3146 = vsel %vm3059, %v2738, %v3143
        %v3147 = vsel %vm3059, 0, %v3145
        %v3148 = vcosq.f32.pop %v3146
        %v3149 = vsinq.f32.pop %v3146
        %vm3150 = vweird.f32 %v2738
        %v3151 = vadd.s32 %v3147, 3
        %v3152 = vand.u32 %v3151, 3
        %vm3153 = vcmp.lt.s32.totalorder %v3152, 2
        %vm3154 = vcmp.eq.s32.totalorder %v3152, 0
        %v3155 = vxor.u32 %v3149, 2147483648
        %v3156 = vsel %vm3154, %v3148, %v3155
        %vm3157 = vcmp.eq.s32.totalorder %v3152, 2
        %v3158 = vxor.u32 %v3148, 2147483648
        %v3159 = vsel %vm3157, %v3158, %v3149
        %v3160 = vsel %vm3153, %v3156, %v3159
        %v3161 = vsel %vm3150, nan, %v3160
        %v3162 = vand.u32 2147483647, %v2742
        %vm3163 = vcmp.le.f32.partialorder %v3162, 0.7853982
        %vm3164 = vcmp.lt.s32.totalorder %v2742, 0
        %v3165 = vand.u32 %v2742, 2139095040
        %v3166 = vshrl.u32 %v3165, 23
        %v3167 = vsub.s32 %v3166, 127
        %v3168 = vand.u32 2147483647, %v2742
        %v3169 = vand.u32 %v3168, 8388607
        %v3170 = vor.u32 %v3169, 8388608
        %v3171 = vsub.s32 0, %v3170
        %v3172 = vadd.s32 %v3167, 1
        %vm3173 = vcmp.gt.s32.totalorder %v3172, 0
        %v3174 = vsel %vm3173, %v3172, 0
        %v3175 = vshrl.u32 %v3174, 5
        %v3176 = vand.u32 %v3174, 31
        %v3177 = vsub.s32 32, %v3176
        %v3178 = vshrl.u32 683565275, %v3177
        %v3179 = vshll.u32 683565275, %v3176
        %v3180 = vshrl.u32 2475754826, %v3177
        %v3181 = vor.u32 %v3179, %v3180
        %v3182 = vshll.u32 2475754826, %v3176
        %v3183 = vshrl.u32 2131351028, %v3177
        %v3184 = vor.u32 %v3182, %v3183
        %v3185 = vshll.u32 2131351028, %v3176
        %v3186 = vshrl.u32 2102212464, %v3177
        %v3187 = vor.u32 %v3185, %v3186
        %v3188 = vshll.u32 2102212464, %v3176
        %v3189 = vshrl.u32 920167782, %v3177
        %v3190 = vor.u32 %v3188, %v3189
        %v3191 = vshll.u32 920167782, %v3176
        %v3192 = vshrl.u32 1326507024, %v3177
        %v3193 = vor.u32 %v3191, %v3192
        %vm3194 = vcmp.lt.s32.totalorder %v3175, 1
        %vm3195 = vcmp.lt.s32.totalorder %v3175, 2
        %vm3196 = vcmp.lt.s32.totalorder %v3175, 3
        %vm3197 = vcmp.lt.s32.totalorder %v3175, 4
        %v3198 = vsel %vm3194, %v3178, %v3181
        %v3199 = vsel %vm3197, %v3187, 2102212464
        %v3200 = vsel %vm3196, %v3184, %v3199
        %v3201 = vsel %vm3195, %v3198, %v3200
        %v3202 = vsel %vm3194, %v3181, %v3184
        %v3203 = vsel %vm3197, %v3190, 920167782
        %v3204 = vsel %vm3196, %v3187, %v3203
        %v3205 = vsel %vm3195, %v3202, %v3204
        %v3206 = vsel %vm3194, %v3184, %v3187
        %v3207 = vsel %vm3197, %v3193, 1326507024
        %v3208 = vsel %vm3196, %v3190, %v3207
        %v3209 = vsel %vm3195, %v3206, %v3208
        %v3210 = vshll.u32 %v3170, 8
        %v3211 = vmul.u32.u64.compose %v3210, %v3209
        %v3212 = vextract.low.u32 %v3211
        %v3213 = vextract.high.u32 %v3211
        %v3214 = vmul.u32.u64.compose %v3210, %v3205
        %v3215 = vextract.low.u32 %v3214
        %v3216 = vextract.high.u32 %v3214
        %v3217 = vmul.u32 %v3210, %v3201
        %v3218 = vadd.s32 %v3213, %v3215
        %vm3219 = vc.u32 %v3213, %v3215
        %v3220 = vadd.s32 %v3216, 1
        %v3221 = vsel %vm3219, %v3220, %v3216
        %v3222 = vadd.s32 %v3217, %v3221
        %v3223 = vadd.s32 %v3222, 536870912
        %v3224 = vshrl.u32 %v3223, 30
        %v3225 = vshll.u32 %v3224, 30
        %v3226 = vsub.s32 %v3222, %v3225
        %vm3227 = vcmp.lt.s32.totalorder %v3226, 0
        %v3228 = vsub.s32 0, %v3226
        %v3229 = vsel %vm3227, %v3228, %v3226
        %v3230 = vclz %v3229
        %v3231 = vsub.s32 %v3230, 2
        %vm3232 = vcmp.gt.s32.totalorder 0, %v3231
        %v3233 = vsel %vm3232, 0, %v3231
        %v3234 = vsub.s32 32, %v3233
        %v3235 = vshll.u32 %v3226, %v3233
        %v3236 = vshrl.u32 %v3218, %v3234
        %v3237 = vor.u32 %v3235, %v3236
        %v3238 = vsub.s32 4294967266, %v3233
        %v3239 = vadd.s32 %v3238, 127
        %v3240 = vshll.u32 %v3239, 23
        %v3241 = vor.u32 4788187, %v3240
        %v3242 = vand.u32 2147483647, %v3241
        %v3244 = vcvt.s32.f32 %v3237
        %v3245 = vmul.f32 %v3244, %v3242
        %v3246 = vxor.u32 %v3245, 2147483648
        %v3247 = vsel %vm3164, %v3246, %v3245
        %v3248 = vsub.s32 4, %v3224
        %v3249 = vsel %vm3164, %v3248, %v3224
        %v3250 = vsel %vm3163, %v2742, %v3247
        %v3251 = vsel %vm3163, 0, %v3249
        %v3252 = vcosq.f32.pop %v3250
        %v3253 = vsinq.f32.pop %v3250
        %vm3254 = vweird.f32 %v2742
        %v3255 = vadd.s32 %v3251, 3
        %v3256 = vand.u32 %v3255, 3
        %vm3257 = vcmp.lt.s32.totalorder %v3256, 2
        %vm3258 = vcmp.eq.s32.totalorder %v3256, 0
        %v3259 = vxor.u32 %v3253, 2147483648
        %v3260 = vsel %vm3258, %v3252, %v3259
        %vm3261 = vcmp.eq.s32.totalorder %v3256, 2
        %v3262 = vxor.u32 %v3252, 2147483648
        %v3263 = vsel %vm3261, %v3262, %v3253
        %v3264 = vsel %vm3257, %v3260, %v3263
        %v3265 = vsel %vm3254, nan, %v3264
        %v3266 = vand.u32 2147483647, %v2744
        %vm3267 = vcmp.le.f32.partialorder %v3266, 0.7853982
        %vm3268 = vcmp.lt.s32.totalorder %v2744, 0
        %v3269 = vand.u32 %v2744, 2139095040
        %v3270 = vshrl.u32 %v3269, 23
        %v3271 = vsub.s32 %v3270, 127
        %v3272 = vand.u32 2147483647, %v2744
        %v3273 = vand.u32 %v3272, 8388607
        %v3274 = vor.u32 %v3273, 8388608
        %v3275 = vsub.s32 0, %v3274
        %v3276 = vadd.s32 %v3271, 1
        %vm3277 = vcmp.gt.s32.totalorder %v3276, 0
        %v3278 = vsel %vm3277, %v3276, 0
        %v3279 = vshrl.u32 %v3278, 5
        %v3280 = vand.u32 %v3278, 31
        %v3281 = vsub.s32 32, %v3280
        %v3282 = vshrl.u32 683565275, %v3281
        %v3283 = vshll.u32 683565275, %v3280
        %v3284 = vshrl.u32 2475754826, %v3281
        %v3285 = vor.u32 %v3283, %v3284
        %v3286 = vshll.u32 2475754826, %v3280
        %v3287 = vshrl.u32 2131351028, %v3281
        %v3288 = vor.u32 %v3286, %v3287
        %v3289 = vshll.u32 2131351028, %v3280
        %v3290 = vshrl.u32 2102212464, %v3281
        %v3291 = vor.u32 %v3289, %v3290
        %v3292 = vshll.u32 2102212464, %v3280
        %v3293 = vshrl.u32 920167782, %v3281
        %v3294 = vor.u32 %v3292, %v3293
        %v3295 = vshll.u32 920167782, %v3280
        %v3296 = vshrl.u32 1326507024, %v3281
        %v3297 = vor.u32 %v3295, %v3296
        %vm3298 = vcmp.lt.s32.totalorder %v3279, 1
        %vm3299 = vcmp.lt.s32.totalorder %v3279, 2
        %vm3300 = vcmp.lt.s32.totalorder %v3279, 3
        %vm3301 = vcmp.lt.s32.totalorder %v3279, 4
        %v3302 = vsel %vm3298, %v3282, %v3285
        %v3303 = vsel %vm3301, %v3291, 2102212464
        %v3304 = vsel %vm3300, %v3288, %v3303
        %v3305 = vsel %vm3299, %v3302, %v3304
        %v3306 = vsel %vm3298, %v3285, %v3288
        %v3307 = vsel %vm3301, %v3294, 920167782
        %v3308 = vsel %vm3300, %v3291, %v3307
        %v3309 = vsel %vm3299, %v3306, %v3308
        %v3310 = vsel %vm3298, %v3288, %v3291
        %v3311 = vsel %vm3301, %v3297, 1326507024
        %v3312 = vsel %vm3300, %v3294, %v3311
        %v3313 = vsel %vm3299, %v3310, %v3312
        %v3314 = vshll.u32 %v3274, 8
        %v3315 = vmul.u32.u64.compose %v3314, %v3313
        %v3316 = vextract.low.u32 %v3315
        %v3317 = vextract.high.u32 %v3315
        %v3318 = vmul.u32.u64.compose %v3314, %v3309
        %v3319 = vextract.low.u32 %v3318
        %v3320 = vextract.high.u32 %v3318
        %v3321 = vmul.u32 %v3314, %v3305
        %v3322 = vadd.s32 %v3317, %v3319
        %vm3323 = vc.u32 %v3317, %v3319
        %v3324 = vadd.s32 %v3320, 1
        %v3325 = vsel %vm3323, %v3324, %v3320
        %v3326 = vadd.s32 %v3321, %v3325
        %v3327 = vadd.s32 %v3326, 536870912
        %v3328 = vshrl.u32 %v3327, 30
        %v3329 = vshll.u32 %v3328, 30
        %v3330 = vsub.s32 %v3326, %v3329
        %vm3331 = vcmp.lt.s32.totalorder %v3330, 0
        %v3332 = vsub.s32 0, %v3330
        %v3333 = vsel %vm3331, %v3332, %v3330
        %v3334 = vclz %v3333
        %v3335 = vsub.s32 %v3334, 2
        %vm3336 = vcmp.gt.s32.totalorder 0, %v3335
        %v3337 = vsel %vm3336, 0, %v3335
        %v3338 = vsub.s32 32, %v3337
        %v3339 = vshll.u32 %v3330, %v3337
        %v3340 = vshrl.u32 %v3322, %v3338
        %v3341 = vor.u32 %v3339, %v3340
        %v3342 = vsub.s32 4294967266, %v3337
        %v3343 = vadd.s32 %v3342, 127
        %v3344 = vshll.u32 %v3343, 23
        %v3345 = vor.u32 4788187, %v3344
        %v3346 = vand.u32 2147483647, %v3345
        %v3348 = vcvt.s32.f32 %v3341
        %v3349 = vmul.f32 %v3348, %v3346
        %v3350 = vxor.u32 %v3349, 2147483648
        %v3351 = vsel %vm3268, %v3350, %v3349
        %v3352 = vsub.s32 4, %v3328
        %v3353 = vsel %vm3268, %v3352, %v3328
        %v3354 = vsel %vm3267, %v2744, %v3351
        %v3355 = vsel %vm3267, 0, %v3353
        %v3356 = vcosq.f32.pop %v3354
        %v3357 = vsinq.f32.pop %v3354
        %vm3358 = vweird.f32 %v2744
        %v3359 = vadd.s32 %v3355, 3
        %v3360 = vand.u32 %v3359, 3
        %vm3361 = vcmp.lt.s32.totalorder %v3360, 2
        %vm3362 = vcmp.eq.s32.totalorder %v3360, 0
        %v3363 = vxor.u32 %v3357, 2147483648
        %v3364 = vsel %vm3362, %v3356, %v3363
        %vm3365 = vcmp.eq.s32.totalorder %v3360, 2
        %v3366 = vxor.u32 %v3356, 2147483648
        %v3367 = vsel %vm3365, %v3366, %v3357
        %v3368 = vsel %vm3361, %v3364, %v3367
        %v3369 = vsel %vm3358, nan, %v3368
        %v3370 = vmul.f32 %v2849, %v1124
        %v3371 = vmul.f32 %v2953, %v1125
        %v3372 = vmul.f32 %v3057, %v1126
        %v3373 = vmul.f32 %v3161, %v1127
        %v3374 = vmul.f32 %v3265, %v1128
        %v3375 = vmul.f32 %v3369, %v1129
        %v3376 = vadd.f32 %v448, %v3370
        %v3377 = vadd.f32 %v450, %v3371
        %v3378 = vadd.f32 %v454, %v3372
        %v3379 = vadd.f32 %v456, %v3373
        %v3380 = vadd.f32 %v460, %v3374
        %v3381 = vadd.f32 %v462, %v3375
        %v3382 = vld [vmem:[%s5] sm:$0x1]
        %v3383 = vld [vmem:[#allocation2] sm:$0x1]
        %3385 = vset.pattern.permute.xlu0 0
        %3386 = vperm.xlu0 %3385, %v3383
        %v3387 = vpop.permute.xlu0 %3386
        %v3389 = vlaneseq
        %v3390 = vshrl.u32 %v3389, 7
        %v3391 = vsub.s32 0, %v3390
        %v3392 = vrot.slane %v3387, %v3391
        %v3394 = vsel %vm1151, %v3382, 0
        %3396 = vmatprep.subr.mxu0 %v3377
        %3397 = vmatpush1.msra.mxu0 %v3376
        %3398 = vmatprep.subr.mxu0 %v3379
        %3399 = vmatpush1.msra.mxu0 %v3378
        %3400 = vmatprep.subr.mxu0 %v3381
        %3401 = vmatpush1.msra.mxu0 %v3380
        %3402 = vmatprep.subr.mxu0 0.0
        %3403 = vmatpush1.msra.mxu0 0.0
        %3404 = vmatprep.subr.mxu0 0.0
        %3405 = vmatpush1.msra.mxu0 0.0
        %3406 = vmatprep.subr.mxu0 0.0
        %3407 = vmatpush1.msra.mxu0 0.0
        %3408 = vmatprep.subr.mxu0 0.0
        %3409 = vmatpush1.msra.mxu0 0.0
        %3410 = vmatprep.subr.mxu0 0.0
        %3411 = vmatpush1.msra.mxu0 0.0
        %3412 = vmatprep.subr.mxu0 0.0
        %3413 = vmatpush1.msra.mxu0 0.0
        %3414 = vmatprep.subr.mxu0 0.0
        %3415 = vmatpush1.msra.mxu0 0.0
        %3416 = vmatprep.subr.mxu0 0.0
        %3417 = vmatpush1.msra.mxu0 0.0
        %3418 = vmatprep.subr.mxu0 0.0
        %3419 = vmatpush1.msra.mxu0 0.0
        %3420 = vmatprep.subr.mxu0 0.0
        %3421 = vmatpush1.msra.mxu0 0.0
        %3422 = vmatprep.subr.mxu0 0.0
        %3423 = vmatpush1.msra.mxu0 0.0
        %3424 = vmatprep.subr.mxu0 0.0
        %3425 = vmatpush1.msra.mxu0 0.0
        %3426 = vmatprep.subr.mxu0 0.0
        %3427 = vmatpush1.msra.mxu0 0.0
        %3428 = vmatprep.subr.mxu0 0.0
        %3429 = vmatpush1.msra.mxu0 0.0
        %3430 = vmatprep.subr.mxu0 0.0
        %3431 = vmatpush1.msra.mxu0 0.0
        %3432 = vmatprep.subr.mxu0 0.0
        %3433 = vmatpush1.msra.mxu0 0.0
        %3434 = vmatprep.subr.mxu0 0.0
        %3435 = vmatpush1.msra.mxu0 0.0
        %3436 = vmatprep.subr.mxu0 0.0
        %3437 = vmatpush1.msra.mxu0 0.0
        %3438 = vmatprep.subr.mxu0 0.0
        %3439 = vmatpush1.msra.mxu0 0.0
        %3440 = vmatprep.subr.mxu0 0.0
        %3441 = vmatpush1.msra.mxu0 0.0
        %3442 = vmatprep.subr.mxu0 0.0
        %3443 = vmatpush1.msra.mxu0 0.0
        %3444 = vmatprep.subr.mxu0 0.0
        %3445 = vmatpush1.msra.mxu0 0.0
        %3446 = vmatprep.subr.mxu0 0.0
        %3447 = vmatpush1.msra.mxu0 0.0
        %3448 = vmatprep.subr.mxu0 0.0
        %3449 = vmatpush1.msra.mxu0 0.0
        %3450 = vmatprep.subr.mxu0 0.0
        %3451 = vmatpush1.msra.mxu0 0.0
        %3452 = vmatprep.subr.mxu0 0.0
        %3453 = vmatpush1.msra.mxu0 0.0
        %3454 = vmatprep.subr.mxu0 0.0
        %3455 = vmatpush1.msra.mxu0 0.0
        %3456 = vmatprep.subr.mxu0 0.0
        %3457 = vmatpush1.msra.mxu0 0.0
        %3458 = vmatprep.subr.mxu0 0.0
        %3459 = vmatpush1.msra.mxu0 0.0
        %3460 = vmatprep.mubr.f32.mxu0 0.0
        %3461 = vmatmul.mubr.f32.gmra.mrb[0].mxu0 %v3394
        %v3462 = vpop.f32.mrb[0].mxu0
        %v3463 = vadd.f32 %v3392, %v3462
        %v3464 = vpop.f32.mrb[0].mxu0
        %v3465 = vadd.f32 %v3392, %v3464
        %3466 = vdwg.mxu0
        %v3469 = vcombine.low %v3463, %v3465
        %v3471 = vunpack.c.l.s4 1966171168
        %v3472 = vunpack.c.0.s8 %v3471
        %v3473 = vlaneseq
        %v3474 = vshrl.u32 %v3473, 7
        %v3475 = vsub.s32 %v3472, %v3474
        %v3476 = vrot.slane %v3469, %v3475
        %v3478 = vunpack.c.l.s4 1966171168
        %v3479 = vunpack.c.0.s8 %v3478
        %v3480 = vlaneseq
        %v3481 = vshrl.u32 %v3480, 7
        %v3482 = vsub.s32 %v3479, %v3481
        %v3483 = vrot.slane %v3476, %v3482
        %v3485 = vlaneseq
        %vm3486 = vcmp.ge.s32.totalorder %v3485, 0
        %vm3487 = vcmp.lt.s32.totalorder %v3485, 256
        %vm3488 = vmand %vm3486, %vm3487
        %3489 = vst.msk [vmem:[%s274] sm:$0x3] %vm3488, %v3483
        %s3490 = sand.u32 %s183, 1
        %s3491 = scalar_lea.sflag [#allocation4], %s3490
        %s3492 = sand.u32 %s183, 1
        %s3493 = smul.addr %s3492, 2
        %s3494 = scalar_lea.vmem [#allocation3], %s3493
        // Predicated region
        $region49: #{tpu_custom_call.1} parent=47 // pred_check
          %p3495 = pneg %p193
        $region50: #{tpu_custom_call.1} parent=47 // pred_check_branch
          %3497 = sbr.rel (%p3495) target = $region52
        $region51: #{tpu_custom_call.1} parent=47 // pred_region
          %s3498 = smul.u32 2, %s23
          %s3500 = ssub.s32 32, 32
          %3501 = vsyncadd %s3491, %s3500
          %s3502 = smul.addr %s3498, 16
          %s3503 = scalar_lea.hbm %s7, %s3502
          %s3505 = sshll.u32 %s3494, 4
          %s3506 = int_to_ptr.vmem [resolvable:$true] %s3505
          %3508 = dma.vmem_to_hbm [thread:$0]  %s3506, 32, %s3503, %s3491
        $region52: #{tpu_custom_call.1} parent=47 // pred_fallthru
          _
      $region48: #{tpu_custom_call.1} parent=5 // pred_fallthru
        _
      %p3509 = scmp.le.s32.totalorder 2, %s18
      // Predicated region
      $region53: #{tpu_custom_call.1} parent=5 // pred_check
        %p3510 = pneg %p3509
      $region54: #{tpu_custom_call.1} parent=5 // pred_check_branch
        %3512 = sbr.rel (%p3510) target = $region56
      $region55: #{tpu_custom_call.1} parent=5 // pred_region
        %s3513 = ssub.s32 %s18, 2
        // Predicated region
        $region57: #{tpu_custom_call.1} parent=55 // pred_check
          %p3514 = pneg %p199
        $region58: #{tpu_custom_call.1} parent=55 // pred_check_branch
          %3516 = sbr.rel (%p3514) target = $region60
        $region59: #{tpu_custom_call.1} parent=55 // pred_region
          %s3517 = sand.u32 %s184, 1
          %s3518 = scalar_lea.sflag [#allocation4], %s3517
          %s3519 = sand.u32 %s184, 1
          %s3520 = smul.addr %s3519, 2
          %s3521 = scalar_lea.vmem [#allocation3], %s3520
          %3522 = dma.done %s3518, 32
        $region60: #{tpu_custom_call.1} parent=55 // pred_fallthru
          _
      $region56: #{tpu_custom_call.1} parent=5 // pred_fallthru
        _
    $region6: #{tpu_custom_call.1} parent=1 // loop_footer
      %s22 = sadd.s32 1, %s18
    $region7: #{tpu_custom_call.1} parent=1 // loop_footer_branch
      %17 = sbr.rel target = $region3
    $region8: #{tpu_custom_call.1} parent=1 // loop_exit
      _
    %3523 = vsyncpa [#allocation4], 1
    %s3524 = scalar_lea.sflag [#allocation4], 1
    %3525 = vsyncpa %s3524, 1

</llo_original>
